<compile_context>
chip_gen: v5e
topology: v5e:2x2
jax: 0.10.0
libtpu: 0.0.40
codegen_flags: <defaults>
</compile_context>

<pallas_src>
import jax
import jax.numpy as jnp
from jax.experimental import pallas as pl
from jax.experimental.pallas import tpu as pltpu

NUM_CONV_LAYERS = 4


# ----------------------------------------------------------------------------
# Geometry helpers
# ----------------------------------------------------------------------------
def _layer_geometry(hparams):
    k = hparams["kernel_size"]
    s = hparams["stride"]
    p = hparams["padding"]
    mk = hparams["maxpool_kernel_size"]
    ms = hparams["maxpool_stride"]
    if s != 1 or k != 2 * p + 1:
        raise NotImplementedError("fused kernel assumes stride=1 'same' conv (k == 2*padding+1)")
    if mk != 2 or ms != 2:
        raise NotImplementedError("fused kernel assumes 2x2 stride-2 max pooling")
    size = hparams["input_size"]
    cin = hparams["in_channels"]
    cout = hparams["out_channels"]
    dims = []
    for _ in range(NUM_CONV_LAYERS):
        if size % 2 != 0:
            raise ValueError("spatial size must stay even for 2x2/2 pooling")
        dims.append((size, size, cin, cout))   # (H, W, Cin, Cout) of this conv group
        size //= 2                              # conv keeps size, pool halves it
        cin = cout
        cout *= 2
    return dims, size                           # dims per layer, final spatial size


# ----------------------------------------------------------------------------
# Fused Pallas kernel (one grid step = one image, whole network)
# ----------------------------------------------------------------------------
def _make_kernel(dims, pad, ksz):
    n_layers = len(dims)

    def conv_bias_relu(src_ref, w_ref, b_ref, dst_ref, H, W, Cin, Cout):
        """src_ref: flat zero-padded activation (Hp*Wp + 2*margin, Cin).
        dst_ref:  conv+bias+ReLU output on the padded grid (Hp*Wp, Cout);
                  border rows are garbage and are never read by the pool."""
        Hp, Wp = H + 2 * pad, W + 2 * pad
        hpwp = Hp * Wp
        margin = pad * (Wp + 1)
        acc = None
        for di in range(ksz):
            for dj in range(ksz):
                t = di * ksz + dj
                start = margin + (di - pad) * Wp + (dj - pad)
                patch = src_ref[start:start + hpwp, :]            # (Hp*Wp, Cin)
                wt = w_ref[t]                                     # (Cin, Cout)
                if Cin == 1:
                    contrib = patch * wt                          # broadcast, skip K=1 matmul
                else:
                    contrib = jnp.dot(patch, wt,
                                      preferred_element_type=jnp.float32)
                acc = contrib if acc is None else acc + contrib
        dst_ref[...] = jnp.maximum(acc + b_ref[...], 0.0)

    def maxpool_blocks(ypad_ref, H, W, Cout):
        """2x2/2 maxpool of the valid region of ypad_ref.
        Returns Ho value-blocks of shape (Wo, Cout), one per pooled row."""
        Hp, Wp = H + 2 * pad, W + 2 * pad
        hpwp = Hp * Wp
        Ho, Wo = H // 2, W // 2
        npairs = hpwp // 2 - pad
        # Horizontal pairs via stride-2 sublane loads: pair m = rows (2m+pad, 2m+pad+1).
        ha = ypad_ref[pl.ds(pad, npairs, 2), :]
        hb = ypad_ref[pl.ds(pad + 1, npairs, 2), :]
        hp = jnp.maximum(ha, hb)
        blocks = []
        for io in range(Ho):
            pa = ((2 * io + pad) * Wp) // 2
            pb = ((2 * io + 1 + pad) * Wp) // 2
            blocks.append(jnp.maximum(hp[pa:pa + Wo, :], hp[pb:pb + Wo, :]))
        return blocks

    def kernel(*refs):
        idx = 0
        x_ref = refs[idx]; idx += 1                       # (Mpad0, Cin0) padded flat input
        conv_w, conv_b = [], []
        for _ in range(n_layers):
            conv_w.append(refs[idx]); conv_b.append(refs[idx + 1]); idx += 2
        fw1, fb1, fw2, fb2 = refs[idx:idx + 4]; idx += 4
        out_ref = refs[idx]; idx += 1                     # (1, num_keypoints)
        pad_refs = [x_ref] + list(refs[idx:idx + n_layers - 1]); idx += n_layers - 1
        ypad_refs = list(refs[idx:idx + n_layers]); idx += n_layers
        fcin_ref = refs[idx]                              # (1, Cf*Hf*Wf)

        # Zero the padded scratch buffers: this supplies the conv zero padding
        # (and the shift margins) for layers 1..3.  Layer 0 comes pre-padded.
        for p_ref in pad_refs[1:]:
            p_ref[...] = jnp.zeros(p_ref.shape, p_ref.dtype)

        for l, (H, W, Cin, Cout) in enumerate(dims):
            conv_bias_relu(pad_refs[l], conv_w[l], conv_b[l], ypad_refs[l],
                           H, W, Cin, Cout)
            blocks = maxpool_blocks(ypad_refs[l], H, W, Cout)
            Ho, Wo = H // 2, W // 2
            if l + 1 < n_layers:
                # Scatter pooled rows straight into the next layer's padded buffer.
                Wp_n = Wo + 2 * pad
                margin_n = pad * (Wp_n + 1)
                for io, blk in enumerate(blocks):
                    dst = margin_n + (io + pad) * Wp_n + pad
                    pad_refs[l + 1][dst:dst + Wo, :] = blk
            else:
                # Flatten in NHWC order; fc1 weights were pre-permuted to match
                # torch's NCHW .view(N, -1) flatten.
                for io, blk in enumerate(blocks):
                    for jo in range(Wo):
                        off = (io * Wo + jo) * Cout
                        fcin_ref[0:1, off:off + Cout] = blk[jo:jo + 1, :]

        h = jnp.dot(fcin_ref[...], fw1[...], preferred_element_type=jnp.float32) + fb1[...]
        h = jnp.maximum(h, 0.0)
        y = jnp.dot(h, fw2[...], preferred_element_type=jnp.float32) + fb2[...]
        out_ref[...] = y.astype(out_ref.dtype)

    return kernel


# ----------------------------------------------------------------------------
# Forward-pass builder (host-side glue: one transpose/pad of the input only)
# ----------------------------------------------------------------------------
def build_keypoint_forward(hparams):
    dims, final_size = _layer_geometry(hparams)
    pad = hparams["padding"]
    ksz = hparams["kernel_size"]
    nkp = hparams["num_keypoints"]

    H0, W0, C0, _ = dims[0]
    Hp0, Wp0 = H0 + 2 * pad, W0 + 2 * pad
    margin0 = pad * (Wp0 + 1)
    mpad0 = Hp0 * Wp0 + 2 * margin0

    Cf = dims[-1][3]
    Ff = Cf * final_size * final_size
    hidden = Cf                                   # fc1 width == out_channels * 8

    kernel = _make_kernel(dims, pad, ksz)

    # Per-image VMEM scratch: padded activations for layers 1..3, conv outputs
    # for every layer, and the flattened FC input.  (All tiny: << 1 MiB.)
    scratch_shapes = []
    for (H, W, Cin, _) in dims[1:]:
        Wp = W + 2 * pad
        scratch_shapes.append(
            pltpu.VMEM(((H + 2 * pad) * Wp + 2 * pad * (Wp + 1), Cin), jnp.float32))
    for (H, W, _, Cout) in dims:
        scratch_shapes.append(
            pltpu.VMEM(((H + 2 * pad) * (W + 2 * pad), Cout), jnp.float32))
    scratch_shapes.append(pltpu.VMEM((1, Ff), jnp.float32))

    def _full_spec(shape):
        zeros = (0,) * len(shape)
        return pl.BlockSpec(shape, lambda n, _z=zeros: _z)

    def forward(packed, x):
        if x.ndim == 3:                           # torch.unsqueeze(x, 0)
            x = x[None]
        N = x.shape[0]

        # NCHW -> NHWC, spatial zero-pad, flatten rows, add shift margin rows.
        xh = jnp.transpose(x, (0, 2, 3, 1)).astype(jnp.float32)
        xp = jnp.pad(xh, ((0, 0), (pad, pad), (pad, pad), (0, 0)))
        xf = xp.reshape(N, Hp0 * Wp0, C0)
        xf = jnp.pad(xf, ((0, 0), (margin0, margin0), (0, 0)))

        flat_params = []
        for (w, b) in packed["convs"]:
            flat_params += [w, b]
        fw1, fb1 = packed["fc1"]
        fw2, fb2 = packed["fc2"]
        inputs = [xf] + flat_params + [fw1, fb1, fw2, fb2]

        in_specs = [pl.BlockSpec((None, mpad0, C0), lambda n: (n, 0, 0))]
        in_specs += [_full_spec(a.shape) for a in inputs[1:]]
        out_specs = pl.BlockSpec((None, 1, nkp), lambda n: (n, 0, 0))

        flops = 0
        for (H, W, Cin, Cout) in dims:
            flops += 2 * N * (H + 2 * pad) * (W + 2 * pad) * ksz * ksz * Cin * Cout
        flops += 2 * N * Ff * hidden + 2 * N * hidden * nkp
        bytes_accessed = sum(int(a.size) * a.dtype.itemsize for a in inputs) + N * nkp * 4

        out = pl.pallas_call(
            kernel,
            out_shape=jax.ShapeDtypeStruct((N, 1, nkp), jnp.float32),
            grid=(N,),
            in_specs=in_specs,
            out_specs=out_specs,
            scratch_shapes=scratch_shapes,
            compiler_params=pltpu.CompilerParams(
                dimension_semantics=("parallel",),          # shard batch over v7x's 2 TCs
                vmem_limit_bytes=32 * 1024 * 1024,
            ),
            cost_estimate=pl.CostEstimate(
                flops=flops, transcendentals=0, bytes_accessed=bytes_accessed),
        )(*inputs)
        return out.reshape(N, nkp)

    return forward


# ----------------------------------------------------------------------------
# Parameter init (mirrors the PyTorch __init__) and one-time packing
# ----------------------------------------------------------------------------
def init_params(hparams, key):
    k = hparams["kernel_size"]
    cin = hparams["in_channels"]
    cout = hparams["out_channels"]
    size = hparams["input_size"]

    params = {"convs": []}
    for _ in range(NUM_CONV_LAYERS):
        key, kw_, kb_ = jax.random.split(key, 3)
        fan_in = cin * k * k
        std = (2.0 / fan_in) ** 0.5                       # kaiming_normal_, relu
        w = std * jax.random.normal(kw_, (cout, cin, k, k), jnp.float32)
        bound = 1.0 / (fan_in ** 0.5)
        b = jax.random.uniform(kb_, (cout,), jnp.float32, -bound, bound)
        params["convs"].append((w, b))
        cin = cout
        cout *= 2
        size = (size - k + 2 * hparams["padding"]) // hparams["stride"] + 1
        size = (size - hparams["maxpool_kernel_size"]) // hparams["maxpool_stride"] + 1

    feat = hparams["out_channels"] * 8 * size * size
    hid = hparams["out_channels"] * 8
    nkp = hparams["num_keypoints"]

    key, kw1, kb1, kw2, kb2 = jax.random.split(key, 5)
    std1 = (2.0 / feat) ** 0.5                            # kaiming_normal_, relu
    w1 = std1 * jax.random.normal(kw1, (hid, feat), jnp.float32)
    b1 = jax.random.uniform(kb1, (hid,), jnp.float32, -1.0 / feat ** 0.5, 1.0 / feat ** 0.5)
    std2 = (2.0 / (hid + nkp)) ** 0.5                     # xavier_normal_
    w2 = std2 * jax.random.normal(kw2, (nkp, hid), jnp.float32)
    b2 = jax.random.uniform(kb2, (nkp,), jnp.float32, -1.0 / hid ** 0.5, 1.0 / hid ** 0.5)

    params["fc1"] = (w1, b1)
    params["fc2"] = (w2, b2)
    return params


def pack_params(params, hparams):
    """One-time layout work so the forward pass does zero weight reshuffling."""
    dims, final_size = _layer_geometry(hparams)
    k = hparams["kernel_size"]
    packed = {"convs": []}
    for (w, b) in params["convs"]:
        cout, cin = w.shape[0], w.shape[1]
        # (Cout, Cin, KH, KW) -> (KH*KW, Cin, Cout): one (Cin, Cout) GEMM per tap.
        wp = jnp.transpose(w, (2, 3, 1, 0)).reshape(k * k, cin, cout).astype(jnp.float32)
        packed["convs"].append((wp, b.reshape(1, cout).astype(jnp.float32)))

    Cf = dims[-1][3]
    w1, b1 = params["fc1"]
    hid = w1.shape[0]
    # torch fc1 consumes an NCHW flatten; permute its rows to NHWC flatten order.
    w1t = jnp.transpose(w1)                                        # (F, hid), rows (c,h,w)
    w1p = (w1t.reshape(Cf, final_size, final_size, hid)
              .transpose(1, 2, 0, 3)
              .reshape(Cf * final_size * final_size, hid)).astype(jnp.float32)
    packed["fc1"] = (w1p, b1.reshape(1, hid).astype(jnp.float32))

    w2, b2 = params["fc2"]
    packed["fc2"] = (jnp.transpose(w2).astype(jnp.float32),
                     b2.reshape(1, -1).astype(jnp.float32))
    return packed


# ----------------------------------------------------------------------------
# Pure-XLA reference (exactly the PyTorch forward) for a correctness check
# ----------------------------------------------------------------------------
def reference_forward(params, x, hparams):
    if x.ndim == 3:
        x = x[None]
    p = hparams["padding"]
    s = hparams["stride"]
    mk = hparams["maxpool_kernel_size"]
    ms = hparams["maxpool_stride"]
    act = x.astype(jnp.float32)
    for (w, b) in params["convs"]:
        act = jax.lax.conv_general_dilated(
            act, w, (s, s), [(p, p), (p, p)],
            dimension_numbers=("NCHW", "OIHW", "NCHW"),
            precision=jax.lax.Precision.HIGHEST)
        act = jnp.maximum(act + b[None, :, None, None], 0.0)
        act = jax.lax.reduce_window(act, -jnp.inf, jax.lax.max,
                                    (1, 1, mk, mk), (1, 1, ms, ms), "VALID")
    flat = act.reshape(act.shape[0], -1)                  # torch .view on NCHW
    w1, b1 = params["fc1"]
    w2, b2 = params["fc2"]
    h = jnp.maximum(jnp.dot(flat, w1.T, precision=jax.lax.Precision.HIGHEST) + b1, 0.0)
    return jnp.dot(h, w2.T, precision=jax.lax.Precision.HIGHEST) + b2


# ----------------------------------------------------------------------------
if __name__ == "__main__":
    hparams = {
        "kernel_size": 3,
        "stride": 1,
        "padding": 1,
        "maxpool_kernel_size": 2,
        "maxpool_stride": 2,
        "in_channels": 1,
        "out_channels": 4,        # conv channels: 4 -> 8 -> 16 -> 32
        "input_size": 16,         # spatial: 16 -> 8 -> 4 -> 2 -> 1
        "dropout": 0.0,
        "num_keypoints": 30,
    }

    key = jax.random.PRNGKey(0)
    key, pkey, xkey = jax.random.split(key, 3)
    params = init_params(hparams, pkey)
    packed = pack_params(params, hparams)

    x = jax.random.normal(
        xkey, (2, hparams["in_channels"], hparams["input_size"], hparams["input_size"]),
        jnp.float32)

    fwd = jax.jit(build_keypoint_forward(hparams))
    out = jax.block_until_ready(fwd(packed, x))

    assert out.shape == (2, hparams["num_keypoints"]), out.shape
    assert out.dtype == jnp.float32

    ref = jax.block_until_ready(jax.jit(
        lambda pp, xx: reference_forward(pp, xx, hparams))(params, x))
    err = float(jnp.max(jnp.abs(out - ref)))
    tol = 1e-3 * (1.0 + float(jnp.max(jnp.abs(ref))))
    assert err < tol, f"mismatch vs XLA reference: max abs err {err} (tol {tol})"

    print("KERNEL_OK")
</pallas_src>

<mosaic_0001>
module attributes {stable_mosaic.version = 11 : i64} {
  func.func @kernel(%arg0: i32, %arg1: memref<1x362x1xf32, #tpu.memory_space<vmem>>, %arg2: memref<9x1x4xf32, #tpu.memory_space<vmem>>, %arg3: memref<1x4xf32, #tpu.memory_space<vmem>>, %arg4: memref<9x4x8xf32, #tpu.memory_space<vmem>>, %arg5: memref<1x8xf32, #tpu.memory_space<vmem>>, %arg6: memref<9x8x16xf32, #tpu.memory_space<vmem>>, %arg7: memref<1x16xf32, #tpu.memory_space<vmem>>, %arg8: memref<9x16x32xf32, #tpu.memory_space<vmem>>, %arg9: memref<1x32xf32, #tpu.memory_space<vmem>>, %arg10: memref<32x32xf32, #tpu.memory_space<vmem>>, %arg11: memref<1x32xf32, #tpu.memory_space<vmem>>, %arg12: memref<32x30xf32, #tpu.memory_space<vmem>>, %arg13: memref<1x30xf32, #tpu.memory_space<vmem>>, %arg14: memref<1x1x30xf32, #tpu.memory_space<vmem>>, %arg15: memref<122x4xf32, #tpu.memory_space<vmem>>, %arg16: memref<50x8xf32, #tpu.memory_space<vmem>>, %arg17: memref<26x16xf32, #tpu.memory_space<vmem>>, %arg18: memref<324x4xf32, #tpu.memory_space<vmem>>, %arg19: memref<100x8xf32, #tpu.memory_space<vmem>>, %arg20: memref<36x16xf32, #tpu.memory_space<vmem>>, %arg21: memref<16x32xf32, #tpu.memory_space<vmem>>, %arg22: memref<1x32xf32, #tpu.memory_space<vmem>>) attributes {dimension_semantics = [#tpu.dimension_semantics<parallel>], iteration_bounds = array<i64: 2>, scalar_prefetch = 0 : i64, scratch_operands = 8 : i64, tpu.core_type = #tpu.core_type<tc>, window_params = [{transform_indices = @transform_0, window_bounds = array<i64: 1, 362, 1>}, {pipeline_mode = #tpu.pipeline_mode<synchronous>, transform_indices = @transform_1, window_bounds = array<i64: 9, 1, 4>}, {pipeline_mode = #tpu.pipeline_mode<synchronous>, transform_indices = @transform_2, window_bounds = array<i64: 1, 4>}, {pipeline_mode = #tpu.pipeline_mode<synchronous>, transform_indices = @transform_3, window_bounds = array<i64: 9, 4, 8>}, {pipeline_mode = #tpu.pipeline_mode<synchronous>, transform_indices = @transform_4, window_bounds = array<i64: 1, 8>}, {pipeline_mode = #tpu.pipeline_mode<synchronous>, transform_indices = @transform_5, window_bounds = array<i64: 9, 8, 16>}, {pipeline_mode = #tpu.pipeline_mode<synchronous>, transform_indices = @transform_6, window_bounds = array<i64: 1, 16>}, {pipeline_mode = #tpu.pipeline_mode<synchronous>, transform_indices = @transform_7, window_bounds = array<i64: 9, 16, 32>}, {pipeline_mode = #tpu.pipeline_mode<synchronous>, transform_indices = @transform_8, window_bounds = array<i64: 1, 32>}, {pipeline_mode = #tpu.pipeline_mode<synchronous>, transform_indices = @transform_9, window_bounds = array<i64: 32, 32>}, {pipeline_mode = #tpu.pipeline_mode<synchronous>, transform_indices = @transform_10, window_bounds = array<i64: 1, 32>}, {pipeline_mode = #tpu.pipeline_mode<synchronous>, transform_indices = @transform_11, window_bounds = array<i64: 32, 30>}, {pipeline_mode = #tpu.pipeline_mode<synchronous>, transform_indices = @transform_12, window_bounds = array<i64: 1, 30>}, {transform_indices = @transform_13, window_bounds = array<i64: 1, 1, 30>}]} {
    %cst = arith.constant 0.000000e+00 : f32
    %0 = vector.broadcast %cst : f32 to vector<122x4xf32>
    %c0 = arith.constant 0 : index
    %c0_0 = arith.constant 0 : index
    %1 = vector.load %arg15[%c0, %c0_0] : memref<122x4xf32, #tpu.memory_space<vmem>>, vector<122x4xf32>
    tpu.vector_store %arg15[%c0, %c0_0], %0 {strides = array<i32>} : memref<122x4xf32, #tpu.memory_space<vmem>>, vector<122x4xf32>,
    %cst_1 = arith.constant 0.000000e+00 : f32
    %2 = vector.broadcast %cst_1 : f32 to vector<50x8xf32>
    %c0_2 = arith.constant 0 : index
    %c0_3 = arith.constant 0 : index
    %3 = vector.load %arg16[%c0_2, %c0_3] : memref<50x8xf32, #tpu.memory_space<vmem>>, vector<50x8xf32>
    tpu.vector_store %arg16[%c0_2, %c0_3], %2 {strides = array<i32>} : memref<50x8xf32, #tpu.memory_space<vmem>>, vector<50x8xf32>,
    %cst_4 = arith.constant 0.000000e+00 : f32
    %4 = vector.broadcast %cst_4 : f32 to vector<26x16xf32>
    %c0_5 = arith.constant 0 : index
    %c0_6 = arith.constant 0 : index
    %5 = vector.load %arg17[%c0_5, %c0_6] : memref<26x16xf32, #tpu.memory_space<vmem>>, vector<26x16xf32>
    tpu.vector_store %arg17[%c0_5, %c0_6], %4 {strides = array<i32>} : memref<26x16xf32, #tpu.memory_space<vmem>>, vector<26x16xf32>,
    %c0_7 = arith.constant 0 : index
    %c0_8 = arith.constant 0 : index
    %c0_9 = arith.constant 0 : index
    %6 = vector.load %arg1[%c0_7, %c0_8, %c0_9] : memref<1x362x1xf32, #tpu.memory_space<vmem>>, vector<1x324x1xf32>
    %7 = vector.shape_cast %6 : vector<1x324x1xf32> to vector<324x1xf32>
    %c0_10 = arith.constant 0 : index
    %c0_11 = arith.constant 0 : index
    %c0_12 = arith.constant 0 : index
    %8 = vector.load %arg2[%c0_10, %c0_11, %c0_12] : memref<9x1x4xf32, #tpu.memory_space<vmem>>, vector<1x1x4xf32>
    %9 = vector.shape_cast %8 : vector<1x1x4xf32> to vector<1x4xf32>
    %10 = vector.broadcast %7 : vector<324x1xf32> to vector<324x4xf32>
    %11 = vector.broadcast %9 : vector<1x4xf32> to vector<324x4xf32>
    %12 = arith.mulf %10, %11 : vector<324x4xf32>
    %c0_13 = arith.constant 0 : index
    %c1 = arith.constant 1 : index
    %c0_14 = arith.constant 0 : index
    %13 = vector.load %arg1[%c0_13, %c1, %c0_14] : memref<1x362x1xf32, #tpu.memory_space<vmem>>, vector<1x324x1xf32>
    %14 = vector.shape_cast %13 : vector<1x324x1xf32> to vector<324x1xf32>
    %c1_15 = arith.constant 1 : index
    %c0_16 = arith.constant 0 : index
    %c0_17 = arith.constant 0 : index
    %15 = vector.load %arg2[%c1_15, %c0_16, %c0_17] : memref<9x1x4xf32, #tpu.memory_space<vmem>>, vector<1x1x4xf32>
    %16 = vector.shape_cast %15 : vector<1x1x4xf32> to vector<1x4xf32>
    %17 = vector.broadcast %14 : vector<324x1xf32> to vector<324x4xf32>
    %18 = vector.broadcast %16 : vector<1x4xf32> to vector<324x4xf32>
    %19 = arith.mulf %17, %18 : vector<324x4xf32>
    %20 = arith.addf %12, %19 : vector<324x4xf32>
    %c0_18 = arith.constant 0 : index
    %c2 = arith.constant 2 : index
    %c0_19 = arith.constant 0 : index
    %21 = vector.load %arg1[%c0_18, %c2, %c0_19] : memref<1x362x1xf32, #tpu.memory_space<vmem>>, vector<1x324x1xf32>
    %22 = vector.shape_cast %21 : vector<1x324x1xf32> to vector<324x1xf32>
    %c2_20 = arith.constant 2 : index
    %c0_21 = arith.constant 0 : index
    %c0_22 = arith.constant 0 : index
    %23 = vector.load %arg2[%c2_20, %c0_21, %c0_22] : memref<9x1x4xf32, #tpu.memory_space<vmem>>, vector<1x1x4xf32>
    %24 = vector.shape_cast %23 : vector<1x1x4xf32> to vector<1x4xf32>
    %25 = vector.broadcast %22 : vector<324x1xf32> to vector<324x4xf32>
    %26 = vector.broadcast %24 : vector<1x4xf32> to vector<324x4xf32>
    %27 = arith.mulf %25, %26 : vector<324x4xf32>
    %28 = arith.addf %20, %27 : vector<324x4xf32>
    %c0_23 = arith.constant 0 : index
    %c18 = arith.constant 18 : index
    %c0_24 = arith.constant 0 : index
    %29 = vector.load %arg1[%c0_23, %c18, %c0_24] : memref<1x362x1xf32, #tpu.memory_space<vmem>>, vector<1x324x1xf32>
    %30 = vector.shape_cast %29 : vector<1x324x1xf32> to vector<324x1xf32>
    %c3 = arith.constant 3 : index
    %c0_25 = arith.constant 0 : index
    %c0_26 = arith.constant 0 : index
    %31 = vector.load %arg2[%c3, %c0_25, %c0_26] : memref<9x1x4xf32, #tpu.memory_space<vmem>>, vector<1x1x4xf32>
    %32 = vector.shape_cast %31 : vector<1x1x4xf32> to vector<1x4xf32>
    %33 = vector.broadcast %30 : vector<324x1xf32> to vector<324x4xf32>
    %34 = vector.broadcast %32 : vector<1x4xf32> to vector<324x4xf32>
    %35 = arith.mulf %33, %34 : vector<324x4xf32>
    %36 = arith.addf %28, %35 : vector<324x4xf32>
    %c0_27 = arith.constant 0 : index
    %c19 = arith.constant 19 : index
    %c0_28 = arith.constant 0 : index
    %37 = vector.load %arg1[%c0_27, %c19, %c0_28] : memref<1x362x1xf32, #tpu.memory_space<vmem>>, vector<1x324x1xf32>
    %38 = vector.shape_cast %37 : vector<1x324x1xf32> to vector<324x1xf32>
    %c4 = arith.constant 4 : index
    %c0_29 = arith.constant 0 : index
    %c0_30 = arith.constant 0 : index
    %39 = vector.load %arg2[%c4, %c0_29, %c0_30] : memref<9x1x4xf32, #tpu.memory_space<vmem>>, vector<1x1x4xf32>
    %40 = vector.shape_cast %39 : vector<1x1x4xf32> to vector<1x4xf32>
    %41 = vector.broadcast %38 : vector<324x1xf32> to vector<324x4xf32>
    %42 = vector.broadcast %40 : vector<1x4xf32> to vector<324x4xf32>
    %43 = arith.mulf %41, %42 : vector<324x4xf32>
    %44 = arith.addf %36, %43 : vector<324x4xf32>
    %c0_31 = arith.constant 0 : index
    %c20 = arith.constant 20 : index
    %c0_32 = arith.constant 0 : index
    %45 = vector.load %arg1[%c0_31, %c20, %c0_32] : memref<1x362x1xf32, #tpu.memory_space<vmem>>, vector<1x324x1xf32>
    %46 = vector.shape_cast %45 : vector<1x324x1xf32> to vector<324x1xf32>
    %c5 = arith.constant 5 : index
    %c0_33 = arith.constant 0 : index
    %c0_34 = arith.constant 0 : index
    %47 = vector.load %arg2[%c5, %c0_33, %c0_34] : memref<9x1x4xf32, #tpu.memory_space<vmem>>, vector<1x1x4xf32>
    %48 = vector.shape_cast %47 : vector<1x1x4xf32> to vector<1x4xf32>
    %49 = vector.broadcast %46 : vector<324x1xf32> to vector<324x4xf32>
    %50 = vector.broadcast %48 : vector<1x4xf32> to vector<324x4xf32>
    %51 = arith.mulf %49, %50 : vector<324x4xf32>
    %52 = arith.addf %44, %51 : vector<324x4xf32>
    %c0_35 = arith.constant 0 : index
    %c36 = arith.constant 36 : index
    %c0_36 = arith.constant 0 : index
    %53 = vector.load %arg1[%c0_35, %c36, %c0_36] : memref<1x362x1xf32, #tpu.memory_space<vmem>>, vector<1x324x1xf32>
    %54 = vector.shape_cast %53 : vector<1x324x1xf32> to vector<324x1xf32>
    %c6 = arith.constant 6 : index
    %c0_37 = arith.constant 0 : index
    %c0_38 = arith.constant 0 : index
    %55 = vector.load %arg2[%c6, %c0_37, %c0_38] : memref<9x1x4xf32, #tpu.memory_space<vmem>>, vector<1x1x4xf32>
    %56 = vector.shape_cast %55 : vector<1x1x4xf32> to vector<1x4xf32>
    %57 = vector.broadcast %54 : vector<324x1xf32> to vector<324x4xf32>
    %58 = vector.broadcast %56 : vector<1x4xf32> to vector<324x4xf32>
    %59 = arith.mulf %57, %58 : vector<324x4xf32>
    %60 = arith.addf %52, %59 : vector<324x4xf32>
    %c0_39 = arith.constant 0 : index
    %c37 = arith.constant 37 : index
    %c0_40 = arith.constant 0 : index
    %61 = vector.load %arg1[%c0_39, %c37, %c0_40] : memref<1x362x1xf32, #tpu.memory_space<vmem>>, vector<1x324x1xf32>
    %62 = vector.shape_cast %61 : vector<1x324x1xf32> to vector<324x1xf32>
    %c7 = arith.constant 7 : index
    %c0_41 = arith.constant 0 : index
    %c0_42 = arith.constant 0 : index
    %63 = vector.load %arg2[%c7, %c0_41, %c0_42] : memref<9x1x4xf32, #tpu.memory_space<vmem>>, vector<1x1x4xf32>
    %64 = vector.shape_cast %63 : vector<1x1x4xf32> to vector<1x4xf32>
    %65 = vector.broadcast %62 : vector<324x1xf32> to vector<324x4xf32>
    %66 = vector.broadcast %64 : vector<1x4xf32> to vector<324x4xf32>
    %67 = arith.mulf %65, %66 : vector<324x4xf32>
    %68 = arith.addf %60, %67 : vector<324x4xf32>
    %c0_43 = arith.constant 0 : index
    %c38 = arith.constant 38 : index
    %c0_44 = arith.constant 0 : index
    %69 = vector.load %arg1[%c0_43, %c38, %c0_44] : memref<1x362x1xf32, #tpu.memory_space<vmem>>, vector<1x324x1xf32>
    %70 = vector.shape_cast %69 : vector<1x324x1xf32> to vector<324x1xf32>
    %c8 = arith.constant 8 : index
    %c0_45 = arith.constant 0 : index
    %c0_46 = arith.constant 0 : index
    %71 = vector.load %arg2[%c8, %c0_45, %c0_46] : memref<9x1x4xf32, #tpu.memory_space<vmem>>, vector<1x1x4xf32>
    %72 = vector.shape_cast %71 : vector<1x1x4xf32> to vector<1x4xf32>
    %73 = vector.broadcast %70 : vector<324x1xf32> to vector<324x4xf32>
    %74 = vector.broadcast %72 : vector<1x4xf32> to vector<324x4xf32>
    %75 = arith.mulf %73, %74 : vector<324x4xf32>
    %76 = arith.addf %68, %75 : vector<324x4xf32>
    %c0_47 = arith.constant 0 : index
    %c0_48 = arith.constant 0 : index
    %77 = vector.load %arg3[%c0_47, %c0_48] : memref<1x4xf32, #tpu.memory_space<vmem>>, vector<1x4xf32>
    %78 = vector.broadcast %77 : vector<1x4xf32> to vector<324x4xf32>
    %79 = arith.addf %76, %78 : vector<324x4xf32>
    %cst_49 = arith.constant 0.000000e+00 : f32
    %80 = vector.broadcast %cst_49 : f32 to vector<324x4xf32>
    %81 = arith.maximumf %79, %80 : vector<324x4xf32>
    %c0_50 = arith.constant 0 : index
    %c0_51 = arith.constant 0 : index
    %82 = vector.load %arg18[%c0_50, %c0_51] : memref<324x4xf32, #tpu.memory_space<vmem>>, vector<324x4xf32>
    tpu.vector_store %arg18[%c0_50, %c0_51], %81 {strides = array<i32>} : memref<324x4xf32, #tpu.memory_space<vmem>>, vector<324x4xf32>,
    %c1_52 = arith.constant 1 : index
    %c0_53 = arith.constant 0 : index
    %83 = tpu.strided_load %arg18[%c1_52, %c0_53] {strides = array<i32: 2, 1>} : memref<324x4xf32, #tpu.memory_space<vmem>>, vector<161x4xf32>
    %c2_54 = arith.constant 2 : index
    %c0_55 = arith.constant 0 : index
    %84 = tpu.strided_load %arg18[%c2_54, %c0_55] {strides = array<i32: 2, 1>} : memref<324x4xf32, #tpu.memory_space<vmem>>, vector<161x4xf32>
    %85 = arith.maximumf %83, %84 : vector<161x4xf32>
    %86 = vector.extract_strided_slice %85 {offsets = [9, 0], sizes = [8, 4], strides = [1, 1]} : vector<161x4xf32> to vector<8x4xf32>
    %87 = vector.extract_strided_slice %85 {offsets = [18, 0], sizes = [8, 4], strides = [1, 1]} : vector<161x4xf32> to vector<8x4xf32>
    %88 = arith.maximumf %86, %87 : vector<8x4xf32>
    %89 = vector.extract_strided_slice %85 {offsets = [27, 0], sizes = [8, 4], strides = [1, 1]} : vector<161x4xf32> to vector<8x4xf32>
    %90 = vector.extract_strided_slice %85 {offsets = [36, 0], sizes = [8, 4], strides = [1, 1]} : vector<161x4xf32> to vector<8x4xf32>
    %91 = arith.maximumf %89, %90 : vector<8x4xf32>
    %92 = vector.extract_strided_slice %85 {offsets = [45, 0], sizes = [8, 4], strides = [1, 1]} : vector<161x4xf32> to vector<8x4xf32>
    %93 = vector.extract_strided_slice %85 {offsets = [54, 0], sizes = [8, 4], strides = [1, 1]} : vector<161x4xf32> to vector<8x4xf32>
    %94 = arith.maximumf %92, %93 : vector<8x4xf32>
    %95 = vector.extract_strided_slice %85 {offsets = [63, 0], sizes = [8, 4], strides = [1, 1]} : vector<161x4xf32> to vector<8x4xf32>
    %96 = vector.extract_strided_slice %85 {offsets = [72, 0], sizes = [8, 4], strides = [1, 1]} : vector<161x4xf32> to vector<8x4xf32>
    %97 = arith.maximumf %95, %96 : vector<8x4xf32>
    %98 = vector.extract_strided_slice %85 {offsets = [81, 0], sizes = [8, 4], strides = [1, 1]} : vector<161x4xf32> to vector<8x4xf32>
    %99 = vector.extract_strided_slice %85 {offsets = [90, 0], sizes = [8, 4], strides = [1, 1]} : vector<161x4xf32> to vector<8x4xf32>
    %100 = arith.maximumf %98, %99 : vector<8x4xf32>
    %101 = vector.extract_strided_slice %85 {offsets = [99, 0], sizes = [8, 4], strides = [1, 1]} : vector<161x4xf32> to vector<8x4xf32>
    %102 = vector.extract_strided_slice %85 {offsets = [108, 0], sizes = [8, 4], strides = [1, 1]} : vector<161x4xf32> to vector<8x4xf32>
    %103 = arith.maximumf %101, %102 : vector<8x4xf32>
    %104 = vector.extract_strided_slice %85 {offsets = [117, 0], sizes = [8, 4], strides = [1, 1]} : vector<161x4xf32> to vector<8x4xf32>
    %105 = vector.extract_strided_slice %85 {offsets = [126, 0], sizes = [8, 4], strides = [1, 1]} : vector<161x4xf32> to vector<8x4xf32>
    %106 = arith.maximumf %104, %105 : vector<8x4xf32>
    %107 = vector.extract_strided_slice %85 {offsets = [135, 0], sizes = [8, 4], strides = [1, 1]} : vector<161x4xf32> to vector<8x4xf32>
    %108 = vector.extract_strided_slice %85 {offsets = [144, 0], sizes = [8, 4], strides = [1, 1]} : vector<161x4xf32> to vector<8x4xf32>
    %109 = arith.maximumf %107, %108 : vector<8x4xf32>
    %c22 = arith.constant 22 : index
    %c0_56 = arith.constant 0 : index
    %110 = vector.load %arg15[%c22, %c0_56] : memref<122x4xf32, #tpu.memory_space<vmem>>, vector<8x4xf32>
    tpu.vector_store %arg15[%c22, %c0_56], %88 {strides = array<i32>} : memref<122x4xf32, #tpu.memory_space<vmem>>, vector<8x4xf32>,
    %c32 = arith.constant 32 : index
    %c0_57 = arith.constant 0 : index
    %111 = vector.load %arg15[%c32, %c0_57] : memref<122x4xf32, #tpu.memory_space<vmem>>, vector<8x4xf32>
    tpu.vector_store %arg15[%c32, %c0_57], %91 {strides = array<i32>} : memref<122x4xf32, #tpu.memory_space<vmem>>, vector<8x4xf32>,
    %c42 = arith.constant 42 : index
    %c0_58 = arith.constant 0 : index
    %112 = vector.load %arg15[%c42, %c0_58] : memref<122x4xf32, #tpu.memory_space<vmem>>, vector<8x4xf32>
    tpu.vector_store %arg15[%c42, %c0_58], %94 {strides = array<i32>} : memref<122x4xf32, #tpu.memory_space<vmem>>, vector<8x4xf32>,
    %c52 = arith.constant 52 : index
    %c0_59 = arith.constant 0 : index
    %113 = vector.load %arg15[%c52, %c0_59] : memref<122x4xf32, #tpu.memory_space<vmem>>, vector<8x4xf32>
    tpu.vector_store %arg15[%c52, %c0_59], %97 {strides = array<i32>} : memref<122x4xf32, #tpu.memory_space<vmem>>, vector<8x4xf32>,
    %c62 = arith.constant 62 : index
    %c0_60 = arith.constant 0 : index
    %114 = vector.load %arg15[%c62, %c0_60] : memref<122x4xf32, #tpu.memory_space<vmem>>, vector<8x4xf32>
    tpu.vector_store %arg15[%c62, %c0_60], %100 {strides = array<i32>} : memref<122x4xf32, #tpu.memory_space<vmem>>, vector<8x4xf32>,
    %c72 = arith.constant 72 : index
    %c0_61 = arith.constant 0 : index
    %115 = vector.load %arg15[%c72, %c0_61] : memref<122x4xf32, #tpu.memory_space<vmem>>, vector<8x4xf32>
    tpu.vector_store %arg15[%c72, %c0_61], %103 {strides = array<i32>} : memref<122x4xf32, #tpu.memory_space<vmem>>, vector<8x4xf32>,
    %c82 = arith.constant 82 : index
    %c0_62 = arith.constant 0 : index
    %116 = vector.load %arg15[%c82, %c0_62] : memref<122x4xf32, #tpu.memory_space<vmem>>, vector<8x4xf32>
    tpu.vector_store %arg15[%c82, %c0_62], %106 {strides = array<i32>} : memref<122x4xf32, #tpu.memory_space<vmem>>, vector<8x4xf32>,
    %c92 = arith.constant 92 : index
    %c0_63 = arith.constant 0 : index
    %117 = vector.load %arg15[%c92, %c0_63] : memref<122x4xf32, #tpu.memory_space<vmem>>, vector<8x4xf32>
    tpu.vector_store %arg15[%c92, %c0_63], %109 {strides = array<i32>} : memref<122x4xf32, #tpu.memory_space<vmem>>, vector<8x4xf32>,
    %c0_64 = arith.constant 0 : index
    %c0_65 = arith.constant 0 : index
    %118 = vector.load %arg15[%c0_64, %c0_65] : memref<122x4xf32, #tpu.memory_space<vmem>>, vector<100x4xf32>
    %c0_66 = arith.constant 0 : index
    %c0_67 = arith.constant 0 : index
    %c0_68 = arith.constant 0 : index
    %119 = vector.load %arg4[%c0_66, %c0_67, %c0_68] : memref<9x4x8xf32, #tpu.memory_space<vmem>>, vector<1x4x8xf32>
    %120 = vector.shape_cast %119 : vector<1x4x8xf32> to vector<4x8xf32>
    %cst_69 = arith.constant dense<0.000000e+00> : vector<100x8xf32>
    %121 = tpu.matmul %118, %120, %cst_69 {dimension_numbers = #tpu.dot_dimension_numbers<[1], [0], [0], [1], [0, 0, 1, 1], [], []>} : vector<100x4xf32>, vector<4x8xf32>, vector<100x8xf32> -> vector<100x8xf32>
    %c1_70 = arith.constant 1 : index
    %c0_71 = arith.constant 0 : index
    %122 = vector.load %arg15[%c1_70, %c0_71] : memref<122x4xf32, #tpu.memory_space<vmem>>, vector<100x4xf32>
    %c1_72 = arith.constant 1 : index
    %c0_73 = arith.constant 0 : index
    %c0_74 = arith.constant 0 : index
    %123 = vector.load %arg4[%c1_72, %c0_73, %c0_74] : memref<9x4x8xf32, #tpu.memory_space<vmem>>, vector<1x4x8xf32>
    %124 = vector.shape_cast %123 : vector<1x4x8xf32> to vector<4x8xf32>
    %cst_75 = arith.constant dense<0.000000e+00> : vector<100x8xf32>
    %125 = tpu.matmul %122, %124, %cst_75 {dimension_numbers = #tpu.dot_dimension_numbers<[1], [0], [0], [1], [0, 0, 1, 1], [], []>} : vector<100x4xf32>, vector<4x8xf32>, vector<100x8xf32> -> vector<100x8xf32>
    %126 = arith.addf %121, %125 : vector<100x8xf32>
    %c2_76 = arith.constant 2 : index
    %c0_77 = arith.constant 0 : index
    %127 = vector.load %arg15[%c2_76, %c0_77] : memref<122x4xf32, #tpu.memory_space<vmem>>, vector<100x4xf32>
    %c2_78 = arith.constant 2 : index
    %c0_79 = arith.constant 0 : index
    %c0_80 = arith.constant 0 : index
    %128 = vector.load %arg4[%c2_78, %c0_79, %c0_80] : memref<9x4x8xf32, #tpu.memory_space<vmem>>, vector<1x4x8xf32>
    %129 = vector.shape_cast %128 : vector<1x4x8xf32> to vector<4x8xf32>
    %cst_81 = arith.constant dense<0.000000e+00> : vector<100x8xf32>
    %130 = tpu.matmul %127, %129, %cst_81 {dimension_numbers = #tpu.dot_dimension_numbers<[1], [0], [0], [1], [0, 0, 1, 1], [], []>} : vector<100x4xf32>, vector<4x8xf32>, vector<100x8xf32> -> vector<100x8xf32>
    %131 = arith.addf %126, %130 : vector<100x8xf32>
    %c10 = arith.constant 10 : index
    %c0_82 = arith.constant 0 : index
    %132 = vector.load %arg15[%c10, %c0_82] : memref<122x4xf32, #tpu.memory_space<vmem>>, vector<100x4xf32>
    %c3_83 = arith.constant 3 : index
    %c0_84 = arith.constant 0 : index
    %c0_85 = arith.constant 0 : index
    %133 = vector.load %arg4[%c3_83, %c0_84, %c0_85] : memref<9x4x8xf32, #tpu.memory_space<vmem>>, vector<1x4x8xf32>
    %134 = vector.shape_cast %133 : vector<1x4x8xf32> to vector<4x8xf32>
    %cst_86 = arith.constant dense<0.000000e+00> : vector<100x8xf32>
    %135 = tpu.matmul %132, %134, %cst_86 {dimension_numbers = #tpu.dot_dimension_numbers<[1], [0], [0], [1], [0, 0, 1, 1], [], []>} : vector<100x4xf32>, vector<4x8xf32>, vector<100x8xf32> -> vector<100x8xf32>
    %136 = arith.addf %131, %135 : vector<100x8xf32>
    %c11 = arith.constant 11 : index
    %c0_87 = arith.constant 0 : index
    %137 = vector.load %arg15[%c11, %c0_87] : memref<122x4xf32, #tpu.memory_space<vmem>>, vector<100x4xf32>
    %c4_88 = arith.constant 4 : index
    %c0_89 = arith.constant 0 : index
    %c0_90 = arith.constant 0 : index
    %138 = vector.load %arg4[%c4_88, %c0_89, %c0_90] : memref<9x4x8xf32, #tpu.memory_space<vmem>>, vector<1x4x8xf32>
    %139 = vector.shape_cast %138 : vector<1x4x8xf32> to vector<4x8xf32>
    %cst_91 = arith.constant dense<0.000000e+00> : vector<100x8xf32>
    %140 = tpu.matmul %137, %139, %cst_91 {dimension_numbers = #tpu.dot_dimension_numbers<[1], [0], [0], [1], [0, 0, 1, 1], [], []>} : vector<100x4xf32>, vector<4x8xf32>, vector<100x8xf32> -> vector<100x8xf32>
    %141 = arith.addf %136, %140 : vector<100x8xf32>
    %c12 = arith.constant 12 : index
    %c0_92 = arith.constant 0 : index
    %142 = vector.load %arg15[%c12, %c0_92] : memref<122x4xf32, #tpu.memory_space<vmem>>, vector<100x4xf32>
    %c5_93 = arith.constant 5 : index
    %c0_94 = arith.constant 0 : index
    %c0_95 = arith.constant 0 : index
    %143 = vector.load %arg4[%c5_93, %c0_94, %c0_95] : memref<9x4x8xf32, #tpu.memory_space<vmem>>, vector<1x4x8xf32>
    %144 = vector.shape_cast %143 : vector<1x4x8xf32> to vector<4x8xf32>
    %cst_96 = arith.constant dense<0.000000e+00> : vector<100x8xf32>
    %145 = tpu.matmul %142, %144, %cst_96 {dimension_numbers = #tpu.dot_dimension_numbers<[1], [0], [0], [1], [0, 0, 1, 1], [], []>} : vector<100x4xf32>, vector<4x8xf32>, vector<100x8xf32> -> vector<100x8xf32>
    %146 = arith.addf %141, %145 : vector<100x8xf32>
    %c20_97 = arith.constant 20 : index
    %c0_98 = arith.constant 0 : index
    %147 = vector.load %arg15[%c20_97, %c0_98] : memref<122x4xf32, #tpu.memory_space<vmem>>, vector<100x4xf32>
    %c6_99 = arith.constant 6 : index
    %c0_100 = arith.constant 0 : index
    %c0_101 = arith.constant 0 : index
    %148 = vector.load %arg4[%c6_99, %c0_100, %c0_101] : memref<9x4x8xf32, #tpu.memory_space<vmem>>, vector<1x4x8xf32>
    %149 = vector.shape_cast %148 : vector<1x4x8xf32> to vector<4x8xf32>
    %cst_102 = arith.constant dense<0.000000e+00> : vector<100x8xf32>
    %150 = tpu.matmul %147, %149, %cst_102 {dimension_numbers = #tpu.dot_dimension_numbers<[1], [0], [0], [1], [0, 0, 1, 1], [], []>} : vector<100x4xf32>, vector<4x8xf32>, vector<100x8xf32> -> vector<100x8xf32>
    %151 = arith.addf %146, %150 : vector<100x8xf32>
    %c21 = arith.constant 21 : index
    %c0_103 = arith.constant 0 : index
    %152 = vector.load %arg15[%c21, %c0_103] : memref<122x4xf32, #tpu.memory_space<vmem>>, vector<100x4xf32>
    %c7_104 = arith.constant 7 : index
    %c0_105 = arith.constant 0 : index
    %c0_106 = arith.constant 0 : index
    %153 = vector.load %arg4[%c7_104, %c0_105, %c0_106] : memref<9x4x8xf32, #tpu.memory_space<vmem>>, vector<1x4x8xf32>
    %154 = vector.shape_cast %153 : vector<1x4x8xf32> to vector<4x8xf32>
    %cst_107 = arith.constant dense<0.000000e+00> : vector<100x8xf32>
    %155 = tpu.matmul %152, %154, %cst_107 {dimension_numbers = #tpu.dot_dimension_numbers<[1], [0], [0], [1], [0, 0, 1, 1], [], []>} : vector<100x4xf32>, vector<4x8xf32>, vector<100x8xf32> -> vector<100x8xf32>
    %156 = arith.addf %151, %155 : vector<100x8xf32>
    %c22_108 = arith.constant 22 : index
    %c0_109 = arith.constant 0 : index
    %157 = vector.load %arg15[%c22_108, %c0_109] : memref<122x4xf32, #tpu.memory_space<vmem>>, vector<100x4xf32>
    %c8_110 = arith.constant 8 : index
    %c0_111 = arith.constant 0 : index
    %c0_112 = arith.constant 0 : index
    %158 = vector.load %arg4[%c8_110, %c0_111, %c0_112] : memref<9x4x8xf32, #tpu.memory_space<vmem>>, vector<1x4x8xf32>
    %159 = vector.shape_cast %158 : vector<1x4x8xf32> to vector<4x8xf32>
    %cst_113 = arith.constant dense<0.000000e+00> : vector<100x8xf32>
    %160 = tpu.matmul %157, %159, %cst_113 {dimension_numbers = #tpu.dot_dimension_numbers<[1], [0], [0], [1], [0, 0, 1, 1], [], []>} : vector<100x4xf32>, vector<4x8xf32>, vector<100x8xf32> -> vector<100x8xf32>
    %161 = arith.addf %156, %160 : vector<100x8xf32>
    %c0_114 = arith.constant 0 : index
    %c0_115 = arith.constant 0 : index
    %162 = vector.load %arg5[%c0_114, %c0_115] : memref<1x8xf32, #tpu.memory_space<vmem>>, vector<1x8xf32>
    %163 = vector.broadcast %162 : vector<1x8xf32> to vector<100x8xf32>
    %164 = arith.addf %161, %163 : vector<100x8xf32>
    %cst_116 = arith.constant 0.000000e+00 : f32
    %165 = vector.broadcast %cst_116 : f32 to vector<100x8xf32>
    %166 = arith.maximumf %164, %165 : vector<100x8xf32>
    %c0_117 = arith.constant 0 : index
    %c0_118 = arith.constant 0 : index
    %167 = vector.load %arg19[%c0_117, %c0_118] : memref<100x8xf32, #tpu.memory_space<vmem>>, vector<100x8xf32>
    tpu.vector_store %arg19[%c0_117, %c0_118], %166 {strides = array<i32>} : memref<100x8xf32, #tpu.memory_space<vmem>>, vector<100x8xf32>,
    %c1_119 = arith.constant 1 : index
    %c0_120 = arith.constant 0 : index
    %168 = tpu.strided_load %arg19[%c1_119, %c0_120] {strides = array<i32: 2, 1>} : memref<100x8xf32, #tpu.memory_space<vmem>>, vector<49x8xf32>
    %c2_121 = arith.constant 2 : index
    %c0_122 = arith.constant 0 : index
    %169 = tpu.strided_load %arg19[%c2_121, %c0_122] {strides = array<i32: 2, 1>} : memref<100x8xf32, #tpu.memory_space<vmem>>, vector<49x8xf32>
    %170 = arith.maximumf %168, %169 : vector<49x8xf32>
    %171 = vector.extract_strided_slice %170 {offsets = [5, 0], sizes = [4, 8], strides = [1, 1]} : vector<49x8xf32> to vector<4x8xf32>
    %172 = vector.extract_strided_slice %170 {offsets = [10, 0], sizes = [4, 8], strides = [1, 1]} : vector<49x8xf32> to vector<4x8xf32>
    %173 = arith.maximumf %171, %172 : vector<4x8xf32>
    %174 = vector.extract_strided_slice %170 {offsets = [15, 0], sizes = [4, 8], strides = [1, 1]} : vector<49x8xf32> to vector<4x8xf32>
    %175 = vector.extract_strided_slice %170 {offsets = [20, 0], sizes = [4, 8], strides = [1, 1]} : vector<49x8xf32> to vector<4x8xf32>
    %176 = arith.maximumf %174, %175 : vector<4x8xf32>
    %177 = vector.extract_strided_slice %170 {offsets = [25, 0], sizes = [4, 8], strides = [1, 1]} : vector<49x8xf32> to vector<4x8xf32>
    %178 = vector.extract_strided_slice %170 {offsets = [30, 0], sizes = [4, 8], strides = [1, 1]} : vector<49x8xf32> to vector<4x8xf32>
    %179 = arith.maximumf %177, %178 : vector<4x8xf32>
    %180 = vector.extract_strided_slice %170 {offsets = [35, 0], sizes = [4, 8], strides = [1, 1]} : vector<49x8xf32> to vector<4x8xf32>
    %181 = vector.extract_strided_slice %170 {offsets = [40, 0], sizes = [4, 8], strides = [1, 1]} : vector<49x8xf32> to vector<4x8xf32>
    %182 = arith.maximumf %180, %181 : vector<4x8xf32>
    %c14 = arith.constant 14 : index
    %c0_123 = arith.constant 0 : index
    %183 = vector.load %arg16[%c14, %c0_123] : memref<50x8xf32, #tpu.memory_space<vmem>>, vector<4x8xf32>
    tpu.vector_store %arg16[%c14, %c0_123], %173 {strides = array<i32>} : memref<50x8xf32, #tpu.memory_space<vmem>>, vector<4x8xf32>,
    %c20_124 = arith.constant 20 : index
    %c0_125 = arith.constant 0 : index
    %184 = vector.load %arg16[%c20_124, %c0_125] : memref<50x8xf32, #tpu.memory_space<vmem>>, vector<4x8xf32>
    tpu.vector_store %arg16[%c20_124, %c0_125], %176 {strides = array<i32>} : memref<50x8xf32, #tpu.memory_space<vmem>>, vector<4x8xf32>,
    %c26 = arith.constant 26 : index
    %c0_126 = arith.constant 0 : index
    %185 = vector.load %arg16[%c26, %c0_126] : memref<50x8xf32, #tpu.memory_space<vmem>>, vector<4x8xf32>
    tpu.vector_store %arg16[%c26, %c0_126], %179 {strides = array<i32>} : memref<50x8xf32, #tpu.memory_space<vmem>>, vector<4x8xf32>,
    %c32_127 = arith.constant 32 : index
    %c0_128 = arith.constant 0 : index
    %186 = vector.load %arg16[%c32_127, %c0_128] : memref<50x8xf32, #tpu.memory_space<vmem>>, vector<4x8xf32>
    tpu.vector_store %arg16[%c32_127, %c0_128], %182 {strides = array<i32>} : memref<50x8xf32, #tpu.memory_space<vmem>>, vector<4x8xf32>,
    %c0_129 = arith.constant 0 : index
    %c0_130 = arith.constant 0 : index
    %187 = vector.load %arg16[%c0_129, %c0_130] : memref<50x8xf32, #tpu.memory_space<vmem>>, vector<36x8xf32>
    %c0_131 = arith.constant 0 : index
    %c0_132 = arith.constant 0 : index
    %c0_133 = arith.constant 0 : index
    %188 = vector.load %arg6[%c0_131, %c0_132, %c0_133] : memref<9x8x16xf32, #tpu.memory_space<vmem>>, vector<1x8x16xf32>
    %189 = vector.shape_cast %188 : vector<1x8x16xf32> to vector<8x16xf32>
    %cst_134 = arith.constant dense<0.000000e+00> : vector<36x16xf32>
    %190 = tpu.matmul %187, %189, %cst_134 {dimension_numbers = #tpu.dot_dimension_numbers<[1], [0], [0], [1], [0, 0, 1, 1], [], []>} : vector<36x8xf32>, vector<8x16xf32>, vector<36x16xf32> -> vector<36x16xf32>
    %c1_135 = arith.constant 1 : index
    %c0_136 = arith.constant 0 : index
    %191 = vector.load %arg16[%c1_135, %c0_136] : memref<50x8xf32, #tpu.memory_space<vmem>>, vector<36x8xf32>
    %c1_137 = arith.constant 1 : index
    %c0_138 = arith.constant 0 : index
    %c0_139 = arith.constant 0 : index
    %192 = vector.load %arg6[%c1_137, %c0_138, %c0_139] : memref<9x8x16xf32, #tpu.memory_space<vmem>>, vector<1x8x16xf32>
    %193 = vector.shape_cast %192 : vector<1x8x16xf32> to vector<8x16xf32>
    %cst_140 = arith.constant dense<0.000000e+00> : vector<36x16xf32>
    %194 = tpu.matmul %191, %193, %cst_140 {dimension_numbers = #tpu.dot_dimension_numbers<[1], [0], [0], [1], [0, 0, 1, 1], [], []>} : vector<36x8xf32>, vector<8x16xf32>, vector<36x16xf32> -> vector<36x16xf32>
    %195 = arith.addf %190, %194 : vector<36x16xf32>
    %c2_141 = arith.constant 2 : index
    %c0_142 = arith.constant 0 : index
    %196 = vector.load %arg16[%c2_141, %c0_142] : memref<50x8xf32, #tpu.memory_space<vmem>>, vector<36x8xf32>
    %c2_143 = arith.constant 2 : index
    %c0_144 = arith.constant 0 : index
    %c0_145 = arith.constant 0 : index
    %197 = vector.load %arg6[%c2_143, %c0_144, %c0_145] : memref<9x8x16xf32, #tpu.memory_space<vmem>>, vector<1x8x16xf32>
    %198 = vector.shape_cast %197 : vector<1x8x16xf32> to vector<8x16xf32>
    %cst_146 = arith.constant dense<0.000000e+00> : vector<36x16xf32>
    %199 = tpu.matmul %196, %198, %cst_146 {dimension_numbers = #tpu.dot_dimension_numbers<[1], [0], [0], [1], [0, 0, 1, 1], [], []>} : vector<36x8xf32>, vector<8x16xf32>, vector<36x16xf32> -> vector<36x16xf32>
    %200 = arith.addf %195, %199 : vector<36x16xf32>
    %c6_147 = arith.constant 6 : index
    %c0_148 = arith.constant 0 : index
    %201 = vector.load %arg16[%c6_147, %c0_148] : memref<50x8xf32, #tpu.memory_space<vmem>>, vector<36x8xf32>
    %c3_149 = arith.constant 3 : index
    %c0_150 = arith.constant 0 : index
    %c0_151 = arith.constant 0 : index
    %202 = vector.load %arg6[%c3_149, %c0_150, %c0_151] : memref<9x8x16xf32, #tpu.memory_space<vmem>>, vector<1x8x16xf32>
    %203 = vector.shape_cast %202 : vector<1x8x16xf32> to vector<8x16xf32>
    %cst_152 = arith.constant dense<0.000000e+00> : vector<36x16xf32>
    %204 = tpu.matmul %201, %203, %cst_152 {dimension_numbers = #tpu.dot_dimension_numbers<[1], [0], [0], [1], [0, 0, 1, 1], [], []>} : vector<36x8xf32>, vector<8x16xf32>, vector<36x16xf32> -> vector<36x16xf32>
    %205 = arith.addf %200, %204 : vector<36x16xf32>
    %c7_153 = arith.constant 7 : index
    %c0_154 = arith.constant 0 : index
    %206 = vector.load %arg16[%c7_153, %c0_154] : memref<50x8xf32, #tpu.memory_space<vmem>>, vector<36x8xf32>
    %c4_155 = arith.constant 4 : index
    %c0_156 = arith.constant 0 : index
    %c0_157 = arith.constant 0 : index
    %207 = vector.load %arg6[%c4_155, %c0_156, %c0_157] : memref<9x8x16xf32, #tpu.memory_space<vmem>>, vector<1x8x16xf32>
    %208 = vector.shape_cast %207 : vector<1x8x16xf32> to vector<8x16xf32>
    %cst_158 = arith.constant dense<0.000000e+00> : vector<36x16xf32>
    %209 = tpu.matmul %206, %208, %cst_158 {dimension_numbers = #tpu.dot_dimension_numbers<[1], [0], [0], [1], [0, 0, 1, 1], [], []>} : vector<36x8xf32>, vector<8x16xf32>, vector<36x16xf32> -> vector<36x16xf32>
    %210 = arith.addf %205, %209 : vector<36x16xf32>
    %c8_159 = arith.constant 8 : index
    %c0_160 = arith.constant 0 : index
    %211 = vector.load %arg16[%c8_159, %c0_160] : memref<50x8xf32, #tpu.memory_space<vmem>>, vector<36x8xf32>
    %c5_161 = arith.constant 5 : index
    %c0_162 = arith.constant 0 : index
    %c0_163 = arith.constant 0 : index
    %212 = vector.load %arg6[%c5_161, %c0_162, %c0_163] : memref<9x8x16xf32, #tpu.memory_space<vmem>>, vector<1x8x16xf32>
    %213 = vector.shape_cast %212 : vector<1x8x16xf32> to vector<8x16xf32>
    %cst_164 = arith.constant dense<0.000000e+00> : vector<36x16xf32>
    %214 = tpu.matmul %211, %213, %cst_164 {dimension_numbers = #tpu.dot_dimension_numbers<[1], [0], [0], [1], [0, 0, 1, 1], [], []>} : vector<36x8xf32>, vector<8x16xf32>, vector<36x16xf32> -> vector<36x16xf32>
    %215 = arith.addf %210, %214 : vector<36x16xf32>
    %c12_165 = arith.constant 12 : index
    %c0_166 = arith.constant 0 : index
    %216 = vector.load %arg16[%c12_165, %c0_166] : memref<50x8xf32, #tpu.memory_space<vmem>>, vector<36x8xf32>
    %c6_167 = arith.constant 6 : index
    %c0_168 = arith.constant 0 : index
    %c0_169 = arith.constant 0 : index
    %217 = vector.load %arg6[%c6_167, %c0_168, %c0_169] : memref<9x8x16xf32, #tpu.memory_space<vmem>>, vector<1x8x16xf32>
    %218 = vector.shape_cast %217 : vector<1x8x16xf32> to vector<8x16xf32>
    %cst_170 = arith.constant dense<0.000000e+00> : vector<36x16xf32>
    %219 = tpu.matmul %216, %218, %cst_170 {dimension_numbers = #tpu.dot_dimension_numbers<[1], [0], [0], [1], [0, 0, 1, 1], [], []>} : vector<36x8xf32>, vector<8x16xf32>, vector<36x16xf32> -> vector<36x16xf32>
    %220 = arith.addf %215, %219 : vector<36x16xf32>
    %c13 = arith.constant 13 : index
    %c0_171 = arith.constant 0 : index
    %221 = vector.load %arg16[%c13, %c0_171] : memref<50x8xf32, #tpu.memory_space<vmem>>, vector<36x8xf32>
    %c7_172 = arith.constant 7 : index
    %c0_173 = arith.constant 0 : index
    %c0_174 = arith.constant 0 : index
    %222 = vector.load %arg6[%c7_172, %c0_173, %c0_174] : memref<9x8x16xf32, #tpu.memory_space<vmem>>, vector<1x8x16xf32>
    %223 = vector.shape_cast %222 : vector<1x8x16xf32> to vector<8x16xf32>
    %cst_175 = arith.constant dense<0.000000e+00> : vector<36x16xf32>
    %224 = tpu.matmul %221, %223, %cst_175 {dimension_numbers = #tpu.dot_dimension_numbers<[1], [0], [0], [1], [0, 0, 1, 1], [], []>} : vector<36x8xf32>, vector<8x16xf32>, vector<36x16xf32> -> vector<36x16xf32>
    %225 = arith.addf %220, %224 : vector<36x16xf32>
    %c14_176 = arith.constant 14 : index
    %c0_177 = arith.constant 0 : index
    %226 = vector.load %arg16[%c14_176, %c0_177] : memref<50x8xf32, #tpu.memory_space<vmem>>, vector<36x8xf32>
    %c8_178 = arith.constant 8 : index
    %c0_179 = arith.constant 0 : index
    %c0_180 = arith.constant 0 : index
    %227 = vector.load %arg6[%c8_178, %c0_179, %c0_180] : memref<9x8x16xf32, #tpu.memory_space<vmem>>, vector<1x8x16xf32>
    %228 = vector.shape_cast %227 : vector<1x8x16xf32> to vector<8x16xf32>
    %cst_181 = arith.constant dense<0.000000e+00> : vector<36x16xf32>
    %229 = tpu.matmul %226, %228, %cst_181 {dimension_numbers = #tpu.dot_dimension_numbers<[1], [0], [0], [1], [0, 0, 1, 1], [], []>} : vector<36x8xf32>, vector<8x16xf32>, vector<36x16xf32> -> vector<36x16xf32>
    %230 = arith.addf %225, %229 : vector<36x16xf32>
    %c0_182 = arith.constant 0 : index
    %c0_183 = arith.constant 0 : index
    %231 = vector.load %arg7[%c0_182, %c0_183] : memref<1x16xf32, #tpu.memory_space<vmem>>, vector<1x16xf32>
    %232 = vector.broadcast %231 : vector<1x16xf32> to vector<36x16xf32>
    %233 = arith.addf %230, %232 : vector<36x16xf32>
    %cst_184 = arith.constant 0.000000e+00 : f32
    %234 = vector.broadcast %cst_184 : f32 to vector<36x16xf32>
    %235 = arith.maximumf %233, %234 : vector<36x16xf32>
    %c0_185 = arith.constant 0 : index
    %c0_186 = arith.constant 0 : index
    %236 = vector.load %arg20[%c0_185, %c0_186] : memref<36x16xf32, #tpu.memory_space<vmem>>, vector<36x16xf32>
    tpu.vector_store %arg20[%c0_185, %c0_186], %235 {strides = array<i32>} : memref<36x16xf32, #tpu.memory_space<vmem>>, vector<36x16xf32>,
    %c1_187 = arith.constant 1 : index
    %c0_188 = arith.constant 0 : index
    %237 = tpu.strided_load %arg20[%c1_187, %c0_188] {strides = array<i32: 2, 1>} : memref<36x16xf32, #tpu.memory_space<vmem>>, vector<17x16xf32>
    %c2_189 = arith.constant 2 : index
    %c0_190 = arith.constant 0 : index
    %238 = tpu.strided_load %arg20[%c2_189, %c0_190] {strides = array<i32: 2, 1>} : memref<36x16xf32, #tpu.memory_space<vmem>>, vector<17x16xf32>
    %239 = arith.maximumf %237, %238 : vector<17x16xf32>
    %240 = vector.extract_strided_slice %239 {offsets = [3, 0], sizes = [2, 16], strides = [1, 1]} : vector<17x16xf32> to vector<2x16xf32>
    %241 = vector.extract_strided_slice %239 {offsets = [6, 0], sizes = [2, 16], strides = [1, 1]} : vector<17x16xf32> to vector<2x16xf32>
    %242 = arith.maximumf %240, %241 : vector<2x16xf32>
    %243 = vector.extract_strided_slice %239 {offsets = [9, 0], sizes = [2, 16], strides = [1, 1]} : vector<17x16xf32> to vector<2x16xf32>
    %244 = vector.extract_strided_slice %239 {offsets = [12, 0], sizes = [2, 16], strides = [1, 1]} : vector<17x16xf32> to vector<2x16xf32>
    %245 = arith.maximumf %243, %244 : vector<2x16xf32>
    %c10_191 = arith.constant 10 : index
    %c0_192 = arith.constant 0 : index
    %246 = vector.load %arg17[%c10_191, %c0_192] : memref<26x16xf32, #tpu.memory_space<vmem>>, vector<2x16xf32>
    tpu.vector_store %arg17[%c10_191, %c0_192], %242 {strides = array<i32>} : memref<26x16xf32, #tpu.memory_space<vmem>>, vector<2x16xf32>,
    %c14_193 = arith.constant 14 : index
    %c0_194 = arith.constant 0 : index
    %247 = vector.load %arg17[%c14_193, %c0_194] : memref<26x16xf32, #tpu.memory_space<vmem>>, vector<2x16xf32>
    tpu.vector_store %arg17[%c14_193, %c0_194], %245 {strides = array<i32>} : memref<26x16xf32, #tpu.memory_space<vmem>>, vector<2x16xf32>,
    %c0_195 = arith.constant 0 : index
    %c0_196 = arith.constant 0 : index
    %248 = vector.load %arg17[%c0_195, %c0_196] : memref<26x16xf32, #tpu.memory_space<vmem>>, vector<16x16xf32>
    %c0_197 = arith.constant 0 : index
    %c0_198 = arith.constant 0 : index
    %c0_199 = arith.constant 0 : index
    %249 = vector.load %arg8[%c0_197, %c0_198, %c0_199] : memref<9x16x32xf32, #tpu.memory_space<vmem>>, vector<1x16x32xf32>
    %250 = vector.shape_cast %249 : vector<1x16x32xf32> to vector<16x32xf32>
    %cst_200 = arith.constant dense<0.000000e+00> : vector<16x32xf32>
    %251 = tpu.matmul %248, %250, %cst_200 {dimension_numbers = #tpu.dot_dimension_numbers<[1], [0], [0], [1], [0, 0, 1, 1], [], []>} : vector<16x16xf32>, vector<16x32xf32>, vector<16x32xf32> -> vector<16x32xf32>
    %c1_201 = arith.constant 1 : index
    %c0_202 = arith.constant 0 : index
    %252 = vector.load %arg17[%c1_201, %c0_202] : memref<26x16xf32, #tpu.memory_space<vmem>>, vector<16x16xf32>
    %c1_203 = arith.constant 1 : index
    %c0_204 = arith.constant 0 : index
    %c0_205 = arith.constant 0 : index
    %253 = vector.load %arg8[%c1_203, %c0_204, %c0_205] : memref<9x16x32xf32, #tpu.memory_space<vmem>>, vector<1x16x32xf32>
    %254 = vector.shape_cast %253 : vector<1x16x32xf32> to vector<16x32xf32>
    %cst_206 = arith.constant dense<0.000000e+00> : vector<16x32xf32>
    %255 = tpu.matmul %252, %254, %cst_206 {dimension_numbers = #tpu.dot_dimension_numbers<[1], [0], [0], [1], [0, 0, 1, 1], [], []>} : vector<16x16xf32>, vector<16x32xf32>, vector<16x32xf32> -> vector<16x32xf32>
    %256 = arith.addf %251, %255 : vector<16x32xf32>
    %c2_207 = arith.constant 2 : index
    %c0_208 = arith.constant 0 : index
    %257 = vector.load %arg17[%c2_207, %c0_208] : memref<26x16xf32, #tpu.memory_space<vmem>>, vector<16x16xf32>
    %c2_209 = arith.constant 2 : index
    %c0_210 = arith.constant 0 : index
    %c0_211 = arith.constant 0 : index
    %258 = vector.load %arg8[%c2_209, %c0_210, %c0_211] : memref<9x16x32xf32, #tpu.memory_space<vmem>>, vector<1x16x32xf32>
    %259 = vector.shape_cast %258 : vector<1x16x32xf32> to vector<16x32xf32>
    %cst_212 = arith.constant dense<0.000000e+00> : vector<16x32xf32>
    %260 = tpu.matmul %257, %259, %cst_212 {dimension_numbers = #tpu.dot_dimension_numbers<[1], [0], [0], [1], [0, 0, 1, 1], [], []>} : vector<16x16xf32>, vector<16x32xf32>, vector<16x32xf32> -> vector<16x32xf32>
    %261 = arith.addf %256, %260 : vector<16x32xf32>
    %c4_213 = arith.constant 4 : index
    %c0_214 = arith.constant 0 : index
    %262 = vector.load %arg17[%c4_213, %c0_214] : memref<26x16xf32, #tpu.memory_space<vmem>>, vector<16x16xf32>
    %c3_215 = arith.constant 3 : index
    %c0_216 = arith.constant 0 : index
    %c0_217 = arith.constant 0 : index
    %263 = vector.load %arg8[%c3_215, %c0_216, %c0_217] : memref<9x16x32xf32, #tpu.memory_space<vmem>>, vector<1x16x32xf32>
    %264 = vector.shape_cast %263 : vector<1x16x32xf32> to vector<16x32xf32>
    %cst_218 = arith.constant dense<0.000000e+00> : vector<16x32xf32>
    %265 = tpu.matmul %262, %264, %cst_218 {dimension_numbers = #tpu.dot_dimension_numbers<[1], [0], [0], [1], [0, 0, 1, 1], [], []>} : vector<16x16xf32>, vector<16x32xf32>, vector<16x32xf32> -> vector<16x32xf32>
    %266 = arith.addf %261, %265 : vector<16x32xf32>
    %c5_219 = arith.constant 5 : index
    %c0_220 = arith.constant 0 : index
    %267 = vector.load %arg17[%c5_219, %c0_220] : memref<26x16xf32, #tpu.memory_space<vmem>>, vector<16x16xf32>
    %c4_221 = arith.constant 4 : index
    %c0_222 = arith.constant 0 : index
    %c0_223 = arith.constant 0 : index
    %268 = vector.load %arg8[%c4_221, %c0_222, %c0_223] : memref<9x16x32xf32, #tpu.memory_space<vmem>>, vector<1x16x32xf32>
    %269 = vector.shape_cast %268 : vector<1x16x32xf32> to vector<16x32xf32>
    %cst_224 = arith.constant dense<0.000000e+00> : vector<16x32xf32>
    %270 = tpu.matmul %267, %269, %cst_224 {dimension_numbers = #tpu.dot_dimension_numbers<[1], [0], [0], [1], [0, 0, 1, 1], [], []>} : vector<16x16xf32>, vector<16x32xf32>, vector<16x32xf32> -> vector<16x32xf32>
    %271 = arith.addf %266, %270 : vector<16x32xf32>
    %c6_225 = arith.constant 6 : index
    %c0_226 = arith.constant 0 : index
    %272 = vector.load %arg17[%c6_225, %c0_226] : memref<26x16xf32, #tpu.memory_space<vmem>>, vector<16x16xf32>
    %c5_227 = arith.constant 5 : index
    %c0_228 = arith.constant 0 : index
    %c0_229 = arith.constant 0 : index
    %273 = vector.load %arg8[%c5_227, %c0_228, %c0_229] : memref<9x16x32xf32, #tpu.memory_space<vmem>>, vector<1x16x32xf32>
    %274 = vector.shape_cast %273 : vector<1x16x32xf32> to vector<16x32xf32>
    %cst_230 = arith.constant dense<0.000000e+00> : vector<16x32xf32>
    %275 = tpu.matmul %272, %274, %cst_230 {dimension_numbers = #tpu.dot_dimension_numbers<[1], [0], [0], [1], [0, 0, 1, 1], [], []>} : vector<16x16xf32>, vector<16x32xf32>, vector<16x32xf32> -> vector<16x32xf32>
    %276 = arith.addf %271, %275 : vector<16x32xf32>
    %c8_231 = arith.constant 8 : index
    %c0_232 = arith.constant 0 : index
    %277 = vector.load %arg17[%c8_231, %c0_232] : memref<26x16xf32, #tpu.memory_space<vmem>>, vector<16x16xf32>
    %c6_233 = arith.constant 6 : index
    %c0_234 = arith.constant 0 : index
    %c0_235 = arith.constant 0 : index
    %278 = vector.load %arg8[%c6_233, %c0_234, %c0_235] : memref<9x16x32xf32, #tpu.memory_space<vmem>>, vector<1x16x32xf32>
    %279 = vector.shape_cast %278 : vector<1x16x32xf32> to vector<16x32xf32>
    %cst_236 = arith.constant dense<0.000000e+00> : vector<16x32xf32>
    %280 = tpu.matmul %277, %279, %cst_236 {dimension_numbers = #tpu.dot_dimension_numbers<[1], [0], [0], [1], [0, 0, 1, 1], [], []>} : vector<16x16xf32>, vector<16x32xf32>, vector<16x32xf32> -> vector<16x32xf32>
    %281 = arith.addf %276, %280 : vector<16x32xf32>
    %c9 = arith.constant 9 : index
    %c0_237 = arith.constant 0 : index
    %282 = vector.load %arg17[%c9, %c0_237] : memref<26x16xf32, #tpu.memory_space<vmem>>, vector<16x16xf32>
    %c7_238 = arith.constant 7 : index
    %c0_239 = arith.constant 0 : index
    %c0_240 = arith.constant 0 : index
    %283 = vector.load %arg8[%c7_238, %c0_239, %c0_240] : memref<9x16x32xf32, #tpu.memory_space<vmem>>, vector<1x16x32xf32>
    %284 = vector.shape_cast %283 : vector<1x16x32xf32> to vector<16x32xf32>
    %cst_241 = arith.constant dense<0.000000e+00> : vector<16x32xf32>
    %285 = tpu.matmul %282, %284, %cst_241 {dimension_numbers = #tpu.dot_dimension_numbers<[1], [0], [0], [1], [0, 0, 1, 1], [], []>} : vector<16x16xf32>, vector<16x32xf32>, vector<16x32xf32> -> vector<16x32xf32>
    %286 = arith.addf %281, %285 : vector<16x32xf32>
    %c10_242 = arith.constant 10 : index
    %c0_243 = arith.constant 0 : index
    %287 = vector.load %arg17[%c10_242, %c0_243] : memref<26x16xf32, #tpu.memory_space<vmem>>, vector<16x16xf32>
    %c8_244 = arith.constant 8 : index
    %c0_245 = arith.constant 0 : index
    %c0_246 = arith.constant 0 : index
    %288 = vector.load %arg8[%c8_244, %c0_245, %c0_246] : memref<9x16x32xf32, #tpu.memory_space<vmem>>, vector<1x16x32xf32>
    %289 = vector.shape_cast %288 : vector<1x16x32xf32> to vector<16x32xf32>
    %cst_247 = arith.constant dense<0.000000e+00> : vector<16x32xf32>
    %290 = tpu.matmul %287, %289, %cst_247 {dimension_numbers = #tpu.dot_dimension_numbers<[1], [0], [0], [1], [0, 0, 1, 1], [], []>} : vector<16x16xf32>, vector<16x32xf32>, vector<16x32xf32> -> vector<16x32xf32>
    %291 = arith.addf %286, %290 : vector<16x32xf32>
    %c0_248 = arith.constant 0 : index
    %c0_249 = arith.constant 0 : index
    %292 = vector.load %arg9[%c0_248, %c0_249] : memref<1x32xf32, #tpu.memory_space<vmem>>, vector<1x32xf32>
    %293 = vector.broadcast %292 : vector<1x32xf32> to vector<16x32xf32>
    %294 = arith.addf %291, %293 : vector<16x32xf32>
    %cst_250 = arith.constant 0.000000e+00 : f32
    %295 = vector.broadcast %cst_250 : f32 to vector<16x32xf32>
    %296 = arith.maximumf %294, %295 : vector<16x32xf32>
    %c0_251 = arith.constant 0 : index
    %c0_252 = arith.constant 0 : index
    %297 = vector.load %arg21[%c0_251, %c0_252] : memref<16x32xf32, #tpu.memory_space<vmem>>, vector<16x32xf32>
    tpu.vector_store %arg21[%c0_251, %c0_252], %296 {strides = array<i32>} : memref<16x32xf32, #tpu.memory_space<vmem>>, vector<16x32xf32>,
    %c1_253 = arith.constant 1 : index
    %c0_254 = arith.constant 0 : index
    %298 = tpu.strided_load %arg21[%c1_253, %c0_254] {strides = array<i32: 2, 1>} : memref<16x32xf32, #tpu.memory_space<vmem>>, vector<7x32xf32>
    %c2_255 = arith.constant 2 : index
    %c0_256 = arith.constant 0 : index
    %299 = tpu.strided_load %arg21[%c2_255, %c0_256] {strides = array<i32: 2, 1>} : memref<16x32xf32, #tpu.memory_space<vmem>>, vector<7x32xf32>
    %300 = arith.maximumf %298, %299 : vector<7x32xf32>
    %301 = vector.extract_strided_slice %300 {offsets = [2, 0], sizes = [1, 32], strides = [1, 1]} : vector<7x32xf32> to vector<1x32xf32>
    %302 = vector.extract_strided_slice %300 {offsets = [4, 0], sizes = [1, 32], strides = [1, 1]} : vector<7x32xf32> to vector<1x32xf32>
    %303 = arith.maximumf %301, %302 : vector<1x32xf32>
    %c0_257 = arith.constant 0 : index
    %c0_258 = arith.constant 0 : index
    %304 = vector.load %arg22[%c0_257, %c0_258] : memref<1x32xf32, #tpu.memory_space<vmem>>, vector<1x32xf32>
    tpu.vector_store %arg22[%c0_257, %c0_258], %303 {strides = array<i32>} : memref<1x32xf32, #tpu.memory_space<vmem>>, vector<1x32xf32>,
    %c0_259 = arith.constant 0 : index
    %c0_260 = arith.constant 0 : index
    %305 = vector.load %arg22[%c0_259, %c0_260] : memref<1x32xf32, #tpu.memory_space<vmem>>, vector<1x32xf32>
    %c0_261 = arith.constant 0 : index
    %c0_262 = arith.constant 0 : index
    %306 = vector.load %arg10[%c0_261, %c0_262] : memref<32x32xf32, #tpu.memory_space<vmem>>, vector<32x32xf32>
    %cst_263 = arith.constant dense<0.000000e+00> : vector<1x32xf32>
    %307 = tpu.matmul %305, %306, %cst_263 {dimension_numbers = #tpu.dot_dimension_numbers<[1], [0], [0], [1], [0, 0, 1, 1], [], []>} : vector<1x32xf32>, vector<32x32xf32>, vector<1x32xf32> -> vector<1x32xf32>
    %c0_264 = arith.constant 0 : index
    %c0_265 = arith.constant 0 : index
    %308 = vector.load %arg11[%c0_264, %c0_265] : memref<1x32xf32, #tpu.memory_space<vmem>>, vector<1x32xf32>
    %309 = arith.addf %307, %308 : vector<1x32xf32>
    %cst_266 = arith.constant 0.000000e+00 : f32
    %310 = vector.broadcast %cst_266 : f32 to vector<1x32xf32>
    %311 = arith.maximumf %309, %310 : vector<1x32xf32>
    %c0_267 = arith.constant 0 : index
    %c0_268 = arith.constant 0 : index
    %312 = vector.load %arg12[%c0_267, %c0_268] : memref<32x30xf32, #tpu.memory_space<vmem>>, vector<32x30xf32>
    %cst_269 = arith.constant dense<0.000000e+00> : vector<1x30xf32>
    %313 = tpu.matmul %311, %312, %cst_269 {dimension_numbers = #tpu.dot_dimension_numbers<[1], [0], [0], [1], [0, 0, 1, 1], [], []>} : vector<1x32xf32>, vector<32x30xf32>, vector<1x30xf32> -> vector<1x30xf32>
    %c0_270 = arith.constant 0 : index
    %c0_271 = arith.constant 0 : index
    %314 = vector.load %arg13[%c0_270, %c0_271] : memref<1x30xf32, #tpu.memory_space<vmem>>, vector<1x30xf32>
    %315 = arith.addf %313, %314 : vector<1x30xf32>
    %c0_272 = arith.constant 0 : index
    %c0_273 = arith.constant 0 : index
    %c0_274 = arith.constant 0 : index
    %316 = vector.load %arg14[%c0_272, %c0_273, %c0_274] : memref<1x1x30xf32, #tpu.memory_space<vmem>>, vector<1x1x30xf32>
    %317 = vector.shape_cast %316 : vector<1x1x30xf32> to vector<1x30xf32>
    %318 = vector.shape_cast %315 : vector<1x30xf32> to vector<1x1x30xf32>
    tpu.vector_store %arg14[%c0_272, %c0_273, %c0_274], %318 {strides = array<i32>} : memref<1x1x30xf32, #tpu.memory_space<vmem>>, vector<1x1x30xf32>,
    return
  }
  func.func @transform_0(%arg0: i32) -> (i32, i32, i32) {
    %c0_i32 = arith.constant 0 : i32
    %c0_i32_0 = arith.constant 0 : i32
    %c0_i32_1 = arith.constant 0 : i32
    return %arg0, %c0_i32, %c0_i32_0 : i32, i32, i32
  }
  func.func @transform_1(%arg0: i32) -> (i32, i32, i32) {
    %c0_i32 = arith.constant 0 : i32
    %c0_i32_0 = arith.constant 0 : i32
    %c0_i32_1 = arith.constant 0 : i32
    %c0_i32_2 = arith.constant 0 : i32
    return %c0_i32, %c0_i32_0, %c0_i32_1 : i32, i32, i32
  }
  func.func @transform_2(%arg0: i32) -> (i32, i32) {
    %c0_i32 = arith.constant 0 : i32
    %c0_i32_0 = arith.constant 0 : i32
    %c0_i32_1 = arith.constant 0 : i32
    return %c0_i32, %c0_i32_0 : i32, i32
  }
  func.func @transform_3(%arg0: i32) -> (i32, i32, i32) {
    %c0_i32 = arith.constant 0 : i32
    %c0_i32_0 = arith.constant 0 : i32
    %c0_i32_1 = arith.constant 0 : i32
    %c0_i32_2 = arith.constant 0 : i32
    return %c0_i32, %c0_i32_0, %c0_i32_1 : i32, i32, i32
  }
  func.func @transform_4(%arg0: i32) -> (i32, i32) {
    %c0_i32 = arith.constant 0 : i32
    %c0_i32_0 = arith.constant 0 : i32
    %c0_i32_1 = arith.constant 0 : i32
    return %c0_i32, %c0_i32_0 : i32, i32
  }
  func.func @transform_5(%arg0: i32) -> (i32, i32, i32) {
    %c0_i32 = arith.constant 0 : i32
    %c0_i32_0 = arith.constant 0 : i32
    %c0_i32_1 = arith.constant 0 : i32
    %c0_i32_2 = arith.constant 0 : i32
    return %c0_i32, %c0_i32_0, %c0_i32_1 : i32, i32, i32
  }
  func.func @transform_6(%arg0: i32) -> (i32, i32) {
    %c0_i32 = arith.constant 0 : i32
    %c0_i32_0 = arith.constant 0 : i32
    %c0_i32_1 = arith.constant 0 : i32
    return %c0_i32, %c0_i32_0 : i32, i32
  }
  func.func @transform_7(%arg0: i32) -> (i32, i32, i32) {
    %c0_i32 = arith.constant 0 : i32
    %c0_i32_0 = arith.constant 0 : i32
    %c0_i32_1 = arith.constant 0 : i32
    %c0_i32_2 = arith.constant 0 : i32
    return %c0_i32, %c0_i32_0, %c0_i32_1 : i32, i32, i32
  }
  func.func @transform_8(%arg0: i32) -> (i32, i32) {
    %c0_i32 = arith.constant 0 : i32
    %c0_i32_0 = arith.constant 0 : i32
    %c0_i32_1 = arith.constant 0 : i32
    return %c0_i32, %c0_i32_0 : i32, i32
  }
  func.func @transform_9(%arg0: i32) -> (i32, i32) {
    %c0_i32 = arith.constant 0 : i32
    %c0_i32_0 = arith.constant 0 : i32
    %c0_i32_1 = arith.constant 0 : i32
    return %c0_i32, %c0_i32_0 : i32, i32
  }
  func.func @transform_10(%arg0: i32) -> (i32, i32) {
    %c0_i32 = arith.constant 0 : i32
    %c0_i32_0 = arith.constant 0 : i32
    %c0_i32_1 = arith.constant 0 : i32
    return %c0_i32, %c0_i32_0 : i32, i32
  }
  func.func @transform_11(%arg0: i32) -> (i32, i32) {
    %c0_i32 = arith.constant 0 : i32
    %c0_i32_0 = arith.constant 0 : i32
    %c0_i32_1 = arith.constant 0 : i32
    return %c0_i32, %c0_i32_0 : i32, i32
  }
  func.func @transform_12(%arg0: i32) -> (i32, i32) {
    %c0_i32 = arith.constant 0 : i32
    %c0_i32_0 = arith.constant 0 : i32
    %c0_i32_1 = arith.constant 0 : i32
    return %c0_i32, %c0_i32_0 : i32, i32
  }
  func.func @transform_13(%arg0: i32) -> (i32, i32, i32) {
    %c0_i32 = arith.constant 0 : i32
    %c0_i32_0 = arith.constant 0 : i32
    %c0_i32_1 = arith.constant 0 : i32
    return %arg0, %c0_i32, %c0_i32_0 : i32, i32, i32
  }
}

</mosaic_0001>

<llo_original>
// kernel: forward.1
$region0: #{forward.1}
  #allocation0 [shape = 'u32[]', space=smem, size = 0x4, offset = 0x4, fixed_abs, tag = 'smem constant byte address 0x4 - core index']
  #allocation1 [shape = 'u32[72,128]{1,0:T(1,128)}', space=vmem, size = 0x9000, scoped, tag = 'internal scratch']
  #allocation2 [shape = 'f32[122,4]{1,0:T(8,128)}', space=vmem, size = 0x10000, scoped, tag = 'scratch operand']
  #allocation3 [shape = 'f32[50,8]{1,0:T(8,128)}', space=vmem, size = 0x7000, scoped, tag = 'scratch operand']
  #allocation4 [shape = 'f32[26,16]{1,0:T(8,128)}', space=vmem, size = 0x4000, scoped, tag = 'scratch operand']
  #allocation5 [shape = 'f32[324,4]{1,0:T(8,128)}', space=vmem, size = 0x29000, scoped, tag = 'scratch operand']
  #allocation6 [shape = 'f32[100,8]{1,0:T(8,128)}', space=vmem, size = 0xd000, scoped, tag = 'scratch operand']
  #allocation7 [shape = 'f32[36,16]{1,0:T(8,128)}', space=vmem, size = 0x5000, scoped, tag = 'scratch operand']
  #allocation8 [shape = 'f32[16,32]{1,0:T(8,128)}', space=vmem, size = 0x2000, scoped, tag = 'scratch operand']
  #allocation9 [shape = 'f32[1,32]{1,0:T(1,128)}', space=vmem, size = 0x200, scoped, tag = 'scratch operand']
  %s0 = inlined_call_operand.vmem [shape: f32[2,362,1], index: 0, kind: input, shape index: {}]
  %s1 = inlined_call_operand.vmem [shape: f32[9,1,4], index: 1, kind: input, shape index: {}]
  %s2 = inlined_call_operand.vmem [shape: f32[1,4], index: 2, kind: input, shape index: {}]
  %s3 = inlined_call_operand.vmem [shape: f32[9,4,8], index: 3, kind: input, shape index: {}]
  %s4 = inlined_call_operand.vmem [shape: f32[1,8], index: 4, kind: input, shape index: {}]
  %s5 = inlined_call_operand.vmem [shape: f32[9,8,16], index: 5, kind: input, shape index: {}]
  %s6 = inlined_call_operand.vmem [shape: f32[1,16], index: 6, kind: input, shape index: {}]
  %s7 = inlined_call_operand.vmem [shape: f32[9,16,32], index: 7, kind: input, shape index: {}]
  %s8 = inlined_call_operand.vmem [shape: f32[1,32], index: 8, kind: input, shape index: {}]
  %s9 = inlined_call_operand.vmem [shape: f32[32,32], index: 9, kind: input, shape index: {}]
  %s10 = inlined_call_operand.vmem [shape: f32[1,32], index: 10, kind: input, shape index: {}]
  %s11 = inlined_call_operand.vmem [shape: f32[32,30], index: 11, kind: input, shape index: {}]
  %s12 = inlined_call_operand.vmem [shape: f32[1,30], index: 12, kind: input, shape index: {}]
  %s13 = inlined_call_operand.hbm [shape: f32[2,1,30], index: 13, kind: output, shape index: {}]
  %s14 = sld [smem:[#allocation0]]
  $region85: #{forward.1} parent=0
    _
  %s16 = ssub.s32 1, %s14
  %s17 = scalar_select 0, %s16, %s14
  $region1: #{forward.1} parent=0
    #allocation10 [shape = 'u8[1024]{0}', space=vmem, size = 0x400, scoped, tag = 'output window, operand 0']
    #allocation11 [shape = 's32[2]{0}', space=sflag, size = 0x8, scoped, tag = 'scoped memory for forward.1']
    %18 = vsyncpa [#allocation11], 0
    %s19 = scalar_lea.sflag [#allocation11], 1
    %20 = vsyncpa %s19, 0
    loop: start=0, step=1, limit=4
    $region2: #{forward.1} parent=1 // loop_pre_header
      _
    $region3: #{forward.1} parent=1 // loop_header
      %s22 = sphi 0, %s26
      %p23 = scmp.ge.s32.totalorder %s22, 4
      %s32 = sphi 0, %s34
      %s35 = sphi 0, %s32
      %s36 = sphi 0, %s35
      %s52 = sphi 0, %s36
      %s56 = sphi 0, %s56
      %s58 = sphi 0, %s56
      %s59 = sphi 0, %s58
      %s73 = sphi 0, %s59
      %s77 = sphi 0, %s77
      %s79 = sphi 0, %s77
      %s80 = sphi 0, %s79
      %s94 = sphi 0, %s80
      %s98 = sphi 0, %s98
      %s100 = sphi 0, %s98
      %s101 = sphi 0, %s100
      %s115 = sphi 0, %s101
      %s119 = sphi 0, %s119
      %s121 = sphi 0, %s119
      %s122 = sphi 0, %s121
      %s136 = sphi 0, %s122
      %s140 = sphi 0, %s140
      %s142 = sphi 0, %s140
      %s143 = sphi 0, %s142
      %s157 = sphi 0, %s143
      %s161 = sphi 0, %s161
      %s163 = sphi 0, %s161
      %s164 = sphi 0, %s163
      %s178 = sphi 0, %s164
      %s182 = sphi 0, %s182
      %s184 = sphi 0, %s182
      %s185 = sphi 0, %s184
      %s199 = sphi 0, %s185
      %s203 = sphi 0, %s203
      %s205 = sphi 0, %s203
      %s206 = sphi 0, %s205
      %s220 = sphi 0, %s206
      %s224 = sphi 0, %s224
      %s226 = sphi 0, %s224
      %s227 = sphi 0, %s226
      %s241 = sphi 0, %s227
      %s245 = sphi 0, %s245
      %s247 = sphi 0, %s245
      %s248 = sphi 0, %s247
      %s262 = sphi 0, %s248
      %s266 = sphi 0, %s266
      %s268 = sphi 0, %s266
      %s269 = sphi 0, %s268
      %s283 = sphi 0, %s269
      %s287 = sphi 0, %s287
      %s289 = sphi 0, %s287
      %s290 = sphi 0, %s289
      %s304 = sphi 0, %s290
      %s310 = sphi 0, %s312
      %s313 = sphi 0, %s310
      %s314 = sphi 0, %s313
      %s330 = sphi 0, %s314
    $region4: #{forward.1} parent=1 // loop_header_branch
      %25 = sbr.rel (%p23) target = $region8
    $region5: #{forward.1} parent=1 // loop_body
      %s27 = ssub.s32 %s22, 1
      %s28 = ssub.s32 %s22, 2
      %s29 = sadd.s32 %s22, 1
      %s30 = ssub.s32 %s22, %s29
      %p31 = scmp.eq.s32.totalorder %s30, 0
      %s33 = sadd.s32 %s32, 1
      %s34 = scalar_select %p31, %s32, %s33
      %p37 = pneg %p31
      %p38 = scmp.eq.s32.totalorder %s22, 1
      %p39 = por %p37, %p38
      %p40 = scmp.ne.s32.totalorder %s32, %s35
      %p41 = scmp.eq.s32.totalorder %s22, 0
      %p42 = por %p40, %p41
      %p43 = scmp.ne.s32.totalorder %s32, %s35
      %p44 = scmp.eq.s32.totalorder %s27, 1
      %p45 = por %p43, %p44
      %p46 = scmp.ne.s32.totalorder %s35, %s36
      %p47 = scmp.eq.s32.totalorder %s27, 0
      %p48 = por %p46, %p47
      %p49 = scmp.ne.s32.totalorder %s35, %s36
      %p50 = scmp.eq.s32.totalorder %s28, 1
      %p51 = por %p49, %p50
      %p53 = scmp.ne.s32.totalorder %s36, %s52
      %p54 = scmp.eq.s32.totalorder %s28, 0
      %p55 = por %p53, %p54
      %s57 = sadd.s32 %s56, 1
      %p60 = scmp.eq.s32.totalorder %s22, 1
      %p61 = scmp.ne.s32.totalorder %s56, %s58
      %p62 = scmp.eq.s32.totalorder %s22, 0
      %p63 = por %p61, %p62
      %p64 = scmp.ne.s32.totalorder %s56, %s58
      %p65 = scmp.eq.s32.totalorder %s27, 1
      %p66 = por %p64, %p65
      %p67 = scmp.ne.s32.totalorder %s58, %s59
      %p68 = scmp.eq.s32.totalorder %s27, 0
      %p69 = por %p67, %p68
      %p70 = scmp.ne.s32.totalorder %s58, %s59
      %p71 = scmp.eq.s32.totalorder %s28, 1
      %p72 = por %p70, %p71
      %p74 = scmp.ne.s32.totalorder %s59, %s73
      %p75 = scmp.eq.s32.totalorder %s28, 0
      %p76 = por %p74, %p75
      %s78 = sadd.s32 %s77, 1
      %p81 = scmp.eq.s32.totalorder %s22, 1
      %p82 = scmp.ne.s32.totalorder %s77, %s79
      %p83 = scmp.eq.s32.totalorder %s22, 0
      %p84 = por %p82, %p83
      %p85 = scmp.ne.s32.totalorder %s77, %s79
      %p86 = scmp.eq.s32.totalorder %s27, 1
      %p87 = por %p85, %p86
      %p88 = scmp.ne.s32.totalorder %s79, %s80
      %p89 = scmp.eq.s32.totalorder %s27, 0
      %p90 = por %p88, %p89
      %p91 = scmp.ne.s32.totalorder %s79, %s80
      %p92 = scmp.eq.s32.totalorder %s28, 1
      %p93 = por %p91, %p92
      %p95 = scmp.ne.s32.totalorder %s80, %s94
      %p96 = scmp.eq.s32.totalorder %s28, 0
      %p97 = por %p95, %p96
      %s99 = sadd.s32 %s98, 1
      %p102 = scmp.eq.s32.totalorder %s22, 1
      %p103 = scmp.ne.s32.totalorder %s98, %s100
      %p104 = scmp.eq.s32.totalorder %s22, 0
      %p105 = por %p103, %p104
      %p106 = scmp.ne.s32.totalorder %s98, %s100
      %p107 = scmp.eq.s32.totalorder %s27, 1
      %p108 = por %p106, %p107
      %p109 = scmp.ne.s32.totalorder %s100, %s101
      %p110 = scmp.eq.s32.totalorder %s27, 0
      %p111 = por %p109, %p110
      %p112 = scmp.ne.s32.totalorder %s100, %s101
      %p113 = scmp.eq.s32.totalorder %s28, 1
      %p114 = por %p112, %p113
      %p116 = scmp.ne.s32.totalorder %s101, %s115
      %p117 = scmp.eq.s32.totalorder %s28, 0
      %p118 = por %p116, %p117
      %s120 = sadd.s32 %s119, 1
      %p123 = scmp.eq.s32.totalorder %s22, 1
      %p124 = scmp.ne.s32.totalorder %s119, %s121
      %p125 = scmp.eq.s32.totalorder %s22, 0
      %p126 = por %p124, %p125
      %p127 = scmp.ne.s32.totalorder %s119, %s121
      %p128 = scmp.eq.s32.totalorder %s27, 1
      %p129 = por %p127, %p128
      %p130 = scmp.ne.s32.totalorder %s121, %s122
      %p131 = scmp.eq.s32.totalorder %s27, 0
      %p132 = por %p130, %p131
      %p133 = scmp.ne.s32.totalorder %s121, %s122
      %p134 = scmp.eq.s32.totalorder %s28, 1
      %p135 = por %p133, %p134
      %p137 = scmp.ne.s32.totalorder %s122, %s136
      %p138 = scmp.eq.s32.totalorder %s28, 0
      %p139 = por %p137, %p138
      %s141 = sadd.s32 %s140, 1
      %p144 = scmp.eq.s32.totalorder %s22, 1
      %p145 = scmp.ne.s32.totalorder %s140, %s142
      %p146 = scmp.eq.s32.totalorder %s22, 0
      %p147 = por %p145, %p146
      %p148 = scmp.ne.s32.totalorder %s140, %s142
      %p149 = scmp.eq.s32.totalorder %s27, 1
      %p150 = por %p148, %p149
      %p151 = scmp.ne.s32.totalorder %s142, %s143
      %p152 = scmp.eq.s32.totalorder %s27, 0
      %p153 = por %p151, %p152
      %p154 = scmp.ne.s32.totalorder %s142, %s143
      %p155 = scmp.eq.s32.totalorder %s28, 1
      %p156 = por %p154, %p155
      %p158 = scmp.ne.s32.totalorder %s143, %s157
      %p159 = scmp.eq.s32.totalorder %s28, 0
      %p160 = por %p158, %p159
      %s162 = sadd.s32 %s161, 1
      %p165 = scmp.eq.s32.totalorder %s22, 1
      %p166 = scmp.ne.s32.totalorder %s161, %s163
      %p167 = scmp.eq.s32.totalorder %s22, 0
      %p168 = por %p166, %p167
      %p169 = scmp.ne.s32.totalorder %s161, %s163
      %p170 = scmp.eq.s32.totalorder %s27, 1
      %p171 = por %p169, %p170
      %p172 = scmp.ne.s32.totalorder %s163, %s164
      %p173 = scmp.eq.s32.totalorder %s27, 0
      %p174 = por %p172, %p173
      %p175 = scmp.ne.s32.totalorder %s163, %s164
      %p176 = scmp.eq.s32.totalorder %s28, 1
      %p177 = por %p175, %p176
      %p179 = scmp.ne.s32.totalorder %s164, %s178
      %p180 = scmp.eq.s32.totalorder %s28, 0
      %p181 = por %p179, %p180
      %s183 = sadd.s32 %s182, 1
      %p186 = scmp.eq.s32.totalorder %s22, 1
      %p187 = scmp.ne.s32.totalorder %s182, %s184
      %p188 = scmp.eq.s32.totalorder %s22, 0
      %p189 = por %p187, %p188
      %p190 = scmp.ne.s32.totalorder %s182, %s184
      %p191 = scmp.eq.s32.totalorder %s27, 1
      %p192 = por %p190, %p191
      %p193 = scmp.ne.s32.totalorder %s184, %s185
      %p194 = scmp.eq.s32.totalorder %s27, 0
      %p195 = por %p193, %p194
      %p196 = scmp.ne.s32.totalorder %s184, %s185
      %p197 = scmp.eq.s32.totalorder %s28, 1
      %p198 = por %p196, %p197
      %p200 = scmp.ne.s32.totalorder %s185, %s199
      %p201 = scmp.eq.s32.totalorder %s28, 0
      %p202 = por %p200, %p201
      %s204 = sadd.s32 %s203, 1
      %p207 = scmp.eq.s32.totalorder %s22, 1
      %p208 = scmp.ne.s32.totalorder %s203, %s205
      %p209 = scmp.eq.s32.totalorder %s22, 0
      %p210 = por %p208, %p209
      %p211 = scmp.ne.s32.totalorder %s203, %s205
      %p212 = scmp.eq.s32.totalorder %s27, 1
      %p213 = por %p211, %p212
      %p214 = scmp.ne.s32.totalorder %s205, %s206
      %p215 = scmp.eq.s32.totalorder %s27, 0
      %p216 = por %p214, %p215
      %p217 = scmp.ne.s32.totalorder %s205, %s206
      %p218 = scmp.eq.s32.totalorder %s28, 1
      %p219 = por %p217, %p218
      %p221 = scmp.ne.s32.totalorder %s206, %s220
      %p222 = scmp.eq.s32.totalorder %s28, 0
      %p223 = por %p221, %p222
      %s225 = sadd.s32 %s224, 1
      %p228 = scmp.eq.s32.totalorder %s22, 1
      %p229 = scmp.ne.s32.totalorder %s224, %s226
      %p230 = scmp.eq.s32.totalorder %s22, 0
      %p231 = por %p229, %p230
      %p232 = scmp.ne.s32.totalorder %s224, %s226
      %p233 = scmp.eq.s32.totalorder %s27, 1
      %p234 = por %p232, %p233
      %p235 = scmp.ne.s32.totalorder %s226, %s227
      %p236 = scmp.eq.s32.totalorder %s27, 0
      %p237 = por %p235, %p236
      %p238 = scmp.ne.s32.totalorder %s226, %s227
      %p239 = scmp.eq.s32.totalorder %s28, 1
      %p240 = por %p238, %p239
      %p242 = scmp.ne.s32.totalorder %s227, %s241
      %p243 = scmp.eq.s32.totalorder %s28, 0
      %p244 = por %p242, %p243
      %s246 = sadd.s32 %s245, 1
      %p249 = scmp.eq.s32.totalorder %s22, 1
      %p250 = scmp.ne.s32.totalorder %s245, %s247
      %p251 = scmp.eq.s32.totalorder %s22, 0
      %p252 = por %p250, %p251
      %p253 = scmp.ne.s32.totalorder %s245, %s247
      %p254 = scmp.eq.s32.totalorder %s27, 1
      %p255 = por %p253, %p254
      %p256 = scmp.ne.s32.totalorder %s247, %s248
      %p257 = scmp.eq.s32.totalorder %s27, 0
      %p258 = por %p256, %p257
      %p259 = scmp.ne.s32.totalorder %s247, %s248
      %p260 = scmp.eq.s32.totalorder %s28, 1
      %p261 = por %p259, %p260
      %p263 = scmp.ne.s32.totalorder %s248, %s262
      %p264 = scmp.eq.s32.totalorder %s28, 0
      %p265 = por %p263, %p264
      %s267 = sadd.s32 %s266, 1
      %p270 = scmp.eq.s32.totalorder %s22, 1
      %p271 = scmp.ne.s32.totalorder %s266, %s268
      %p272 = scmp.eq.s32.totalorder %s22, 0
      %p273 = por %p271, %p272
      %p274 = scmp.ne.s32.totalorder %s266, %s268
      %p275 = scmp.eq.s32.totalorder %s27, 1
      %p276 = por %p274, %p275
      %p277 = scmp.ne.s32.totalorder %s268, %s269
      %p278 = scmp.eq.s32.totalorder %s27, 0
      %p279 = por %p277, %p278
      %p280 = scmp.ne.s32.totalorder %s268, %s269
      %p281 = scmp.eq.s32.totalorder %s28, 1
      %p282 = por %p280, %p281
      %p284 = scmp.ne.s32.totalorder %s269, %s283
      %p285 = scmp.eq.s32.totalorder %s28, 0
      %p286 = por %p284, %p285
      %s288 = sadd.s32 %s287, 1
      %p291 = scmp.eq.s32.totalorder %s22, 1
      %p292 = scmp.ne.s32.totalorder %s287, %s289
      %p293 = scmp.eq.s32.totalorder %s22, 0
      %p294 = por %p292, %p293
      %p295 = scmp.ne.s32.totalorder %s287, %s289
      %p296 = scmp.eq.s32.totalorder %s27, 1
      %p297 = por %p295, %p296
      %p298 = scmp.ne.s32.totalorder %s289, %s290
      %p299 = scmp.eq.s32.totalorder %s27, 0
      %p300 = por %p298, %p299
      %p301 = scmp.ne.s32.totalorder %s289, %s290
      %p302 = scmp.eq.s32.totalorder %s28, 1
      %p303 = por %p301, %p302
      %p305 = scmp.ne.s32.totalorder %s290, %s304
      %p306 = scmp.eq.s32.totalorder %s28, 0
      %p307 = por %p305, %p306
      %s308 = ssub.s32 %s22, %s29
      %p309 = scmp.eq.s32.totalorder %s308, 0
      %s311 = sadd.s32 %s310, 1
      %s312 = scalar_select %p309, %s310, %s311
      %p315 = pneg %p309
      %p316 = scmp.eq.s32.totalorder %s22, 1
      %p317 = por %p315, %p316
      %p318 = scmp.ne.s32.totalorder %s310, %s313
      %p319 = scmp.eq.s32.totalorder %s22, 0
      %p320 = por %p318, %p319
      %p321 = scmp.ne.s32.totalorder %s310, %s313
      %p322 = scmp.eq.s32.totalorder %s27, 1
      %p323 = por %p321, %p322
      %p324 = scmp.ne.s32.totalorder %s313, %s314
      %p325 = scmp.eq.s32.totalorder %s27, 0
      %p326 = por %p324, %p325
      %p327 = scmp.ne.s32.totalorder %s313, %s314
      %p328 = scmp.eq.s32.totalorder %s28, 1
      %p329 = por %p327, %p328
      %p331 = scmp.ne.s32.totalorder %s314, %s330
      %p332 = scmp.eq.s32.totalorder %s28, 0
      %p333 = por %p331, %p332
      %p334 = scmp.le.s32.totalorder 1, %s22
      %p335 = scmp.lt.s32.totalorder %s22, 3
      %p336 = pnand %p334, %p335
      %p337 = pneg %p336
      // Predicated region
      $region9: #{forward.1} parent=5 // pred_check
        _
      $region10: #{forward.1} parent=5 // pred_check_branch
        %339 = sbr.rel (%p336) target = $region12
      $region11: #{forward.1} parent=5 // pred_region
        %s340 = ssub.s32 %s22, 1
        // Predicated region
        $region13: #{forward.1} parent=11 // pred_check
          %p341 = pneg %p69
        $region14: #{forward.1} parent=11 // pred_check_branch
          %343 = sbr.rel (%p341) target = $region16
        $region15: #{forward.1} parent=11 // pred_region
          _
        $region16: #{forward.1} parent=11 // pred_fallthru
          _
        // Predicated region
        $region17: #{forward.1} parent=11 // pred_check
          %p344 = pneg %p90
        $region18: #{forward.1} parent=11 // pred_check_branch
          %346 = sbr.rel (%p344) target = $region20
        $region19: #{forward.1} parent=11 // pred_region
          _
        $region20: #{forward.1} parent=11 // pred_fallthru
          _
        // Predicated region
        $region21: #{forward.1} parent=11 // pred_check
          %p347 = pneg %p111
        $region22: #{forward.1} parent=11 // pred_check_branch
          %349 = sbr.rel (%p347) target = $region24
        $region23: #{forward.1} parent=11 // pred_region
          _
        $region24: #{forward.1} parent=11 // pred_fallthru
          _
        // Predicated region
        $region25: #{forward.1} parent=11 // pred_check
          %p350 = pneg %p132
        $region26: #{forward.1} parent=11 // pred_check_branch
          %352 = sbr.rel (%p350) target = $region28
        $region27: #{forward.1} parent=11 // pred_region
          _
        $region28: #{forward.1} parent=11 // pred_fallthru
          _
        // Predicated region
        $region29: #{forward.1} parent=11 // pred_check
          %p353 = pneg %p153
        $region30: #{forward.1} parent=11 // pred_check_branch
          %355 = sbr.rel (%p353) target = $region32
        $region31: #{forward.1} parent=11 // pred_region
          _
        $region32: #{forward.1} parent=11 // pred_fallthru
          _
        // Predicated region
        $region33: #{forward.1} parent=11 // pred_check
          %p356 = pneg %p174
        $region34: #{forward.1} parent=11 // pred_check_branch
          %358 = sbr.rel (%p356) target = $region36
        $region35: #{forward.1} parent=11 // pred_region
          _
        $region36: #{forward.1} parent=11 // pred_fallthru
          _
        // Predicated region
        $region37: #{forward.1} parent=11 // pred_check
          %p359 = pneg %p195
        $region38: #{forward.1} parent=11 // pred_check_branch
          %361 = sbr.rel (%p359) target = $region40
        $region39: #{forward.1} parent=11 // pred_region
          _
        $region40: #{forward.1} parent=11 // pred_fallthru
          _
        // Predicated region
        $region41: #{forward.1} parent=11 // pred_check
          %p362 = pneg %p216
        $region42: #{forward.1} parent=11 // pred_check_branch
          %364 = sbr.rel (%p362) target = $region44
        $region43: #{forward.1} parent=11 // pred_region
          _
        $region44: #{forward.1} parent=11 // pred_fallthru
          _
        // Predicated region
        $region45: #{forward.1} parent=11 // pred_check
          %p365 = pneg %p237
        $region46: #{forward.1} parent=11 // pred_check_branch
          %367 = sbr.rel (%p365) target = $region48
        $region47: #{forward.1} parent=11 // pred_region
          _
        $region48: #{forward.1} parent=11 // pred_fallthru
          _
        // Predicated region
        $region49: #{forward.1} parent=11 // pred_check
          %p368 = pneg %p258
        $region50: #{forward.1} parent=11 // pred_check_branch
          %370 = sbr.rel (%p368) target = $region52
        $region51: #{forward.1} parent=11 // pred_region
          _
        $region52: #{forward.1} parent=11 // pred_fallthru
          _
        // Predicated region
        $region53: #{forward.1} parent=11 // pred_check
          %p371 = pneg %p279
        $region54: #{forward.1} parent=11 // pred_check_branch
          %373 = sbr.rel (%p371) target = $region56
        $region55: #{forward.1} parent=11 // pred_region
          _
        $region56: #{forward.1} parent=11 // pred_fallthru
          _
        // Predicated region
        $region57: #{forward.1} parent=11 // pred_check
          %p374 = pneg %p300
        $region58: #{forward.1} parent=11 // pred_check_branch
          %376 = sbr.rel (%p374) target = $region60
        $region59: #{forward.1} parent=11 // pred_region
          _
        $region60: #{forward.1} parent=11 // pred_fallthru
          _
      $region12: #{forward.1} parent=5 // pred_fallthru
        _
      %p377 = scmp.lt.s32.totalorder %s22, 2
      // Predicated region
      $region61: #{forward.1} parent=5 // pred_check
        %p378 = pneg %p377
      $region62: #{forward.1} parent=5 // pred_check_branch
        %380 = sbr.rel (%p378) target = $region64
      $region63: #{forward.1} parent=5 // pred_region
        // Predicated region
        $region65: #{forward.1} parent=63 // pred_check
          %p381 = pneg %p42
        $region66: #{forward.1} parent=63 // pred_check_branch
          %383 = sbr.rel (%p381) target = $region68
        $region67: #{forward.1} parent=63 // pred_region
          %p384 = scmp.lt.s32.totalorder %s22, 1
          %s385 = scalar_select %p384, %s22, 1
          %s386 = smul.addr %s385, 46
          %s387 = smul.addr %s386, 8
          %s388 = scalar_lea.vmem %s0, %s387
        $region68: #{forward.1} parent=63 // pred_fallthru
          _
      $region64: #{forward.1} parent=5 // pred_fallthru
        _
      %p389 = scmp.le.s32.totalorder 1, %s22
      %p390 = scmp.lt.s32.totalorder %s22, 3
      %p391 = pnand %p389, %p390
      %p392 = pneg %p391
      // Predicated region
      $region69: #{forward.1} parent=5 // pred_check
        _
      $region70: #{forward.1} parent=5 // pred_check_branch
        %394 = sbr.rel (%p391) target = $region72
      $region71: #{forward.1} parent=5 // pred_region
        %s395 = ssub.s32 %s22, 1
        %p396 = scmp.lt.s32.totalorder %s27, 1
        %s397 = scalar_select %p396, %s27, 1
        %s398 = smul.addr %s397, 46
        %s399 = smul.addr %s398, 8
        %s400 = scalar_lea.vmem %s0, %s399
        %p401 = pneg %p48
        %p402 = pneg %p45
        %p403 = pneg %p69
        %p404 = pneg %p66
        %p405 = pneg %p90
        %p406 = pneg %p87
        %p407 = pneg %p111
        %p408 = pneg %p108
        %p409 = pneg %p132
        %p410 = pneg %p129
        %p411 = pneg %p153
        %p412 = pneg %p150
        %p413 = pneg %p174
        %p414 = pneg %p171
        %p415 = pneg %p195
        %p416 = pneg %p192
        %p417 = pneg %p216
        %p418 = pneg %p213
        %p419 = pneg %p237
        %p420 = pneg %p234
        %p421 = pneg %p258
        %p422 = pneg %p255
        %p423 = pneg %p279
        %p424 = pneg %p276
        %p425 = pneg %p300
        %p426 = pneg %p297
        %p427 = pneg %p326
        %p428 = pneg %p323
        %s429 = sand.u32 %s313, 1
        %s430 = scalar_lea.sflag [#allocation11], %s429
        %s431 = sand.u32 %s313, 1
        %s432 = scalar_lea.vmem [#allocation10], %s431
        %p433 = scmp.lt.s32.totalorder %s27, 1
        %s434 = scalar_select %p433, %s27, 1
        %s435 = smul.addr %s434, 46
        %s436 = smul.addr %s435, 8
        %s437 = scalar_lea.vmem %s0, %s436
        %vm438 = vcmask 31744
        %439 = vst.msk [vmem:[#allocation2] sm:$0xff] %vm438, 0.0
        %440 = vst.msk [vmem:[#allocation2 + $0x8] sm:$0xff] %vm438, 0.0
        %441 = vst.msk [vmem:[#allocation2 + $0x10] sm:$0xff] %vm438, 0.0
        %442 = vst.msk [vmem:[#allocation2 + $0x18] sm:$0xff] %vm438, 0.0
        %443 = vst.msk [vmem:[#allocation2 + $0x20] sm:$0xff] %vm438, 0.0
        %444 = vst.msk [vmem:[#allocation2 + $0x28] sm:$0xff] %vm438, 0.0
        %445 = vst.msk [vmem:[#allocation2 + $0x30] sm:$0xff] %vm438, 0.0
        %446 = vst.msk [vmem:[#allocation2 + $0x38] sm:$0xff] %vm438, 0.0
        %447 = vst.msk [vmem:[#allocation2 + $0x40] sm:$0xff] %vm438, 0.0
        %448 = vst.msk [vmem:[#allocation2 + $0x48] sm:$0xff] %vm438, 0.0
        %449 = vst.msk [vmem:[#allocation2 + $0x50] sm:$0xff] %vm438, 0.0
        %450 = vst.msk [vmem:[#allocation2 + $0x58] sm:$0xff] %vm438, 0.0
        %451 = vst.msk [vmem:[#allocation2 + $0x60] sm:$0xff] %vm438, 0.0
        %452 = vst.msk [vmem:[#allocation2 + $0x68] sm:$0xff] %vm438, 0.0
        %453 = vst.msk [vmem:[#allocation2 + $0x70] sm:$0xff] %vm438, 0.0
        %vm454 = vcmask 25600
        %455 = vst.msk [vmem:[#allocation2 + $0x78] sm:$0x3] %vm454, 0.0
        %vm456 = vcmask 64512
        %457 = vst.msk [vmem:[#allocation3] sm:$0xff] %vm456, 0.0
        %458 = vst.msk [vmem:[#allocation3 + $0x8] sm:$0xff] %vm456, 0.0
        %459 = vst.msk [vmem:[#allocation3 + $0x10] sm:$0xff] %vm456, 0.0
        %460 = vst.msk [vmem:[#allocation3 + $0x18] sm:$0xff] %vm456, 0.0
        %461 = vst.msk [vmem:[#allocation3 + $0x20] sm:$0xff] %vm456, 0.0
        %462 = vst.msk [vmem:[#allocation3 + $0x28] sm:$0xff] %vm456, 0.0
        %vm463 = vcmask 58368
        %464 = vst.msk [vmem:[#allocation3 + $0x30] sm:$0x3] %vm463, 0.0
        %vm465 = vcmask 130048
        %466 = vst.msk [vmem:[#allocation4] sm:$0xff] %vm465, 0.0
        %467 = vst.msk [vmem:[#allocation4 + $0x8] sm:$0xff] %vm465, 0.0
        %468 = vst.msk [vmem:[#allocation4 + $0x10] sm:$0xff] %vm465, 0.0
        %vm469 = vcmask 123904
        %470 = vst.msk [vmem:[#allocation4 + $0x18] sm:$0x3] %vm469, 0.0
        %v471 = vld [vmem:[%s437] sm:$0xff]
        %v472 = vld [vmem:[%s437 + $0x8] sm:$0xff]
        %v473 = vld [vmem:[%s437 + $0x10] sm:$0xff]
        %v474 = vld [vmem:[%s437 + $0x18] sm:$0xff]
        %v475 = vld [vmem:[%s437 + $0x20] sm:$0xff]
        %v476 = vld [vmem:[%s437 + $0x28] sm:$0xff]
        %v477 = vld [vmem:[%s437 + $0x30] sm:$0xff]
        %v478 = vld [vmem:[%s437 + $0x38] sm:$0xff]
        %v479 = vld [vmem:[%s437 + $0x40] sm:$0xff]
        %v480 = vld [vmem:[%s437 + $0x48] sm:$0xff]
        %v481 = vld [vmem:[%s437 + $0x50] sm:$0xff]
        %v482 = vld [vmem:[%s437 + $0x58] sm:$0xff]
        %v483 = vld [vmem:[%s437 + $0x60] sm:$0xff]
        %v484 = vld [vmem:[%s437 + $0x68] sm:$0xff]
        %v485 = vld [vmem:[%s437 + $0x70] sm:$0xff]
        %v486 = vld [vmem:[%s437 + $0x78] sm:$0xff]
        %v487 = vld [vmem:[%s437 + $0x80] sm:$0xff]
        %v488 = vld [vmem:[%s437 + $0x88] sm:$0xff]
        %v489 = vld [vmem:[%s437 + $0x90] sm:$0xff]
        %v490 = vld [vmem:[%s437 + $0x98] sm:$0xff]
        %v491 = vld [vmem:[%s437 + $0xa0] sm:$0xff]
        %v492 = vld [vmem:[%s437 + $0xa8] sm:$0xff]
        %v493 = vld [vmem:[%s437 + $0xb0] sm:$0xff]
        %v494 = vld [vmem:[%s437 + $0xb8] sm:$0xff]
        %v495 = vld [vmem:[%s437 + $0xc0] sm:$0xff]
        %v496 = vld [vmem:[%s437 + $0xc8] sm:$0xff]
        %v497 = vld [vmem:[%s437 + $0xd0] sm:$0xff]
        %v498 = vld [vmem:[%s437 + $0xd8] sm:$0xff]
        %v499 = vld [vmem:[%s437 + $0xe0] sm:$0xff]
        %v500 = vld [vmem:[%s437 + $0xe8] sm:$0xff]
        %v501 = vld [vmem:[%s437 + $0xf0] sm:$0xff]
        %v502 = vld [vmem:[%s437 + $0xf8] sm:$0xff]
        %v503 = vld [vmem:[%s437 + $0x100] sm:$0xff]
        %v504 = vld [vmem:[%s437 + $0x108] sm:$0xff]
        %v505 = vld [vmem:[%s437 + $0x110] sm:$0xff]
        %v506 = vld [vmem:[%s437 + $0x118] sm:$0xff]
        %v507 = vld [vmem:[%s437 + $0x120] sm:$0xff]
        %v508 = vld [vmem:[%s437 + $0x128] sm:$0xff]
        %v509 = vld [vmem:[%s437 + $0x130] sm:$0xff]
        %v510 = vld [vmem:[%s437 + $0x138] sm:$0xff]
        %v511 = vld [vmem:[%s437 + $0x140] sm:$0xf]
        %v512 = vld [vmem:[%s1] sm:$0x1]
        %514 = vset.pattern.permute.xlu0 0
        %515 = vperm.xlu0 %514, %v471
        %v516 = vpop.permute.xlu0 %515
        %519 = vset.pattern.permute.xlu0 0
        %520 = vperm.xlu0 %519, %v472
        %v521 = vpop.permute.xlu0 %520
        %524 = vset.pattern.permute.xlu0 0
        %525 = vperm.xlu0 %524, %v473
        %v526 = vpop.permute.xlu0 %525
        %529 = vset.pattern.permute.xlu0 0
        %530 = vperm.xlu0 %529, %v474
        %v531 = vpop.permute.xlu0 %530
        %534 = vset.pattern.permute.xlu0 0
        %535 = vperm.xlu0 %534, %v475
        %v536 = vpop.permute.xlu0 %535
        %539 = vset.pattern.permute.xlu0 0
        %540 = vperm.xlu0 %539, %v476
        %v541 = vpop.permute.xlu0 %540
        %544 = vset.pattern.permute.xlu0 0
        %545 = vperm.xlu0 %544, %v477
        %v546 = vpop.permute.xlu0 %545
        %549 = vset.pattern.permute.xlu0 0
        %550 = vperm.xlu0 %549, %v478
        %v551 = vpop.permute.xlu0 %550
        %554 = vset.pattern.permute.xlu0 0
        %555 = vperm.xlu0 %554, %v479
        %v556 = vpop.permute.xlu0 %555
        %559 = vset.pattern.permute.xlu0 0
        %560 = vperm.xlu0 %559, %v480
        %v561 = vpop.permute.xlu0 %560
        %564 = vset.pattern.permute.xlu0 0
        %565 = vperm.xlu0 %564, %v481
        %v566 = vpop.permute.xlu0 %565
        %569 = vset.pattern.permute.xlu0 0
        %570 = vperm.xlu0 %569, %v482
        %v571 = vpop.permute.xlu0 %570
        %574 = vset.pattern.permute.xlu0 0
        %575 = vperm.xlu0 %574, %v483
        %v576 = vpop.permute.xlu0 %575
        %579 = vset.pattern.permute.xlu0 0
        %580 = vperm.xlu0 %579, %v484
        %v581 = vpop.permute.xlu0 %580
        %584 = vset.pattern.permute.xlu0 0
        %585 = vperm.xlu0 %584, %v485
        %v586 = vpop.permute.xlu0 %585
        %589 = vset.pattern.permute.xlu0 0
        %590 = vperm.xlu0 %589, %v486
        %v591 = vpop.permute.xlu0 %590
        %594 = vset.pattern.permute.xlu0 0
        %595 = vperm.xlu0 %594, %v487
        %v596 = vpop.permute.xlu0 %595
        %599 = vset.pattern.permute.xlu0 0
        %600 = vperm.xlu0 %599, %v488
        %v601 = vpop.permute.xlu0 %600
        %604 = vset.pattern.permute.xlu0 0
        %605 = vperm.xlu0 %604, %v489
        %v606 = vpop.permute.xlu0 %605
        %609 = vset.pattern.permute.xlu0 0
        %610 = vperm.xlu0 %609, %v490
        %v611 = vpop.permute.xlu0 %610
        %614 = vset.pattern.permute.xlu0 0
        %615 = vperm.xlu0 %614, %v491
        %v616 = vpop.permute.xlu0 %615
        %619 = vset.pattern.permute.xlu0 0
        %620 = vperm.xlu0 %619, %v492
        %v621 = vpop.permute.xlu0 %620
        %624 = vset.pattern.permute.xlu0 0
        %625 = vperm.xlu0 %624, %v493
        %v626 = vpop.permute.xlu0 %625
        %629 = vset.pattern.permute.xlu0 0
        %630 = vperm.xlu0 %629, %v494
        %v631 = vpop.permute.xlu0 %630
        %634 = vset.pattern.permute.xlu0 0
        %635 = vperm.xlu0 %634, %v495
        %v636 = vpop.permute.xlu0 %635
        %639 = vset.pattern.permute.xlu0 0
        %640 = vperm.xlu0 %639, %v496
        %v641 = vpop.permute.xlu0 %640
        %644 = vset.pattern.permute.xlu0 0
        %645 = vperm.xlu0 %644, %v497
        %v646 = vpop.permute.xlu0 %645
        %649 = vset.pattern.permute.xlu0 0
        %650 = vperm.xlu0 %649, %v498
        %v651 = vpop.permute.xlu0 %650
        %654 = vset.pattern.permute.xlu0 0
        %655 = vperm.xlu0 %654, %v499
        %v656 = vpop.permute.xlu0 %655
        %659 = vset.pattern.permute.xlu0 0
        %660 = vperm.xlu0 %659, %v500
        %v661 = vpop.permute.xlu0 %660
        %664 = vset.pattern.permute.xlu0 0
        %665 = vperm.xlu0 %664, %v501
        %v666 = vpop.permute.xlu0 %665
        %669 = vset.pattern.permute.xlu0 0
        %670 = vperm.xlu0 %669, %v502
        %v671 = vpop.permute.xlu0 %670
        %674 = vset.pattern.permute.xlu0 0
        %675 = vperm.xlu0 %674, %v503
        %v676 = vpop.permute.xlu0 %675
        %679 = vset.pattern.permute.xlu0 0
        %680 = vperm.xlu0 %679, %v504
        %v681 = vpop.permute.xlu0 %680
        %684 = vset.pattern.permute.xlu0 0
        %685 = vperm.xlu0 %684, %v505
        %v686 = vpop.permute.xlu0 %685
        %689 = vset.pattern.permute.xlu0 0
        %690 = vperm.xlu0 %689, %v506
        %v691 = vpop.permute.xlu0 %690
        %694 = vset.pattern.permute.xlu0 0
        %695 = vperm.xlu0 %694, %v507
        %v696 = vpop.permute.xlu0 %695
        %699 = vset.pattern.permute.xlu0 0
        %700 = vperm.xlu0 %699, %v508
        %v701 = vpop.permute.xlu0 %700
        %704 = vset.pattern.permute.xlu0 0
        %705 = vperm.xlu0 %704, %v509
        %v706 = vpop.permute.xlu0 %705
        %709 = vset.pattern.permute.xlu0 0
        %710 = vperm.xlu0 %709, %v510
        %v711 = vpop.permute.xlu0 %710
        %714 = vset.pattern.permute.xlu0 0
        %715 = vperm.xlu0 %714, %v511
        %v716 = vpop.permute.xlu0 %715
        %v719 = vperm.slane %v512, 0
        %v721 = vmul.f32 %v516, %v719
        %v722 = vmul.f32 %v521, %v719
        %v723 = vmul.f32 %v526, %v719
        %v724 = vmul.f32 %v531, %v719
        %v725 = vmul.f32 %v536, %v719
        %v726 = vmul.f32 %v541, %v719
        %v727 = vmul.f32 %v546, %v719
        %v728 = vmul.f32 %v551, %v719
        %v729 = vmul.f32 %v556, %v719
        %v730 = vmul.f32 %v561, %v719
        %v731 = vmul.f32 %v566, %v719
        %v732 = vmul.f32 %v571, %v719
        %v733 = vmul.f32 %v576, %v719
        %v734 = vmul.f32 %v581, %v719
        %v735 = vmul.f32 %v586, %v719
        %v736 = vmul.f32 %v591, %v719
        %v737 = vmul.f32 %v596, %v719
        %v738 = vmul.f32 %v601, %v719
        %v739 = vmul.f32 %v606, %v719
        %v740 = vmul.f32 %v611, %v719
        %v741 = vmul.f32 %v616, %v719
        %v742 = vmul.f32 %v621, %v719
        %v743 = vmul.f32 %v626, %v719
        %v744 = vmul.f32 %v631, %v719
        %v745 = vmul.f32 %v636, %v719
        %v746 = vmul.f32 %v641, %v719
        %v747 = vmul.f32 %v646, %v719
        %v748 = vmul.f32 %v651, %v719
        %v749 = vmul.f32 %v656, %v719
        %v750 = vmul.f32 %v661, %v719
        %v751 = vmul.f32 %v666, %v719
        %v752 = vmul.f32 %v671, %v719
        %v753 = vmul.f32 %v676, %v719
        %v754 = vmul.f32 %v681, %v719
        %v755 = vmul.f32 %v686, %v719
        %v756 = vmul.f32 %v691, %v719
        %v757 = vmul.f32 %v696, %v719
        %v758 = vmul.f32 %v701, %v719
        %v759 = vmul.f32 %v706, %v719
        %v760 = vmul.f32 %v711, %v719
        %v761 = vmul.f32 %v716, %v719
        %v762 = vld [vmem:[%s437 + $0x1] sm:$0xff]
        %v763 = vld [vmem:[%s437 + $0x9] sm:$0xff]
        %v764 = vld [vmem:[%s437 + $0x11] sm:$0xff]
        %v765 = vld [vmem:[%s437 + $0x19] sm:$0xff]
        %v766 = vld [vmem:[%s437 + $0x21] sm:$0xff]
        %v767 = vld [vmem:[%s437 + $0x29] sm:$0xff]
        %v768 = vld [vmem:[%s437 + $0x31] sm:$0xff]
        %v769 = vld [vmem:[%s437 + $0x39] sm:$0xff]
        %v770 = vld [vmem:[%s437 + $0x41] sm:$0xff]
        %v771 = vld [vmem:[%s437 + $0x49] sm:$0xff]
        %v772 = vld [vmem:[%s437 + $0x51] sm:$0xff]
        %v773 = vld [vmem:[%s437 + $0x59] sm:$0xff]
        %v774 = vld [vmem:[%s437 + $0x61] sm:$0xff]
        %v775 = vld [vmem:[%s437 + $0x69] sm:$0xff]
        %v776 = vld [vmem:[%s437 + $0x71] sm:$0xff]
        %v777 = vld [vmem:[%s437 + $0x79] sm:$0xff]
        %v778 = vld [vmem:[%s437 + $0x81] sm:$0xff]
        %v779 = vld [vmem:[%s437 + $0x89] sm:$0xff]
        %v780 = vld [vmem:[%s437 + $0x91] sm:$0xff]
        %v781 = vld [vmem:[%s437 + $0x99] sm:$0xff]
        %v782 = vld [vmem:[%s437 + $0xa1] sm:$0xff]
        %v783 = vld [vmem:[%s437 + $0xa9] sm:$0xff]
        %v784 = vld [vmem:[%s437 + $0xb1] sm:$0xff]
        %v785 = vld [vmem:[%s437 + $0xb9] sm:$0xff]
        %v786 = vld [vmem:[%s437 + $0xc1] sm:$0xff]
        %v787 = vld [vmem:[%s437 + $0xc9] sm:$0xff]
        %v788 = vld [vmem:[%s437 + $0xd1] sm:$0xff]
        %v789 = vld [vmem:[%s437 + $0xd9] sm:$0xff]
        %v790 = vld [vmem:[%s437 + $0xe1] sm:$0xff]
        %v791 = vld [vmem:[%s437 + $0xe9] sm:$0xff]
        %v792 = vld [vmem:[%s437 + $0xf1] sm:$0xff]
        %v793 = vld [vmem:[%s437 + $0xf9] sm:$0xff]
        %v794 = vld [vmem:[%s437 + $0x101] sm:$0xff]
        %v795 = vld [vmem:[%s437 + $0x109] sm:$0xff]
        %v796 = vld [vmem:[%s437 + $0x111] sm:$0xff]
        %v797 = vld [vmem:[%s437 + $0x119] sm:$0xff]
        %v798 = vld [vmem:[%s437 + $0x121] sm:$0xff]
        %v799 = vld [vmem:[%s437 + $0x129] sm:$0xff]
        %v800 = vld [vmem:[%s437 + $0x131] sm:$0xff]
        %v801 = vld [vmem:[%s437 + $0x139] sm:$0xff]
        %v802 = vld [vmem:[%s437 + $0x141] sm:$0xf]
        %s803 = scalar_lea.vmem %s1, 1
        %v804 = vld [vmem:[%s803] sm:$0x1]
        %806 = vset.pattern.permute.xlu0 0
        %807 = vperm.xlu0 %806, %v762
        %v808 = vpop.permute.xlu0 %807
        %811 = vset.pattern.permute.xlu0 0
        %812 = vperm.xlu0 %811, %v763
        %v813 = vpop.permute.xlu0 %812
        %816 = vset.pattern.permute.xlu0 0
        %817 = vperm.xlu0 %816, %v764
        %v818 = vpop.permute.xlu0 %817
        %821 = vset.pattern.permute.xlu0 0
        %822 = vperm.xlu0 %821, %v765
        %v823 = vpop.permute.xlu0 %822
        %826 = vset.pattern.permute.xlu0 0
        %827 = vperm.xlu0 %826, %v766
        %v828 = vpop.permute.xlu0 %827
        %831 = vset.pattern.permute.xlu0 0
        %832 = vperm.xlu0 %831, %v767
        %v833 = vpop.permute.xlu0 %832
        %836 = vset.pattern.permute.xlu0 0
        %837 = vperm.xlu0 %836, %v768
        %v838 = vpop.permute.xlu0 %837
        %841 = vset.pattern.permute.xlu0 0
        %842 = vperm.xlu0 %841, %v769
        %v843 = vpop.permute.xlu0 %842
        %846 = vset.pattern.permute.xlu0 0
        %847 = vperm.xlu0 %846, %v770
        %v848 = vpop.permute.xlu0 %847
        %851 = vset.pattern.permute.xlu0 0
        %852 = vperm.xlu0 %851, %v771
        %v853 = vpop.permute.xlu0 %852
        %856 = vset.pattern.permute.xlu0 0
        %857 = vperm.xlu0 %856, %v772
        %v858 = vpop.permute.xlu0 %857
        %861 = vset.pattern.permute.xlu0 0
        %862 = vperm.xlu0 %861, %v773
        %v863 = vpop.permute.xlu0 %862
        %866 = vset.pattern.permute.xlu0 0
        %867 = vperm.xlu0 %866, %v774
        %v868 = vpop.permute.xlu0 %867
        %871 = vset.pattern.permute.xlu0 0
        %872 = vperm.xlu0 %871, %v775
        %v873 = vpop.permute.xlu0 %872
        %876 = vset.pattern.permute.xlu0 0
        %877 = vperm.xlu0 %876, %v776
        %v878 = vpop.permute.xlu0 %877
        %881 = vset.pattern.permute.xlu0 0
        %882 = vperm.xlu0 %881, %v777
        %v883 = vpop.permute.xlu0 %882
        %886 = vset.pattern.permute.xlu0 0
        %887 = vperm.xlu0 %886, %v778
        %v888 = vpop.permute.xlu0 %887
        %891 = vset.pattern.permute.xlu0 0
        %892 = vperm.xlu0 %891, %v779
        %v893 = vpop.permute.xlu0 %892
        %896 = vset.pattern.permute.xlu0 0
        %897 = vperm.xlu0 %896, %v780
        %v898 = vpop.permute.xlu0 %897
        %901 = vset.pattern.permute.xlu0 0
        %902 = vperm.xlu0 %901, %v781
        %v903 = vpop.permute.xlu0 %902
        %906 = vset.pattern.permute.xlu0 0
        %907 = vperm.xlu0 %906, %v782
        %v908 = vpop.permute.xlu0 %907
        %911 = vset.pattern.permute.xlu0 0
        %912 = vperm.xlu0 %911, %v783
        %v913 = vpop.permute.xlu0 %912
        %916 = vset.pattern.permute.xlu0 0
        %917 = vperm.xlu0 %916, %v784
        %v918 = vpop.permute.xlu0 %917
        %921 = vset.pattern.permute.xlu0 0
        %922 = vperm.xlu0 %921, %v785
        %v923 = vpop.permute.xlu0 %922
        %926 = vset.pattern.permute.xlu0 0
        %927 = vperm.xlu0 %926, %v786
        %v928 = vpop.permute.xlu0 %927
        %931 = vset.pattern.permute.xlu0 0
        %932 = vperm.xlu0 %931, %v787
        %v933 = vpop.permute.xlu0 %932
        %936 = vset.pattern.permute.xlu0 0
        %937 = vperm.xlu0 %936, %v788
        %v938 = vpop.permute.xlu0 %937
        %941 = vset.pattern.permute.xlu0 0
        %942 = vperm.xlu0 %941, %v789
        %v943 = vpop.permute.xlu0 %942
        %946 = vset.pattern.permute.xlu0 0
        %947 = vperm.xlu0 %946, %v790
        %v948 = vpop.permute.xlu0 %947
        %951 = vset.pattern.permute.xlu0 0
        %952 = vperm.xlu0 %951, %v791
        %v953 = vpop.permute.xlu0 %952
        %956 = vset.pattern.permute.xlu0 0
        %957 = vperm.xlu0 %956, %v792
        %v958 = vpop.permute.xlu0 %957
        %961 = vset.pattern.permute.xlu0 0
        %962 = vperm.xlu0 %961, %v793
        %v963 = vpop.permute.xlu0 %962
        %966 = vset.pattern.permute.xlu0 0
        %967 = vperm.xlu0 %966, %v794
        %v968 = vpop.permute.xlu0 %967
        %971 = vset.pattern.permute.xlu0 0
        %972 = vperm.xlu0 %971, %v795
        %v973 = vpop.permute.xlu0 %972
        %976 = vset.pattern.permute.xlu0 0
        %977 = vperm.xlu0 %976, %v796
        %v978 = vpop.permute.xlu0 %977
        %981 = vset.pattern.permute.xlu0 0
        %982 = vperm.xlu0 %981, %v797
        %v983 = vpop.permute.xlu0 %982
        %986 = vset.pattern.permute.xlu0 0
        %987 = vperm.xlu0 %986, %v798
        %v988 = vpop.permute.xlu0 %987
        %991 = vset.pattern.permute.xlu0 0
        %992 = vperm.xlu0 %991, %v799
        %v993 = vpop.permute.xlu0 %992
        %996 = vset.pattern.permute.xlu0 0
        %997 = vperm.xlu0 %996, %v800
        %v998 = vpop.permute.xlu0 %997
        %1001 = vset.pattern.permute.xlu0 0
        %1002 = vperm.xlu0 %1001, %v801
        %v1003 = vpop.permute.xlu0 %1002
        %1006 = vset.pattern.permute.xlu0 0
        %1007 = vperm.xlu0 %1006, %v802
        %v1008 = vpop.permute.xlu0 %1007
        %v1011 = vperm.slane %v804, 0
        %v1013 = vmul.f32 %v808, %v1011
        %v1014 = vmul.f32 %v813, %v1011
        %v1015 = vmul.f32 %v818, %v1011
        %v1016 = vmul.f32 %v823, %v1011
        %v1017 = vmul.f32 %v828, %v1011
        %v1018 = vmul.f32 %v833, %v1011
        %v1019 = vmul.f32 %v838, %v1011
        %v1020 = vmul.f32 %v843, %v1011
        %v1021 = vmul.f32 %v848, %v1011
        %v1022 = vmul.f32 %v853, %v1011
        %v1023 = vmul.f32 %v858, %v1011
        %v1024 = vmul.f32 %v863, %v1011
        %v1025 = vmul.f32 %v868, %v1011
        %v1026 = vmul.f32 %v873, %v1011
        %v1027 = vmul.f32 %v878, %v1011
        %v1028 = vmul.f32 %v883, %v1011
        %v1029 = vmul.f32 %v888, %v1011
        %v1030 = vmul.f32 %v893, %v1011
        %v1031 = vmul.f32 %v898, %v1011
        %v1032 = vmul.f32 %v903, %v1011
        %v1033 = vmul.f32 %v908, %v1011
        %v1034 = vmul.f32 %v913, %v1011
        %v1035 = vmul.f32 %v918, %v1011
        %v1036 = vmul.f32 %v923, %v1011
        %v1037 = vmul.f32 %v928, %v1011
        %v1038 = vmul.f32 %v933, %v1011
        %v1039 = vmul.f32 %v938, %v1011
        %v1040 = vmul.f32 %v943, %v1011
        %v1041 = vmul.f32 %v948, %v1011
        %v1042 = vmul.f32 %v953, %v1011
        %v1043 = vmul.f32 %v958, %v1011
        %v1044 = vmul.f32 %v963, %v1011
        %v1045 = vmul.f32 %v968, %v1011
        %v1046 = vmul.f32 %v973, %v1011
        %v1047 = vmul.f32 %v978, %v1011
        %v1048 = vmul.f32 %v983, %v1011
        %v1049 = vmul.f32 %v988, %v1011
        %v1050 = vmul.f32 %v993, %v1011
        %v1051 = vmul.f32 %v998, %v1011
        %v1052 = vmul.f32 %v1003, %v1011
        %v1053 = vmul.f32 %v1008, %v1011
        %v1054 = vadd.f32 %v721, %v1013
        %v1055 = vadd.f32 %v722, %v1014
        %v1056 = vadd.f32 %v723, %v1015
        %v1057 = vadd.f32 %v724, %v1016
        %v1058 = vadd.f32 %v725, %v1017
        %v1059 = vadd.f32 %v726, %v1018
        %v1060 = vadd.f32 %v727, %v1019
        %v1061 = vadd.f32 %v728, %v1020
        %v1062 = vadd.f32 %v729, %v1021
        %v1063 = vadd.f32 %v730, %v1022
        %v1064 = vadd.f32 %v731, %v1023
        %v1065 = vadd.f32 %v732, %v1024
        %v1066 = vadd.f32 %v733, %v1025
        %v1067 = vadd.f32 %v734, %v1026
        %v1068 = vadd.f32 %v735, %v1027
        %v1069 = vadd.f32 %v736, %v1028
        %v1070 = vadd.f32 %v737, %v1029
        %v1071 = vadd.f32 %v738, %v1030
        %v1072 = vadd.f32 %v739, %v1031
        %v1073 = vadd.f32 %v740, %v1032
        %v1074 = vadd.f32 %v741, %v1033
        %v1075 = vadd.f32 %v742, %v1034
        %v1076 = vadd.f32 %v743, %v1035
        %v1077 = vadd.f32 %v744, %v1036
        %v1078 = vadd.f32 %v745, %v1037
        %v1079 = vadd.f32 %v746, %v1038
        %v1080 = vadd.f32 %v747, %v1039
        %v1081 = vadd.f32 %v748, %v1040
        %v1082 = vadd.f32 %v749, %v1041
        %v1083 = vadd.f32 %v750, %v1042
        %v1084 = vadd.f32 %v751, %v1043
        %v1085 = vadd.f32 %v752, %v1044
        %v1086 = vadd.f32 %v753, %v1045
        %v1087 = vadd.f32 %v754, %v1046
        %v1088 = vadd.f32 %v755, %v1047
        %v1089 = vadd.f32 %v756, %v1048
        %v1090 = vadd.f32 %v757, %v1049
        %v1091 = vadd.f32 %v758, %v1050
        %v1092 = vadd.f32 %v759, %v1051
        %v1093 = vadd.f32 %v760, %v1052
        %v1094 = vadd.f32 %v761, %v1053
        %v1095 = vld [vmem:[%s437 + $0x2] sm:$0xff]
        %v1096 = vld [vmem:[%s437 + $0xa] sm:$0xff]
        %v1097 = vld [vmem:[%s437 + $0x12] sm:$0xff]
        %v1098 = vld [vmem:[%s437 + $0x1a] sm:$0xff]
        %v1099 = vld [vmem:[%s437 + $0x22] sm:$0xff]
        %v1100 = vld [vmem:[%s437 + $0x2a] sm:$0xff]
        %v1101 = vld [vmem:[%s437 + $0x32] sm:$0xff]
        %v1102 = vld [vmem:[%s437 + $0x3a] sm:$0xff]
        %v1103 = vld [vmem:[%s437 + $0x42] sm:$0xff]
        %v1104 = vld [vmem:[%s437 + $0x4a] sm:$0xff]
        %v1105 = vld [vmem:[%s437 + $0x52] sm:$0xff]
        %v1106 = vld [vmem:[%s437 + $0x5a] sm:$0xff]
        %v1107 = vld [vmem:[%s437 + $0x62] sm:$0xff]
        %v1108 = vld [vmem:[%s437 + $0x6a] sm:$0xff]
        %v1109 = vld [vmem:[%s437 + $0x72] sm:$0xff]
        %v1110 = vld [vmem:[%s437 + $0x7a] sm:$0xff]
        %v1111 = vld [vmem:[%s437 + $0x82] sm:$0xff]
        %v1112 = vld [vmem:[%s437 + $0x8a] sm:$0xff]
        %v1113 = vld [vmem:[%s437 + $0x92] sm:$0xff]
        %v1114 = vld [vmem:[%s437 + $0x9a] sm:$0xff]
        %v1115 = vld [vmem:[%s437 + $0xa2] sm:$0xff]
        %v1116 = vld [vmem:[%s437 + $0xaa] sm:$0xff]
        %v1117 = vld [vmem:[%s437 + $0xb2] sm:$0xff]
        %v1118 = vld [vmem:[%s437 + $0xba] sm:$0xff]
        %v1119 = vld [vmem:[%s437 + $0xc2] sm:$0xff]
        %v1120 = vld [vmem:[%s437 + $0xca] sm:$0xff]
        %v1121 = vld [vmem:[%s437 + $0xd2] sm:$0xff]
        %v1122 = vld [vmem:[%s437 + $0xda] sm:$0xff]
        %v1123 = vld [vmem:[%s437 + $0xe2] sm:$0xff]
        %v1124 = vld [vmem:[%s437 + $0xea] sm:$0xff]
        %v1125 = vld [vmem:[%s437 + $0xf2] sm:$0xff]
        %v1126 = vld [vmem:[%s437 + $0xfa] sm:$0xff]
        %v1127 = vld [vmem:[%s437 + $0x102] sm:$0xff]
        %v1128 = vld [vmem:[%s437 + $0x10a] sm:$0xff]
        %v1129 = vld [vmem:[%s437 + $0x112] sm:$0xff]
        %v1130 = vld [vmem:[%s437 + $0x11a] sm:$0xff]
        %v1131 = vld [vmem:[%s437 + $0x122] sm:$0xff]
        %v1132 = vld [vmem:[%s437 + $0x12a] sm:$0xff]
        %v1133 = vld [vmem:[%s437 + $0x132] sm:$0xff]
        %v1134 = vld [vmem:[%s437 + $0x13a] sm:$0xff]
        %v1135 = vld [vmem:[%s437 + $0x142] sm:$0xf]
        %s1136 = scalar_lea.vmem %s1, 2
        %v1137 = vld [vmem:[%s1136] sm:$0x1]
        %1139 = vset.pattern.permute.xlu0 0
        %1140 = vperm.xlu0 %1139, %v1095
        %v1141 = vpop.permute.xlu0 %1140
        %1144 = vset.pattern.permute.xlu0 0
        %1145 = vperm.xlu0 %1144, %v1096
        %v1146 = vpop.permute.xlu0 %1145
        %1149 = vset.pattern.permute.xlu0 0
        %1150 = vperm.xlu0 %1149, %v1097
        %v1151 = vpop.permute.xlu0 %1150
        %1154 = vset.pattern.permute.xlu0 0
        %1155 = vperm.xlu0 %1154, %v1098
        %v1156 = vpop.permute.xlu0 %1155
        %1159 = vset.pattern.permute.xlu0 0
        %1160 = vperm.xlu0 %1159, %v1099
        %v1161 = vpop.permute.xlu0 %1160
        %1164 = vset.pattern.permute.xlu0 0
        %1165 = vperm.xlu0 %1164, %v1100
        %v1166 = vpop.permute.xlu0 %1165
        %1169 = vset.pattern.permute.xlu0 0
        %1170 = vperm.xlu0 %1169, %v1101
        %v1171 = vpop.permute.xlu0 %1170
        %1174 = vset.pattern.permute.xlu0 0
        %1175 = vperm.xlu0 %1174, %v1102
        %v1176 = vpop.permute.xlu0 %1175
        %1179 = vset.pattern.permute.xlu0 0
        %1180 = vperm.xlu0 %1179, %v1103
        %v1181 = vpop.permute.xlu0 %1180
        %1184 = vset.pattern.permute.xlu0 0
        %1185 = vperm.xlu0 %1184, %v1104
        %v1186 = vpop.permute.xlu0 %1185
        %1189 = vset.pattern.permute.xlu0 0
        %1190 = vperm.xlu0 %1189, %v1105
        %v1191 = vpop.permute.xlu0 %1190
        %1194 = vset.pattern.permute.xlu0 0
        %1195 = vperm.xlu0 %1194, %v1106
        %v1196 = vpop.permute.xlu0 %1195
        %1199 = vset.pattern.permute.xlu0 0
        %1200 = vperm.xlu0 %1199, %v1107
        %v1201 = vpop.permute.xlu0 %1200
        %1204 = vset.pattern.permute.xlu0 0
        %1205 = vperm.xlu0 %1204, %v1108
        %v1206 = vpop.permute.xlu0 %1205
        %1209 = vset.pattern.permute.xlu0 0
        %1210 = vperm.xlu0 %1209, %v1109
        %v1211 = vpop.permute.xlu0 %1210
        %1214 = vset.pattern.permute.xlu0 0
        %1215 = vperm.xlu0 %1214, %v1110
        %v1216 = vpop.permute.xlu0 %1215
        %1219 = vset.pattern.permute.xlu0 0
        %1220 = vperm.xlu0 %1219, %v1111
        %v1221 = vpop.permute.xlu0 %1220
        %1224 = vset.pattern.permute.xlu0 0
        %1225 = vperm.xlu0 %1224, %v1112
        %v1226 = vpop.permute.xlu0 %1225
        %1229 = vset.pattern.permute.xlu0 0
        %1230 = vperm.xlu0 %1229, %v1113
        %v1231 = vpop.permute.xlu0 %1230
        %1234 = vset.pattern.permute.xlu0 0
        %1235 = vperm.xlu0 %1234, %v1114
        %v1236 = vpop.permute.xlu0 %1235
        %1239 = vset.pattern.permute.xlu0 0
        %1240 = vperm.xlu0 %1239, %v1115
        %v1241 = vpop.permute.xlu0 %1240
        %1244 = vset.pattern.permute.xlu0 0
        %1245 = vperm.xlu0 %1244, %v1116
        %v1246 = vpop.permute.xlu0 %1245
        %1249 = vset.pattern.permute.xlu0 0
        %1250 = vperm.xlu0 %1249, %v1117
        %v1251 = vpop.permute.xlu0 %1250
        %1254 = vset.pattern.permute.xlu0 0
        %1255 = vperm.xlu0 %1254, %v1118
        %v1256 = vpop.permute.xlu0 %1255
        %1259 = vset.pattern.permute.xlu0 0
        %1260 = vperm.xlu0 %1259, %v1119
        %v1261 = vpop.permute.xlu0 %1260
        %1264 = vset.pattern.permute.xlu0 0
        %1265 = vperm.xlu0 %1264, %v1120
        %v1266 = vpop.permute.xlu0 %1265
        %1269 = vset.pattern.permute.xlu0 0
        %1270 = vperm.xlu0 %1269, %v1121
        %v1271 = vpop.permute.xlu0 %1270
        %1274 = vset.pattern.permute.xlu0 0
        %1275 = vperm.xlu0 %1274, %v1122
        %v1276 = vpop.permute.xlu0 %1275
        %1279 = vset.pattern.permute.xlu0 0
        %1280 = vperm.xlu0 %1279, %v1123
        %v1281 = vpop.permute.xlu0 %1280
        %1284 = vset.pattern.permute.xlu0 0
        %1285 = vperm.xlu0 %1284, %v1124
        %v1286 = vpop.permute.xlu0 %1285
        %1289 = vset.pattern.permute.xlu0 0
        %1290 = vperm.xlu0 %1289, %v1125
        %v1291 = vpop.permute.xlu0 %1290
        %1294 = vset.pattern.permute.xlu0 0
        %1295 = vperm.xlu0 %1294, %v1126
        %v1296 = vpop.permute.xlu0 %1295
        %1299 = vset.pattern.permute.xlu0 0
        %1300 = vperm.xlu0 %1299, %v1127
        %v1301 = vpop.permute.xlu0 %1300
        %1304 = vset.pattern.permute.xlu0 0
        %1305 = vperm.xlu0 %1304, %v1128
        %v1306 = vpop.permute.xlu0 %1305
        %1309 = vset.pattern.permute.xlu0 0
        %1310 = vperm.xlu0 %1309, %v1129
        %v1311 = vpop.permute.xlu0 %1310
        %1314 = vset.pattern.permute.xlu0 0
        %1315 = vperm.xlu0 %1314, %v1130
        %v1316 = vpop.permute.xlu0 %1315
        %1319 = vset.pattern.permute.xlu0 0
        %1320 = vperm.xlu0 %1319, %v1131
        %v1321 = vpop.permute.xlu0 %1320
        %1324 = vset.pattern.permute.xlu0 0
        %1325 = vperm.xlu0 %1324, %v1132
        %v1326 = vpop.permute.xlu0 %1325
        %1329 = vset.pattern.permute.xlu0 0
        %1330 = vperm.xlu0 %1329, %v1133
        %v1331 = vpop.permute.xlu0 %1330
        %1334 = vset.pattern.permute.xlu0 0
        %1335 = vperm.xlu0 %1334, %v1134
        %v1336 = vpop.permute.xlu0 %1335
        %1339 = vset.pattern.permute.xlu0 0
        %1340 = vperm.xlu0 %1339, %v1135
        %v1341 = vpop.permute.xlu0 %1340
        %v1344 = vperm.slane %v1137, 0
        %v1346 = vmul.f32 %v1141, %v1344
        %v1347 = vmul.f32 %v1146, %v1344
        %v1348 = vmul.f32 %v1151, %v1344
        %v1349 = vmul.f32 %v1156, %v1344
        %v1350 = vmul.f32 %v1161, %v1344
        %v1351 = vmul.f32 %v1166, %v1344
        %v1352 = vmul.f32 %v1171, %v1344
        %v1353 = vmul.f32 %v1176, %v1344
        %v1354 = vmul.f32 %v1181, %v1344
        %v1355 = vmul.f32 %v1186, %v1344
        %v1356 = vmul.f32 %v1191, %v1344
        %v1357 = vmul.f32 %v1196, %v1344
        %v1358 = vmul.f32 %v1201, %v1344
        %v1359 = vmul.f32 %v1206, %v1344
        %v1360 = vmul.f32 %v1211, %v1344
        %v1361 = vmul.f32 %v1216, %v1344
        %v1362 = vmul.f32 %v1221, %v1344
        %v1363 = vmul.f32 %v1226, %v1344
        %v1364 = vmul.f32 %v1231, %v1344
        %v1365 = vmul.f32 %v1236, %v1344
        %v1366 = vmul.f32 %v1241, %v1344
        %v1367 = vmul.f32 %v1246, %v1344
        %v1368 = vmul.f32 %v1251, %v1344
        %v1369 = vmul.f32 %v1256, %v1344
        %v1370 = vmul.f32 %v1261, %v1344
        %v1371 = vmul.f32 %v1266, %v1344
        %v1372 = vmul.f32 %v1271, %v1344
        %v1373 = vmul.f32 %v1276, %v1344
        %v1374 = vmul.f32 %v1281, %v1344
        %v1375 = vmul.f32 %v1286, %v1344
        %v1376 = vmul.f32 %v1291, %v1344
        %v1377 = vmul.f32 %v1296, %v1344
        %v1378 = vmul.f32 %v1301, %v1344
        %v1379 = vmul.f32 %v1306, %v1344
        %v1380 = vmul.f32 %v1311, %v1344
        %v1381 = vmul.f32 %v1316, %v1344
        %v1382 = vmul.f32 %v1321, %v1344
        %v1383 = vmul.f32 %v1326, %v1344
        %v1384 = vmul.f32 %v1331, %v1344
        %v1385 = vmul.f32 %v1336, %v1344
        %v1386 = vmul.f32 %v1341, %v1344
        %v1387 = vadd.f32 %v1054, %v1346
        %v1388 = vadd.f32 %v1055, %v1347
        %v1389 = vadd.f32 %v1056, %v1348
        %v1390 = vadd.f32 %v1057, %v1349
        %v1391 = vadd.f32 %v1058, %v1350
        %v1392 = vadd.f32 %v1059, %v1351
        %v1393 = vadd.f32 %v1060, %v1352
        %v1394 = vadd.f32 %v1061, %v1353
        %v1395 = vadd.f32 %v1062, %v1354
        %v1396 = vadd.f32 %v1063, %v1355
        %v1397 = vadd.f32 %v1064, %v1356
        %v1398 = vadd.f32 %v1065, %v1357
        %v1399 = vadd.f32 %v1066, %v1358
        %v1400 = vadd.f32 %v1067, %v1359
        %v1401 = vadd.f32 %v1068, %v1360
        %v1402 = vadd.f32 %v1069, %v1361
        %v1403 = vadd.f32 %v1070, %v1362
        %v1404 = vadd.f32 %v1071, %v1363
        %v1405 = vadd.f32 %v1072, %v1364
        %v1406 = vadd.f32 %v1073, %v1365
        %v1407 = vadd.f32 %v1074, %v1366
        %v1408 = vadd.f32 %v1075, %v1367
        %v1409 = vadd.f32 %v1076, %v1368
        %v1410 = vadd.f32 %v1077, %v1369
        %v1411 = vadd.f32 %v1078, %v1370
        %v1412 = vadd.f32 %v1079, %v1371
        %v1413 = vadd.f32 %v1080, %v1372
        %v1414 = vadd.f32 %v1081, %v1373
        %v1415 = vadd.f32 %v1082, %v1374
        %v1416 = vadd.f32 %v1083, %v1375
        %v1417 = vadd.f32 %v1084, %v1376
        %v1418 = vadd.f32 %v1085, %v1377
        %v1419 = vadd.f32 %v1086, %v1378
        %v1420 = vadd.f32 %v1087, %v1379
        %v1421 = vadd.f32 %v1088, %v1380
        %v1422 = vadd.f32 %v1089, %v1381
        %v1423 = vadd.f32 %v1090, %v1382
        %v1424 = vadd.f32 %v1091, %v1383
        %v1425 = vadd.f32 %v1092, %v1384
        %v1426 = vadd.f32 %v1093, %v1385
        %v1427 = vadd.f32 %v1094, %v1386
        %v1428 = vld [vmem:[%s437 + $0x12] sm:$0xff]
        %v1429 = vld [vmem:[%s437 + $0x1a] sm:$0xff]
        %v1430 = vld [vmem:[%s437 + $0x22] sm:$0xff]
        %v1431 = vld [vmem:[%s437 + $0x2a] sm:$0xff]
        %v1432 = vld [vmem:[%s437 + $0x32] sm:$0xff]
        %v1433 = vld [vmem:[%s437 + $0x3a] sm:$0xff]
        %v1434 = vld [vmem:[%s437 + $0x42] sm:$0xff]
        %v1435 = vld [vmem:[%s437 + $0x4a] sm:$0xff]
        %v1436 = vld [vmem:[%s437 + $0x52] sm:$0xff]
        %v1437 = vld [vmem:[%s437 + $0x5a] sm:$0xff]
        %v1438 = vld [vmem:[%s437 + $0x62] sm:$0xff]
        %v1439 = vld [vmem:[%s437 + $0x6a] sm:$0xff]
        %v1440 = vld [vmem:[%s437 + $0x72] sm:$0xff]
        %v1441 = vld [vmem:[%s437 + $0x7a] sm:$0xff]
        %v1442 = vld [vmem:[%s437 + $0x82] sm:$0xff]
        %v1443 = vld [vmem:[%s437 + $0x8a] sm:$0xff]
        %v1444 = vld [vmem:[%s437 + $0x92] sm:$0xff]
        %v1445 = vld [vmem:[%s437 + $0x9a] sm:$0xff]
        %v1446 = vld [vmem:[%s437 + $0xa2] sm:$0xff]
        %v1447 = vld [vmem:[%s437 + $0xaa] sm:$0xff]
        %v1448 = vld [vmem:[%s437 + $0xb2] sm:$0xff]
        %v1449 = vld [vmem:[%s437 + $0xba] sm:$0xff]
        %v1450 = vld [vmem:[%s437 + $0xc2] sm:$0xff]
        %v1451 = vld [vmem:[%s437 + $0xca] sm:$0xff]
        %v1452 = vld [vmem:[%s437 + $0xd2] sm:$0xff]
        %v1453 = vld [vmem:[%s437 + $0xda] sm:$0xff]
        %v1454 = vld [vmem:[%s437 + $0xe2] sm:$0xff]
        %v1455 = vld [vmem:[%s437 + $0xea] sm:$0xff]
        %v1456 = vld [vmem:[%s437 + $0xf2] sm:$0xff]
        %v1457 = vld [vmem:[%s437 + $0xfa] sm:$0xff]
        %v1458 = vld [vmem:[%s437 + $0x102] sm:$0xff]
        %v1459 = vld [vmem:[%s437 + $0x10a] sm:$0xff]
        %v1460 = vld [vmem:[%s437 + $0x112] sm:$0xff]
        %v1461 = vld [vmem:[%s437 + $0x11a] sm:$0xff]
        %v1462 = vld [vmem:[%s437 + $0x122] sm:$0xff]
        %v1463 = vld [vmem:[%s437 + $0x12a] sm:$0xff]
        %v1464 = vld [vmem:[%s437 + $0x132] sm:$0xff]
        %v1465 = vld [vmem:[%s437 + $0x13a] sm:$0xff]
        %v1466 = vld [vmem:[%s437 + $0x142] sm:$0xff]
        %v1467 = vld [vmem:[%s437 + $0x14a] sm:$0xff]
        %v1468 = vld [vmem:[%s437 + $0x152] sm:$0xf]
        %s1469 = scalar_lea.vmem %s1, 3
        %v1470 = vld [vmem:[%s1469] sm:$0x1]
        %1472 = vset.pattern.permute.xlu0 0
        %1473 = vperm.xlu0 %1472, %v1428
        %v1474 = vpop.permute.xlu0 %1473
        %1477 = vset.pattern.permute.xlu0 0
        %1478 = vperm.xlu0 %1477, %v1429
        %v1479 = vpop.permute.xlu0 %1478
        %1482 = vset.pattern.permute.xlu0 0
        %1483 = vperm.xlu0 %1482, %v1430
        %v1484 = vpop.permute.xlu0 %1483
        %1487 = vset.pattern.permute.xlu0 0
        %1488 = vperm.xlu0 %1487, %v1431
        %v1489 = vpop.permute.xlu0 %1488
        %1492 = vset.pattern.permute.xlu0 0
        %1493 = vperm.xlu0 %1492, %v1432
        %v1494 = vpop.permute.xlu0 %1493
        %1497 = vset.pattern.permute.xlu0 0
        %1498 = vperm.xlu0 %1497, %v1433
        %v1499 = vpop.permute.xlu0 %1498
        %1502 = vset.pattern.permute.xlu0 0
        %1503 = vperm.xlu0 %1502, %v1434
        %v1504 = vpop.permute.xlu0 %1503
        %1507 = vset.pattern.permute.xlu0 0
        %1508 = vperm.xlu0 %1507, %v1435
        %v1509 = vpop.permute.xlu0 %1508
        %1512 = vset.pattern.permute.xlu0 0
        %1513 = vperm.xlu0 %1512, %v1436
        %v1514 = vpop.permute.xlu0 %1513
        %1517 = vset.pattern.permute.xlu0 0
        %1518 = vperm.xlu0 %1517, %v1437
        %v1519 = vpop.permute.xlu0 %1518
        %1522 = vset.pattern.permute.xlu0 0
        %1523 = vperm.xlu0 %1522, %v1438
        %v1524 = vpop.permute.xlu0 %1523
        %1527 = vset.pattern.permute.xlu0 0
        %1528 = vperm.xlu0 %1527, %v1439
        %v1529 = vpop.permute.xlu0 %1528
        %1532 = vset.pattern.permute.xlu0 0
        %1533 = vperm.xlu0 %1532, %v1440
        %v1534 = vpop.permute.xlu0 %1533
        %1537 = vset.pattern.permute.xlu0 0
        %1538 = vperm.xlu0 %1537, %v1441
        %v1539 = vpop.permute.xlu0 %1538
        %1542 = vset.pattern.permute.xlu0 0
        %1543 = vperm.xlu0 %1542, %v1442
        %v1544 = vpop.permute.xlu0 %1543
        %1547 = vset.pattern.permute.xlu0 0
        %1548 = vperm.xlu0 %1547, %v1443
        %v1549 = vpop.permute.xlu0 %1548
        %1552 = vset.pattern.permute.xlu0 0
        %1553 = vperm.xlu0 %1552, %v1444
        %v1554 = vpop.permute.xlu0 %1553
        %1557 = vset.pattern.permute.xlu0 0
        %1558 = vperm.xlu0 %1557, %v1445
        %v1559 = vpop.permute.xlu0 %1558
        %1562 = vset.pattern.permute.xlu0 0
        %1563 = vperm.xlu0 %1562, %v1446
        %v1564 = vpop.permute.xlu0 %1563
        %1567 = vset.pattern.permute.xlu0 0
        %1568 = vperm.xlu0 %1567, %v1447
        %v1569 = vpop.permute.xlu0 %1568
        %1572 = vset.pattern.permute.xlu0 0
        %1573 = vperm.xlu0 %1572, %v1448
        %v1574 = vpop.permute.xlu0 %1573
        %1577 = vset.pattern.permute.xlu0 0
        %1578 = vperm.xlu0 %1577, %v1449
        %v1579 = vpop.permute.xlu0 %1578
        %1582 = vset.pattern.permute.xlu0 0
        %1583 = vperm.xlu0 %1582, %v1450
        %v1584 = vpop.permute.xlu0 %1583
        %1587 = vset.pattern.permute.xlu0 0
        %1588 = vperm.xlu0 %1587, %v1451
        %v1589 = vpop.permute.xlu0 %1588
        %1592 = vset.pattern.permute.xlu0 0
        %1593 = vperm.xlu0 %1592, %v1452
        %v1594 = vpop.permute.xlu0 %1593
        %1597 = vset.pattern.permute.xlu0 0
        %1598 = vperm.xlu0 %1597, %v1453
        %v1599 = vpop.permute.xlu0 %1598
        %1602 = vset.pattern.permute.xlu0 0
        %1603 = vperm.xlu0 %1602, %v1454
        %v1604 = vpop.permute.xlu0 %1603
        %1607 = vset.pattern.permute.xlu0 0
        %1608 = vperm.xlu0 %1607, %v1455
        %v1609 = vpop.permute.xlu0 %1608
        %1612 = vset.pattern.permute.xlu0 0
        %1613 = vperm.xlu0 %1612, %v1456
        %v1614 = vpop.permute.xlu0 %1613
        %1617 = vset.pattern.permute.xlu0 0
        %1618 = vperm.xlu0 %1617, %v1457
        %v1619 = vpop.permute.xlu0 %1618
        %1622 = vset.pattern.permute.xlu0 0
        %1623 = vperm.xlu0 %1622, %v1458
        %v1624 = vpop.permute.xlu0 %1623
        %1627 = vset.pattern.permute.xlu0 0
        %1628 = vperm.xlu0 %1627, %v1459
        %v1629 = vpop.permute.xlu0 %1628
        %1632 = vset.pattern.permute.xlu0 0
        %1633 = vperm.xlu0 %1632, %v1460
        %v1634 = vpop.permute.xlu0 %1633
        %1637 = vset.pattern.permute.xlu0 0
        %1638 = vperm.xlu0 %1637, %v1461
        %v1639 = vpop.permute.xlu0 %1638
        %1642 = vset.pattern.permute.xlu0 0
        %1643 = vperm.xlu0 %1642, %v1462
        %v1644 = vpop.permute.xlu0 %1643
        %1647 = vset.pattern.permute.xlu0 0
        %1648 = vperm.xlu0 %1647, %v1463
        %v1649 = vpop.permute.xlu0 %1648
        %1652 = vset.pattern.permute.xlu0 0
        %1653 = vperm.xlu0 %1652, %v1464
        %v1654 = vpop.permute.xlu0 %1653
        %1657 = vset.pattern.permute.xlu0 0
        %1658 = vperm.xlu0 %1657, %v1465
        %v1659 = vpop.permute.xlu0 %1658
        %1662 = vset.pattern.permute.xlu0 0
        %1663 = vperm.xlu0 %1662, %v1466
        %v1664 = vpop.permute.xlu0 %1663
        %1667 = vset.pattern.permute.xlu0 0
        %1668 = vperm.xlu0 %1667, %v1467
        %v1669 = vpop.permute.xlu0 %1668
        %1672 = vset.pattern.permute.xlu0 0
        %1673 = vperm.xlu0 %1672, %v1468
        %v1674 = vpop.permute.xlu0 %1673
        %v1677 = vperm.slane %v1470, 0
        %v1679 = vmul.f32 %v1474, %v1677
        %v1680 = vmul.f32 %v1479, %v1677
        %v1681 = vmul.f32 %v1484, %v1677
        %v1682 = vmul.f32 %v1489, %v1677
        %v1683 = vmul.f32 %v1494, %v1677
        %v1684 = vmul.f32 %v1499, %v1677
        %v1685 = vmul.f32 %v1504, %v1677
        %v1686 = vmul.f32 %v1509, %v1677
        %v1687 = vmul.f32 %v1514, %v1677
        %v1688 = vmul.f32 %v1519, %v1677
        %v1689 = vmul.f32 %v1524, %v1677
        %v1690 = vmul.f32 %v1529, %v1677
        %v1691 = vmul.f32 %v1534, %v1677
        %v1692 = vmul.f32 %v1539, %v1677
        %v1693 = vmul.f32 %v1544, %v1677
        %v1694 = vmul.f32 %v1549, %v1677
        %v1695 = vmul.f32 %v1554, %v1677
        %v1696 = vmul.f32 %v1559, %v1677
        %v1697 = vmul.f32 %v1564, %v1677
        %v1698 = vmul.f32 %v1569, %v1677
        %v1699 = vmul.f32 %v1574, %v1677
        %v1700 = vmul.f32 %v1579, %v1677
        %v1701 = vmul.f32 %v1584, %v1677
        %v1702 = vmul.f32 %v1589, %v1677
        %v1703 = vmul.f32 %v1594, %v1677
        %v1704 = vmul.f32 %v1599, %v1677
        %v1705 = vmul.f32 %v1604, %v1677
        %v1706 = vmul.f32 %v1609, %v1677
        %v1707 = vmul.f32 %v1614, %v1677
        %v1708 = vmul.f32 %v1619, %v1677
        %v1709 = vmul.f32 %v1624, %v1677
        %v1710 = vmul.f32 %v1629, %v1677
        %v1711 = vmul.f32 %v1634, %v1677
        %v1712 = vmul.f32 %v1639, %v1677
        %v1713 = vmul.f32 %v1644, %v1677
        %v1714 = vmul.f32 %v1649, %v1677
        %v1715 = vmul.f32 %v1654, %v1677
        %v1716 = vmul.f32 %v1659, %v1677
        %v1717 = vmul.f32 %v1664, %v1677
        %v1718 = vmul.f32 %v1669, %v1677
        %v1719 = vmul.f32 %v1674, %v1677
        %v1720 = vadd.f32 %v1387, %v1679
        %v1721 = vadd.f32 %v1388, %v1680
        %v1722 = vadd.f32 %v1389, %v1681
        %v1723 = vadd.f32 %v1390, %v1682
        %v1724 = vadd.f32 %v1391, %v1683
        %v1725 = vadd.f32 %v1392, %v1684
        %v1726 = vadd.f32 %v1393, %v1685
        %v1727 = vadd.f32 %v1394, %v1686
        %v1728 = vadd.f32 %v1395, %v1687
        %v1729 = vadd.f32 %v1396, %v1688
        %v1730 = vadd.f32 %v1397, %v1689
        %v1731 = vadd.f32 %v1398, %v1690
        %v1732 = vadd.f32 %v1399, %v1691
        %v1733 = vadd.f32 %v1400, %v1692
        %v1734 = vadd.f32 %v1401, %v1693
        %v1735 = vadd.f32 %v1402, %v1694
        %v1736 = vadd.f32 %v1403, %v1695
        %v1737 = vadd.f32 %v1404, %v1696
        %v1738 = vadd.f32 %v1405, %v1697
        %v1739 = vadd.f32 %v1406, %v1698
        %v1740 = vadd.f32 %v1407, %v1699
        %v1741 = vadd.f32 %v1408, %v1700
        %v1742 = vadd.f32 %v1409, %v1701
        %v1743 = vadd.f32 %v1410, %v1702
        %v1744 = vadd.f32 %v1411, %v1703
        %v1745 = vadd.f32 %v1412, %v1704
        %v1746 = vadd.f32 %v1413, %v1705
        %v1747 = vadd.f32 %v1414, %v1706
        %v1748 = vadd.f32 %v1415, %v1707
        %v1749 = vadd.f32 %v1416, %v1708
        %v1750 = vadd.f32 %v1417, %v1709
        %v1751 = vadd.f32 %v1418, %v1710
        %v1752 = vadd.f32 %v1419, %v1711
        %v1753 = vadd.f32 %v1420, %v1712
        %v1754 = vadd.f32 %v1421, %v1713
        %v1755 = vadd.f32 %v1422, %v1714
        %v1756 = vadd.f32 %v1423, %v1715
        %v1757 = vadd.f32 %v1424, %v1716
        %v1758 = vadd.f32 %v1425, %v1717
        %v1759 = vadd.f32 %v1426, %v1718
        %v1760 = vadd.f32 %v1427, %v1719
        %v1761 = vld [vmem:[%s437 + $0x13] sm:$0xff]
        %v1762 = vld [vmem:[%s437 + $0x1b] sm:$0xff]
        %v1763 = vld [vmem:[%s437 + $0x23] sm:$0xff]
        %v1764 = vld [vmem:[%s437 + $0x2b] sm:$0xff]
        %v1765 = vld [vmem:[%s437 + $0x33] sm:$0xff]
        %v1766 = vld [vmem:[%s437 + $0x3b] sm:$0xff]
        %v1767 = vld [vmem:[%s437 + $0x43] sm:$0xff]
        %v1768 = vld [vmem:[%s437 + $0x4b] sm:$0xff]
        %v1769 = vld [vmem:[%s437 + $0x53] sm:$0xff]
        %v1770 = vld [vmem:[%s437 + $0x5b] sm:$0xff]
        %v1771 = vld [vmem:[%s437 + $0x63] sm:$0xff]
        %v1772 = vld [vmem:[%s437 + $0x6b] sm:$0xff]
        %v1773 = vld [vmem:[%s437 + $0x73] sm:$0xff]
        %v1774 = vld [vmem:[%s437 + $0x7b] sm:$0xff]
        %v1775 = vld [vmem:[%s437 + $0x83] sm:$0xff]
        %v1776 = vld [vmem:[%s437 + $0x8b] sm:$0xff]
        %v1777 = vld [vmem:[%s437 + $0x93] sm:$0xff]
        %v1778 = vld [vmem:[%s437 + $0x9b] sm:$0xff]
        %v1779 = vld [vmem:[%s437 + $0xa3] sm:$0xff]
        %v1780 = vld [vmem:[%s437 + $0xab] sm:$0xff]
        %v1781 = vld [vmem:[%s437 + $0xb3] sm:$0xff]
        %v1782 = vld [vmem:[%s437 + $0xbb] sm:$0xff]
        %v1783 = vld [vmem:[%s437 + $0xc3] sm:$0xff]
        %v1784 = vld [vmem:[%s437 + $0xcb] sm:$0xff]
        %v1785 = vld [vmem:[%s437 + $0xd3] sm:$0xff]
        %v1786 = vld [vmem:[%s437 + $0xdb] sm:$0xff]
        %v1787 = vld [vmem:[%s437 + $0xe3] sm:$0xff]
        %v1788 = vld [vmem:[%s437 + $0xeb] sm:$0xff]
        %v1789 = vld [vmem:[%s437 + $0xf3] sm:$0xff]
        %v1790 = vld [vmem:[%s437 + $0xfb] sm:$0xff]
        %v1791 = vld [vmem:[%s437 + $0x103] sm:$0xff]
        %v1792 = vld [vmem:[%s437 + $0x10b] sm:$0xff]
        %v1793 = vld [vmem:[%s437 + $0x113] sm:$0xff]
        %v1794 = vld [vmem:[%s437 + $0x11b] sm:$0xff]
        %v1795 = vld [vmem:[%s437 + $0x123] sm:$0xff]
        %v1796 = vld [vmem:[%s437 + $0x12b] sm:$0xff]
        %v1797 = vld [vmem:[%s437 + $0x133] sm:$0xff]
        %v1798 = vld [vmem:[%s437 + $0x13b] sm:$0xff]
        %v1799 = vld [vmem:[%s437 + $0x143] sm:$0xff]
        %v1800 = vld [vmem:[%s437 + $0x14b] sm:$0xff]
        %v1801 = vld [vmem:[%s437 + $0x153] sm:$0xf]
        %s1802 = scalar_lea.vmem %s1, 4
        %v1803 = vld [vmem:[%s1802] sm:$0x1]
        %1805 = vset.pattern.permute.xlu0 0
        %1806 = vperm.xlu0 %1805, %v1761
        %v1807 = vpop.permute.xlu0 %1806
        %1810 = vset.pattern.permute.xlu0 0
        %1811 = vperm.xlu0 %1810, %v1762
        %v1812 = vpop.permute.xlu0 %1811
        %1815 = vset.pattern.permute.xlu0 0
        %1816 = vperm.xlu0 %1815, %v1763
        %v1817 = vpop.permute.xlu0 %1816
        %1820 = vset.pattern.permute.xlu0 0
        %1821 = vperm.xlu0 %1820, %v1764
        %v1822 = vpop.permute.xlu0 %1821
        %1825 = vset.pattern.permute.xlu0 0
        %1826 = vperm.xlu0 %1825, %v1765
        %v1827 = vpop.permute.xlu0 %1826
        %1830 = vset.pattern.permute.xlu0 0
        %1831 = vperm.xlu0 %1830, %v1766
        %v1832 = vpop.permute.xlu0 %1831
        %1835 = vset.pattern.permute.xlu0 0
        %1836 = vperm.xlu0 %1835, %v1767
        %v1837 = vpop.permute.xlu0 %1836
        %1840 = vset.pattern.permute.xlu0 0
        %1841 = vperm.xlu0 %1840, %v1768
        %v1842 = vpop.permute.xlu0 %1841
        %1845 = vset.pattern.permute.xlu0 0
        %1846 = vperm.xlu0 %1845, %v1769
        %v1847 = vpop.permute.xlu0 %1846
        %1850 = vset.pattern.permute.xlu0 0
        %1851 = vperm.xlu0 %1850, %v1770
        %v1852 = vpop.permute.xlu0 %1851
        %1855 = vset.pattern.permute.xlu0 0
        %1856 = vperm.xlu0 %1855, %v1771
        %v1857 = vpop.permute.xlu0 %1856
        %1860 = vset.pattern.permute.xlu0 0
        %1861 = vperm.xlu0 %1860, %v1772
        %v1862 = vpop.permute.xlu0 %1861
        %1865 = vset.pattern.permute.xlu0 0
        %1866 = vperm.xlu0 %1865, %v1773
        %v1867 = vpop.permute.xlu0 %1866
        %1870 = vset.pattern.permute.xlu0 0
        %1871 = vperm.xlu0 %1870, %v1774
        %v1872 = vpop.permute.xlu0 %1871
        %1875 = vset.pattern.permute.xlu0 0
        %1876 = vperm.xlu0 %1875, %v1775
        %v1877 = vpop.permute.xlu0 %1876
        %1880 = vset.pattern.permute.xlu0 0
        %1881 = vperm.xlu0 %1880, %v1776
        %v1882 = vpop.permute.xlu0 %1881
        %1885 = vset.pattern.permute.xlu0 0
        %1886 = vperm.xlu0 %1885, %v1777
        %v1887 = vpop.permute.xlu0 %1886
        %1890 = vset.pattern.permute.xlu0 0
        %1891 = vperm.xlu0 %1890, %v1778
        %v1892 = vpop.permute.xlu0 %1891
        %1895 = vset.pattern.permute.xlu0 0
        %1896 = vperm.xlu0 %1895, %v1779
        %v1897 = vpop.permute.xlu0 %1896
        %1900 = vset.pattern.permute.xlu0 0
        %1901 = vperm.xlu0 %1900, %v1780
        %v1902 = vpop.permute.xlu0 %1901
        %1905 = vset.pattern.permute.xlu0 0
        %1906 = vperm.xlu0 %1905, %v1781
        %v1907 = vpop.permute.xlu0 %1906
        %1910 = vset.pattern.permute.xlu0 0
        %1911 = vperm.xlu0 %1910, %v1782
        %v1912 = vpop.permute.xlu0 %1911
        %1915 = vset.pattern.permute.xlu0 0
        %1916 = vperm.xlu0 %1915, %v1783
        %v1917 = vpop.permute.xlu0 %1916
        %1920 = vset.pattern.permute.xlu0 0
        %1921 = vperm.xlu0 %1920, %v1784
        %v1922 = vpop.permute.xlu0 %1921
        %1925 = vset.pattern.permute.xlu0 0
        %1926 = vperm.xlu0 %1925, %v1785
        %v1927 = vpop.permute.xlu0 %1926
        %1930 = vset.pattern.permute.xlu0 0
        %1931 = vperm.xlu0 %1930, %v1786
        %v1932 = vpop.permute.xlu0 %1931
        %1935 = vset.pattern.permute.xlu0 0
        %1936 = vperm.xlu0 %1935, %v1787
        %v1937 = vpop.permute.xlu0 %1936
        %1940 = vset.pattern.permute.xlu0 0
        %1941 = vperm.xlu0 %1940, %v1788
        %v1942 = vpop.permute.xlu0 %1941
        %1945 = vset.pattern.permute.xlu0 0
        %1946 = vperm.xlu0 %1945, %v1789
        %v1947 = vpop.permute.xlu0 %1946
        %1950 = vset.pattern.permute.xlu0 0
        %1951 = vperm.xlu0 %1950, %v1790
        %v1952 = vpop.permute.xlu0 %1951
        %1955 = vset.pattern.permute.xlu0 0
        %1956 = vperm.xlu0 %1955, %v1791
        %v1957 = vpop.permute.xlu0 %1956
        %1960 = vset.pattern.permute.xlu0 0
        %1961 = vperm.xlu0 %1960, %v1792
        %v1962 = vpop.permute.xlu0 %1961
        %1965 = vset.pattern.permute.xlu0 0
        %1966 = vperm.xlu0 %1965, %v1793
        %v1967 = vpop.permute.xlu0 %1966
        %1970 = vset.pattern.permute.xlu0 0
        %1971 = vperm.xlu0 %1970, %v1794
        %v1972 = vpop.permute.xlu0 %1971
        %1975 = vset.pattern.permute.xlu0 0
        %1976 = vperm.xlu0 %1975, %v1795
        %v1977 = vpop.permute.xlu0 %1976
        %1980 = vset.pattern.permute.xlu0 0
        %1981 = vperm.xlu0 %1980, %v1796
        %v1982 = vpop.permute.xlu0 %1981
        %1985 = vset.pattern.permute.xlu0 0
        %1986 = vperm.xlu0 %1985, %v1797
        %v1987 = vpop.permute.xlu0 %1986
        %1990 = vset.pattern.permute.xlu0 0
        %1991 = vperm.xlu0 %1990, %v1798
        %v1992 = vpop.permute.xlu0 %1991
        %1995 = vset.pattern.permute.xlu0 0
        %1996 = vperm.xlu0 %1995, %v1799
        %v1997 = vpop.permute.xlu0 %1996
        %2000 = vset.pattern.permute.xlu0 0
        %2001 = vperm.xlu0 %2000, %v1800
        %v2002 = vpop.permute.xlu0 %2001
        %2005 = vset.pattern.permute.xlu0 0
        %2006 = vperm.xlu0 %2005, %v1801
        %v2007 = vpop.permute.xlu0 %2006
        %v2010 = vperm.slane %v1803, 0
        %v2012 = vmul.f32 %v1807, %v2010
        %v2013 = vmul.f32 %v1812, %v2010
        %v2014 = vmul.f32 %v1817, %v2010
        %v2015 = vmul.f32 %v1822, %v2010
        %v2016 = vmul.f32 %v1827, %v2010
        %v2017 = vmul.f32 %v1832, %v2010
        %v2018 = vmul.f32 %v1837, %v2010
        %v2019 = vmul.f32 %v1842, %v2010
        %v2020 = vmul.f32 %v1847, %v2010
        %v2021 = vmul.f32 %v1852, %v2010
        %v2022 = vmul.f32 %v1857, %v2010
        %v2023 = vmul.f32 %v1862, %v2010
        %v2024 = vmul.f32 %v1867, %v2010
        %v2025 = vmul.f32 %v1872, %v2010
        %v2026 = vmul.f32 %v1877, %v2010
        %v2027 = vmul.f32 %v1882, %v2010
        %v2028 = vmul.f32 %v1887, %v2010
        %v2029 = vmul.f32 %v1892, %v2010
        %v2030 = vmul.f32 %v1897, %v2010
        %v2031 = vmul.f32 %v1902, %v2010
        %v2032 = vmul.f32 %v1907, %v2010
        %v2033 = vmul.f32 %v1912, %v2010
        %v2034 = vmul.f32 %v1917, %v2010
        %v2035 = vmul.f32 %v1922, %v2010
        %v2036 = vmul.f32 %v1927, %v2010
        %v2037 = vmul.f32 %v1932, %v2010
        %v2038 = vmul.f32 %v1937, %v2010
        %v2039 = vmul.f32 %v1942, %v2010
        %v2040 = vmul.f32 %v1947, %v2010
        %v2041 = vmul.f32 %v1952, %v2010
        %v2042 = vmul.f32 %v1957, %v2010
        %v2043 = vmul.f32 %v1962, %v2010
        %v2044 = vmul.f32 %v1967, %v2010
        %v2045 = vmul.f32 %v1972, %v2010
        %v2046 = vmul.f32 %v1977, %v2010
        %v2047 = vmul.f32 %v1982, %v2010
        %v2048 = vmul.f32 %v1987, %v2010
        %v2049 = vmul.f32 %v1992, %v2010
        %v2050 = vmul.f32 %v1997, %v2010
        %v2051 = vmul.f32 %v2002, %v2010
        %v2052 = vmul.f32 %v2007, %v2010
        %v2053 = vadd.f32 %v1720, %v2012
        %v2054 = vadd.f32 %v1721, %v2013
        %v2055 = vadd.f32 %v1722, %v2014
        %v2056 = vadd.f32 %v1723, %v2015
        %v2057 = vadd.f32 %v1724, %v2016
        %v2058 = vadd.f32 %v1725, %v2017
        %v2059 = vadd.f32 %v1726, %v2018
        %v2060 = vadd.f32 %v1727, %v2019
        %v2061 = vadd.f32 %v1728, %v2020
        %v2062 = vadd.f32 %v1729, %v2021
        %v2063 = vadd.f32 %v1730, %v2022
        %v2064 = vadd.f32 %v1731, %v2023
        %v2065 = vadd.f32 %v1732, %v2024
        %v2066 = vadd.f32 %v1733, %v2025
        %v2067 = vadd.f32 %v1734, %v2026
        %v2068 = vadd.f32 %v1735, %v2027
        %v2069 = vadd.f32 %v1736, %v2028
        %v2070 = vadd.f32 %v1737, %v2029
        %v2071 = vadd.f32 %v1738, %v2030
        %v2072 = vadd.f32 %v1739, %v2031
        %v2073 = vadd.f32 %v1740, %v2032
        %v2074 = vadd.f32 %v1741, %v2033
        %v2075 = vadd.f32 %v1742, %v2034
        %v2076 = vadd.f32 %v1743, %v2035
        %v2077 = vadd.f32 %v1744, %v2036
        %v2078 = vadd.f32 %v1745, %v2037
        %v2079 = vadd.f32 %v1746, %v2038
        %v2080 = vadd.f32 %v1747, %v2039
        %v2081 = vadd.f32 %v1748, %v2040
        %v2082 = vadd.f32 %v1749, %v2041
        %v2083 = vadd.f32 %v1750, %v2042
        %v2084 = vadd.f32 %v1751, %v2043
        %v2085 = vadd.f32 %v1752, %v2044
        %v2086 = vadd.f32 %v1753, %v2045
        %v2087 = vadd.f32 %v1754, %v2046
        %v2088 = vadd.f32 %v1755, %v2047
        %v2089 = vadd.f32 %v1756, %v2048
        %v2090 = vadd.f32 %v1757, %v2049
        %v2091 = vadd.f32 %v1758, %v2050
        %v2092 = vadd.f32 %v1759, %v2051
        %v2093 = vadd.f32 %v1760, %v2052
        %v2094 = vld [vmem:[%s437 + $0x14] sm:$0xff]
        %v2095 = vld [vmem:[%s437 + $0x1c] sm:$0xff]
        %v2096 = vld [vmem:[%s437 + $0x24] sm:$0xff]
        %v2097 = vld [vmem:[%s437 + $0x2c] sm:$0xff]
        %v2098 = vld [vmem:[%s437 + $0x34] sm:$0xff]
        %v2099 = vld [vmem:[%s437 + $0x3c] sm:$0xff]
        %v2100 = vld [vmem:[%s437 + $0x44] sm:$0xff]
        %v2101 = vld [vmem:[%s437 + $0x4c] sm:$0xff]
        %v2102 = vld [vmem:[%s437 + $0x54] sm:$0xff]
        %v2103 = vld [vmem:[%s437 + $0x5c] sm:$0xff]
        %v2104 = vld [vmem:[%s437 + $0x64] sm:$0xff]
        %v2105 = vld [vmem:[%s437 + $0x6c] sm:$0xff]
        %v2106 = vld [vmem:[%s437 + $0x74] sm:$0xff]
        %v2107 = vld [vmem:[%s437 + $0x7c] sm:$0xff]
        %v2108 = vld [vmem:[%s437 + $0x84] sm:$0xff]
        %v2109 = vld [vmem:[%s437 + $0x8c] sm:$0xff]
        %v2110 = vld [vmem:[%s437 + $0x94] sm:$0xff]
        %v2111 = vld [vmem:[%s437 + $0x9c] sm:$0xff]
        %v2112 = vld [vmem:[%s437 + $0xa4] sm:$0xff]
        %v2113 = vld [vmem:[%s437 + $0xac] sm:$0xff]
        %v2114 = vld [vmem:[%s437 + $0xb4] sm:$0xff]
        %v2115 = vld [vmem:[%s437 + $0xbc] sm:$0xff]
        %v2116 = vld [vmem:[%s437 + $0xc4] sm:$0xff]
        %v2117 = vld [vmem:[%s437 + $0xcc] sm:$0xff]
        %v2118 = vld [vmem:[%s437 + $0xd4] sm:$0xff]
        %v2119 = vld [vmem:[%s437 + $0xdc] sm:$0xff]
        %v2120 = vld [vmem:[%s437 + $0xe4] sm:$0xff]
        %v2121 = vld [vmem:[%s437 + $0xec] sm:$0xff]
        %v2122 = vld [vmem:[%s437 + $0xf4] sm:$0xff]
        %v2123 = vld [vmem:[%s437 + $0xfc] sm:$0xff]
        %v2124 = vld [vmem:[%s437 + $0x104] sm:$0xff]
        %v2125 = vld [vmem:[%s437 + $0x10c] sm:$0xff]
        %v2126 = vld [vmem:[%s437 + $0x114] sm:$0xff]
        %v2127 = vld [vmem:[%s437 + $0x11c] sm:$0xff]
        %v2128 = vld [vmem:[%s437 + $0x124] sm:$0xff]
        %v2129 = vld [vmem:[%s437 + $0x12c] sm:$0xff]
        %v2130 = vld [vmem:[%s437 + $0x134] sm:$0xff]
        %v2131 = vld [vmem:[%s437 + $0x13c] sm:$0xff]
        %v2132 = vld [vmem:[%s437 + $0x144] sm:$0xff]
        %v2133 = vld [vmem:[%s437 + $0x14c] sm:$0xff]
        %v2134 = vld [vmem:[%s437 + $0x154] sm:$0xf]
        %s2135 = scalar_lea.vmem %s1, 5
        %v2136 = vld [vmem:[%s2135] sm:$0x1]
        %2138 = vset.pattern.permute.xlu0 0
        %2139 = vperm.xlu0 %2138, %v2094
        %v2140 = vpop.permute.xlu0 %2139
        %2143 = vset.pattern.permute.xlu0 0
        %2144 = vperm.xlu0 %2143, %v2095
        %v2145 = vpop.permute.xlu0 %2144
        %2148 = vset.pattern.permute.xlu0 0
        %2149 = vperm.xlu0 %2148, %v2096
        %v2150 = vpop.permute.xlu0 %2149
        %2153 = vset.pattern.permute.xlu0 0
        %2154 = vperm.xlu0 %2153, %v2097
        %v2155 = vpop.permute.xlu0 %2154
        %2158 = vset.pattern.permute.xlu0 0
        %2159 = vperm.xlu0 %2158, %v2098
        %v2160 = vpop.permute.xlu0 %2159
        %2163 = vset.pattern.permute.xlu0 0
        %2164 = vperm.xlu0 %2163, %v2099
        %v2165 = vpop.permute.xlu0 %2164
        %2168 = vset.pattern.permute.xlu0 0
        %2169 = vperm.xlu0 %2168, %v2100
        %v2170 = vpop.permute.xlu0 %2169
        %2173 = vset.pattern.permute.xlu0 0
        %2174 = vperm.xlu0 %2173, %v2101
        %v2175 = vpop.permute.xlu0 %2174
        %2178 = vset.pattern.permute.xlu0 0
        %2179 = vperm.xlu0 %2178, %v2102
        %v2180 = vpop.permute.xlu0 %2179
        %2183 = vset.pattern.permute.xlu0 0
        %2184 = vperm.xlu0 %2183, %v2103
        %v2185 = vpop.permute.xlu0 %2184
        %2188 = vset.pattern.permute.xlu0 0
        %2189 = vperm.xlu0 %2188, %v2104
        %v2190 = vpop.permute.xlu0 %2189
        %2193 = vset.pattern.permute.xlu0 0
        %2194 = vperm.xlu0 %2193, %v2105
        %v2195 = vpop.permute.xlu0 %2194
        %2198 = vset.pattern.permute.xlu0 0
        %2199 = vperm.xlu0 %2198, %v2106
        %v2200 = vpop.permute.xlu0 %2199
        %2203 = vset.pattern.permute.xlu0 0
        %2204 = vperm.xlu0 %2203, %v2107
        %v2205 = vpop.permute.xlu0 %2204
        %2208 = vset.pattern.permute.xlu0 0
        %2209 = vperm.xlu0 %2208, %v2108
        %v2210 = vpop.permute.xlu0 %2209
        %2213 = vset.pattern.permute.xlu0 0
        %2214 = vperm.xlu0 %2213, %v2109
        %v2215 = vpop.permute.xlu0 %2214
        %2218 = vset.pattern.permute.xlu0 0
        %2219 = vperm.xlu0 %2218, %v2110
        %v2220 = vpop.permute.xlu0 %2219
        %2223 = vset.pattern.permute.xlu0 0
        %2224 = vperm.xlu0 %2223, %v2111
        %v2225 = vpop.permute.xlu0 %2224
        %2228 = vset.pattern.permute.xlu0 0
        %2229 = vperm.xlu0 %2228, %v2112
        %v2230 = vpop.permute.xlu0 %2229
        %2233 = vset.pattern.permute.xlu0 0
        %2234 = vperm.xlu0 %2233, %v2113
        %v2235 = vpop.permute.xlu0 %2234
        %2238 = vset.pattern.permute.xlu0 0
        %2239 = vperm.xlu0 %2238, %v2114
        %v2240 = vpop.permute.xlu0 %2239
        %2243 = vset.pattern.permute.xlu0 0
        %2244 = vperm.xlu0 %2243, %v2115
        %v2245 = vpop.permute.xlu0 %2244
        %2248 = vset.pattern.permute.xlu0 0
        %2249 = vperm.xlu0 %2248, %v2116
        %v2250 = vpop.permute.xlu0 %2249
        %2253 = vset.pattern.permute.xlu0 0
        %2254 = vperm.xlu0 %2253, %v2117
        %v2255 = vpop.permute.xlu0 %2254
        %2258 = vset.pattern.permute.xlu0 0
        %2259 = vperm.xlu0 %2258, %v2118
        %v2260 = vpop.permute.xlu0 %2259
        %2263 = vset.pattern.permute.xlu0 0
        %2264 = vperm.xlu0 %2263, %v2119
        %v2265 = vpop.permute.xlu0 %2264
        %2268 = vset.pattern.permute.xlu0 0
        %2269 = vperm.xlu0 %2268, %v2120
        %v2270 = vpop.permute.xlu0 %2269
        %2273 = vset.pattern.permute.xlu0 0
        %2274 = vperm.xlu0 %2273, %v2121
        %v2275 = vpop.permute.xlu0 %2274
        %2278 = vset.pattern.permute.xlu0 0
        %2279 = vperm.xlu0 %2278, %v2122
        %v2280 = vpop.permute.xlu0 %2279
        %2283 = vset.pattern.permute.xlu0 0
        %2284 = vperm.xlu0 %2283, %v2123
        %v2285 = vpop.permute.xlu0 %2284
        %2288 = vset.pattern.permute.xlu0 0
        %2289 = vperm.xlu0 %2288, %v2124
        %v2290 = vpop.permute.xlu0 %2289
        %2293 = vset.pattern.permute.xlu0 0
        %2294 = vperm.xlu0 %2293, %v2125
        %v2295 = vpop.permute.xlu0 %2294
        %2298 = vset.pattern.permute.xlu0 0
        %2299 = vperm.xlu0 %2298, %v2126
        %v2300 = vpop.permute.xlu0 %2299
        %2303 = vset.pattern.permute.xlu0 0
        %2304 = vperm.xlu0 %2303, %v2127
        %v2305 = vpop.permute.xlu0 %2304
        %2308 = vset.pattern.permute.xlu0 0
        %2309 = vperm.xlu0 %2308, %v2128
        %v2310 = vpop.permute.xlu0 %2309
        %2313 = vset.pattern.permute.xlu0 0
        %2314 = vperm.xlu0 %2313, %v2129
        %v2315 = vpop.permute.xlu0 %2314
        %2318 = vset.pattern.permute.xlu0 0
        %2319 = vperm.xlu0 %2318, %v2130
        %v2320 = vpop.permute.xlu0 %2319
        %2323 = vset.pattern.permute.xlu0 0
        %2324 = vperm.xlu0 %2323, %v2131
        %v2325 = vpop.permute.xlu0 %2324
        %2328 = vset.pattern.permute.xlu0 0
        %2329 = vperm.xlu0 %2328, %v2132
        %v2330 = vpop.permute.xlu0 %2329
        %2333 = vset.pattern.permute.xlu0 0
        %2334 = vperm.xlu0 %2333, %v2133
        %v2335 = vpop.permute.xlu0 %2334
        %2338 = vset.pattern.permute.xlu0 0
        %2339 = vperm.xlu0 %2338, %v2134
        %v2340 = vpop.permute.xlu0 %2339
        %v2343 = vperm.slane %v2136, 0
        %v2345 = vmul.f32 %v2140, %v2343
        %v2346 = vmul.f32 %v2145, %v2343
        %v2347 = vmul.f32 %v2150, %v2343
        %v2348 = vmul.f32 %v2155, %v2343
        %v2349 = vmul.f32 %v2160, %v2343
        %v2350 = vmul.f32 %v2165, %v2343
        %v2351 = vmul.f32 %v2170, %v2343
        %v2352 = vmul.f32 %v2175, %v2343
        %v2353 = vmul.f32 %v2180, %v2343
        %v2354 = vmul.f32 %v2185, %v2343
        %v2355 = vmul.f32 %v2190, %v2343
        %v2356 = vmul.f32 %v2195, %v2343
        %v2357 = vmul.f32 %v2200, %v2343
        %v2358 = vmul.f32 %v2205, %v2343
        %v2359 = vmul.f32 %v2210, %v2343
        %v2360 = vmul.f32 %v2215, %v2343
        %v2361 = vmul.f32 %v2220, %v2343
        %v2362 = vmul.f32 %v2225, %v2343
        %v2363 = vmul.f32 %v2230, %v2343
        %v2364 = vmul.f32 %v2235, %v2343
        %v2365 = vmul.f32 %v2240, %v2343
        %v2366 = vmul.f32 %v2245, %v2343
        %v2367 = vmul.f32 %v2250, %v2343
        %v2368 = vmul.f32 %v2255, %v2343
        %v2369 = vmul.f32 %v2260, %v2343
        %v2370 = vmul.f32 %v2265, %v2343
        %v2371 = vmul.f32 %v2270, %v2343
        %v2372 = vmul.f32 %v2275, %v2343
        %v2373 = vmul.f32 %v2280, %v2343
        %v2374 = vmul.f32 %v2285, %v2343
        %v2375 = vmul.f32 %v2290, %v2343
        %v2376 = vmul.f32 %v2295, %v2343
        %v2377 = vmul.f32 %v2300, %v2343
        %v2378 = vmul.f32 %v2305, %v2343
        %v2379 = vmul.f32 %v2310, %v2343
        %v2380 = vmul.f32 %v2315, %v2343
        %v2381 = vmul.f32 %v2320, %v2343
        %v2382 = vmul.f32 %v2325, %v2343
        %v2383 = vmul.f32 %v2330, %v2343
        %v2384 = vmul.f32 %v2335, %v2343
        %v2385 = vmul.f32 %v2340, %v2343
        %v2386 = vadd.f32 %v2053, %v2345
        %v2387 = vadd.f32 %v2054, %v2346
        %v2388 = vadd.f32 %v2055, %v2347
        %v2389 = vadd.f32 %v2056, %v2348
        %v2390 = vadd.f32 %v2057, %v2349
        %v2391 = vadd.f32 %v2058, %v2350
        %v2392 = vadd.f32 %v2059, %v2351
        %v2393 = vadd.f32 %v2060, %v2352
        %v2394 = vadd.f32 %v2061, %v2353
        %v2395 = vadd.f32 %v2062, %v2354
        %v2396 = vadd.f32 %v2063, %v2355
        %v2397 = vadd.f32 %v2064, %v2356
        %v2398 = vadd.f32 %v2065, %v2357
        %v2399 = vadd.f32 %v2066, %v2358
        %v2400 = vadd.f32 %v2067, %v2359
        %v2401 = vadd.f32 %v2068, %v2360
        %v2402 = vadd.f32 %v2069, %v2361
        %v2403 = vadd.f32 %v2070, %v2362
        %v2404 = vadd.f32 %v2071, %v2363
        %v2405 = vadd.f32 %v2072, %v2364
        %v2406 = vadd.f32 %v2073, %v2365
        %v2407 = vadd.f32 %v2074, %v2366
        %v2408 = vadd.f32 %v2075, %v2367
        %v2409 = vadd.f32 %v2076, %v2368
        %v2410 = vadd.f32 %v2077, %v2369
        %v2411 = vadd.f32 %v2078, %v2370
        %v2412 = vadd.f32 %v2079, %v2371
        %v2413 = vadd.f32 %v2080, %v2372
        %v2414 = vadd.f32 %v2081, %v2373
        %v2415 = vadd.f32 %v2082, %v2374
        %v2416 = vadd.f32 %v2083, %v2375
        %v2417 = vadd.f32 %v2084, %v2376
        %v2418 = vadd.f32 %v2085, %v2377
        %v2419 = vadd.f32 %v2086, %v2378
        %v2420 = vadd.f32 %v2087, %v2379
        %v2421 = vadd.f32 %v2088, %v2380
        %v2422 = vadd.f32 %v2089, %v2381
        %v2423 = vadd.f32 %v2090, %v2382
        %v2424 = vadd.f32 %v2091, %v2383
        %v2425 = vadd.f32 %v2092, %v2384
        %v2426 = vadd.f32 %v2093, %v2385
        %v2427 = vld [vmem:[%s437 + $0x24] sm:$0xff]
        %v2428 = vld [vmem:[%s437 + $0x2c] sm:$0xff]
        %v2429 = vld [vmem:[%s437 + $0x34] sm:$0xff]
        %v2430 = vld [vmem:[%s437 + $0x3c] sm:$0xff]
        %v2431 = vld [vmem:[%s437 + $0x44] sm:$0xff]
        %v2432 = vld [vmem:[%s437 + $0x4c] sm:$0xff]
        %v2433 = vld [vmem:[%s437 + $0x54] sm:$0xff]
        %v2434 = vld [vmem:[%s437 + $0x5c] sm:$0xff]
        %v2435 = vld [vmem:[%s437 + $0x64] sm:$0xff]
        %v2436 = vld [vmem:[%s437 + $0x6c] sm:$0xff]
        %v2437 = vld [vmem:[%s437 + $0x74] sm:$0xff]
        %v2438 = vld [vmem:[%s437 + $0x7c] sm:$0xff]
        %v2439 = vld [vmem:[%s437 + $0x84] sm:$0xff]
        %v2440 = vld [vmem:[%s437 + $0x8c] sm:$0xff]
        %v2441 = vld [vmem:[%s437 + $0x94] sm:$0xff]
        %v2442 = vld [vmem:[%s437 + $0x9c] sm:$0xff]
        %v2443 = vld [vmem:[%s437 + $0xa4] sm:$0xff]
        %v2444 = vld [vmem:[%s437 + $0xac] sm:$0xff]
        %v2445 = vld [vmem:[%s437 + $0xb4] sm:$0xff]
        %v2446 = vld [vmem:[%s437 + $0xbc] sm:$0xff]
        %v2447 = vld [vmem:[%s437 + $0xc4] sm:$0xff]
        %v2448 = vld [vmem:[%s437 + $0xcc] sm:$0xff]
        %v2449 = vld [vmem:[%s437 + $0xd4] sm:$0xff]
        %v2450 = vld [vmem:[%s437 + $0xdc] sm:$0xff]
        %v2451 = vld [vmem:[%s437 + $0xe4] sm:$0xff]
        %v2452 = vld [vmem:[%s437 + $0xec] sm:$0xff]
        %v2453 = vld [vmem:[%s437 + $0xf4] sm:$0xff]
        %v2454 = vld [vmem:[%s437 + $0xfc] sm:$0xff]
        %v2455 = vld [vmem:[%s437 + $0x104] sm:$0xff]
        %v2456 = vld [vmem:[%s437 + $0x10c] sm:$0xff]
        %v2457 = vld [vmem:[%s437 + $0x114] sm:$0xff]
        %v2458 = vld [vmem:[%s437 + $0x11c] sm:$0xff]
        %v2459 = vld [vmem:[%s437 + $0x124] sm:$0xff]
        %v2460 = vld [vmem:[%s437 + $0x12c] sm:$0xff]
        %v2461 = vld [vmem:[%s437 + $0x134] sm:$0xff]
        %v2462 = vld [vmem:[%s437 + $0x13c] sm:$0xff]
        %v2463 = vld [vmem:[%s437 + $0x144] sm:$0xff]
        %v2464 = vld [vmem:[%s437 + $0x14c] sm:$0xff]
        %v2465 = vld [vmem:[%s437 + $0x154] sm:$0xff]
        %v2466 = vld [vmem:[%s437 + $0x15c] sm:$0xff]
        %v2467 = vld [vmem:[%s437 + $0x164] sm:$0xf]
        %s2468 = scalar_lea.vmem %s1, 6
        %v2469 = vld [vmem:[%s2468] sm:$0x1]
        %2471 = vset.pattern.permute.xlu0 0
        %2472 = vperm.xlu0 %2471, %v2427
        %v2473 = vpop.permute.xlu0 %2472
        %2476 = vset.pattern.permute.xlu0 0
        %2477 = vperm.xlu0 %2476, %v2428
        %v2478 = vpop.permute.xlu0 %2477
        %2481 = vset.pattern.permute.xlu0 0
        %2482 = vperm.xlu0 %2481, %v2429
        %v2483 = vpop.permute.xlu0 %2482
        %2486 = vset.pattern.permute.xlu0 0
        %2487 = vperm.xlu0 %2486, %v2430
        %v2488 = vpop.permute.xlu0 %2487
        %2491 = vset.pattern.permute.xlu0 0
        %2492 = vperm.xlu0 %2491, %v2431
        %v2493 = vpop.permute.xlu0 %2492
        %2496 = vset.pattern.permute.xlu0 0
        %2497 = vperm.xlu0 %2496, %v2432
        %v2498 = vpop.permute.xlu0 %2497
        %2501 = vset.pattern.permute.xlu0 0
        %2502 = vperm.xlu0 %2501, %v2433
        %v2503 = vpop.permute.xlu0 %2502
        %2506 = vset.pattern.permute.xlu0 0
        %2507 = vperm.xlu0 %2506, %v2434
        %v2508 = vpop.permute.xlu0 %2507
        %2511 = vset.pattern.permute.xlu0 0
        %2512 = vperm.xlu0 %2511, %v2435
        %v2513 = vpop.permute.xlu0 %2512
        %2516 = vset.pattern.permute.xlu0 0
        %2517 = vperm.xlu0 %2516, %v2436
        %v2518 = vpop.permute.xlu0 %2517
        %2521 = vset.pattern.permute.xlu0 0
        %2522 = vperm.xlu0 %2521, %v2437
        %v2523 = vpop.permute.xlu0 %2522
        %2526 = vset.pattern.permute.xlu0 0
        %2527 = vperm.xlu0 %2526, %v2438
        %v2528 = vpop.permute.xlu0 %2527
        %2531 = vset.pattern.permute.xlu0 0
        %2532 = vperm.xlu0 %2531, %v2439
        %v2533 = vpop.permute.xlu0 %2532
        %2536 = vset.pattern.permute.xlu0 0
        %2537 = vperm.xlu0 %2536, %v2440
        %v2538 = vpop.permute.xlu0 %2537
        %2541 = vset.pattern.permute.xlu0 0
        %2542 = vperm.xlu0 %2541, %v2441
        %v2543 = vpop.permute.xlu0 %2542
        %2546 = vset.pattern.permute.xlu0 0
        %2547 = vperm.xlu0 %2546, %v2442
        %v2548 = vpop.permute.xlu0 %2547
        %2551 = vset.pattern.permute.xlu0 0
        %2552 = vperm.xlu0 %2551, %v2443
        %v2553 = vpop.permute.xlu0 %2552
        %2556 = vset.pattern.permute.xlu0 0
        %2557 = vperm.xlu0 %2556, %v2444
        %v2558 = vpop.permute.xlu0 %2557
        %2561 = vset.pattern.permute.xlu0 0
        %2562 = vperm.xlu0 %2561, %v2445
        %v2563 = vpop.permute.xlu0 %2562
        %2566 = vset.pattern.permute.xlu0 0
        %2567 = vperm.xlu0 %2566, %v2446
        %v2568 = vpop.permute.xlu0 %2567
        %2571 = vset.pattern.permute.xlu0 0
        %2572 = vperm.xlu0 %2571, %v2447
        %v2573 = vpop.permute.xlu0 %2572
        %2576 = vset.pattern.permute.xlu0 0
        %2577 = vperm.xlu0 %2576, %v2448
        %v2578 = vpop.permute.xlu0 %2577
        %2581 = vset.pattern.permute.xlu0 0
        %2582 = vperm.xlu0 %2581, %v2449
        %v2583 = vpop.permute.xlu0 %2582
        %2586 = vset.pattern.permute.xlu0 0
        %2587 = vperm.xlu0 %2586, %v2450
        %v2588 = vpop.permute.xlu0 %2587
        %2591 = vset.pattern.permute.xlu0 0
        %2592 = vperm.xlu0 %2591, %v2451
        %v2593 = vpop.permute.xlu0 %2592
        %2596 = vset.pattern.permute.xlu0 0
        %2597 = vperm.xlu0 %2596, %v2452
        %v2598 = vpop.permute.xlu0 %2597
        %2601 = vset.pattern.permute.xlu0 0
        %2602 = vperm.xlu0 %2601, %v2453
        %v2603 = vpop.permute.xlu0 %2602
        %2606 = vset.pattern.permute.xlu0 0
        %2607 = vperm.xlu0 %2606, %v2454
        %v2608 = vpop.permute.xlu0 %2607
        %2611 = vset.pattern.permute.xlu0 0
        %2612 = vperm.xlu0 %2611, %v2455
        %v2613 = vpop.permute.xlu0 %2612
        %2616 = vset.pattern.permute.xlu0 0
        %2617 = vperm.xlu0 %2616, %v2456
        %v2618 = vpop.permute.xlu0 %2617
        %2621 = vset.pattern.permute.xlu0 0
        %2622 = vperm.xlu0 %2621, %v2457
        %v2623 = vpop.permute.xlu0 %2622
        %2626 = vset.pattern.permute.xlu0 0
        %2627 = vperm.xlu0 %2626, %v2458
        %v2628 = vpop.permute.xlu0 %2627
        %2631 = vset.pattern.permute.xlu0 0
        %2632 = vperm.xlu0 %2631, %v2459
        %v2633 = vpop.permute.xlu0 %2632
        %2636 = vset.pattern.permute.xlu0 0
        %2637 = vperm.xlu0 %2636, %v2460
        %v2638 = vpop.permute.xlu0 %2637
        %2641 = vset.pattern.permute.xlu0 0
        %2642 = vperm.xlu0 %2641, %v2461
        %v2643 = vpop.permute.xlu0 %2642
        %2646 = vset.pattern.permute.xlu0 0
        %2647 = vperm.xlu0 %2646, %v2462
        %v2648 = vpop.permute.xlu0 %2647
        %2651 = vset.pattern.permute.xlu0 0
        %2652 = vperm.xlu0 %2651, %v2463
        %v2653 = vpop.permute.xlu0 %2652
        %2656 = vset.pattern.permute.xlu0 0
        %2657 = vperm.xlu0 %2656, %v2464
        %v2658 = vpop.permute.xlu0 %2657
        %2661 = vset.pattern.permute.xlu0 0
        %2662 = vperm.xlu0 %2661, %v2465
        %v2663 = vpop.permute.xlu0 %2662
        %2666 = vset.pattern.permute.xlu0 0
        %2667 = vperm.xlu0 %2666, %v2466
        %v2668 = vpop.permute.xlu0 %2667
        %2671 = vset.pattern.permute.xlu0 0
        %2672 = vperm.xlu0 %2671, %v2467
        %v2673 = vpop.permute.xlu0 %2672
        %v2676 = vperm.slane %v2469, 0
        %v2678 = vmul.f32 %v2473, %v2676
        %v2679 = vmul.f32 %v2478, %v2676
        %v2680 = vmul.f32 %v2483, %v2676
        %v2681 = vmul.f32 %v2488, %v2676
        %v2682 = vmul.f32 %v2493, %v2676
        %v2683 = vmul.f32 %v2498, %v2676
        %v2684 = vmul.f32 %v2503, %v2676
        %v2685 = vmul.f32 %v2508, %v2676
        %v2686 = vmul.f32 %v2513, %v2676
        %v2687 = vmul.f32 %v2518, %v2676
        %v2688 = vmul.f32 %v2523, %v2676
        %v2689 = vmul.f32 %v2528, %v2676
        %v2690 = vmul.f32 %v2533, %v2676
        %v2691 = vmul.f32 %v2538, %v2676
        %v2692 = vmul.f32 %v2543, %v2676
        %v2693 = vmul.f32 %v2548, %v2676
        %v2694 = vmul.f32 %v2553, %v2676
        %v2695 = vmul.f32 %v2558, %v2676
        %v2696 = vmul.f32 %v2563, %v2676
        %v2697 = vmul.f32 %v2568, %v2676
        %v2698 = vmul.f32 %v2573, %v2676
        %v2699 = vmul.f32 %v2578, %v2676
        %v2700 = vmul.f32 %v2583, %v2676
        %v2701 = vmul.f32 %v2588, %v2676
        %v2702 = vmul.f32 %v2593, %v2676
        %v2703 = vmul.f32 %v2598, %v2676
        %v2704 = vmul.f32 %v2603, %v2676
        %v2705 = vmul.f32 %v2608, %v2676
        %v2706 = vmul.f32 %v2613, %v2676
        %v2707 = vmul.f32 %v2618, %v2676
        %v2708 = vmul.f32 %v2623, %v2676
        %v2709 = vmul.f32 %v2628, %v2676
        %v2710 = vmul.f32 %v2633, %v2676
        %v2711 = vmul.f32 %v2638, %v2676
        %v2712 = vmul.f32 %v2643, %v2676
        %v2713 = vmul.f32 %v2648, %v2676
        %v2714 = vmul.f32 %v2653, %v2676
        %v2715 = vmul.f32 %v2658, %v2676
        %v2716 = vmul.f32 %v2663, %v2676
        %v2717 = vmul.f32 %v2668, %v2676
        %v2718 = vmul.f32 %v2673, %v2676
        %v2719 = vadd.f32 %v2386, %v2678
        %v2720 = vadd.f32 %v2387, %v2679
        %v2721 = vadd.f32 %v2388, %v2680
        %v2722 = vadd.f32 %v2389, %v2681
        %v2723 = vadd.f32 %v2390, %v2682
        %v2724 = vadd.f32 %v2391, %v2683
        %v2725 = vadd.f32 %v2392, %v2684
        %v2726 = vadd.f32 %v2393, %v2685
        %v2727 = vadd.f32 %v2394, %v2686
        %v2728 = vadd.f32 %v2395, %v2687
        %v2729 = vadd.f32 %v2396, %v2688
        %v2730 = vadd.f32 %v2397, %v2689
        %v2731 = vadd.f32 %v2398, %v2690
        %v2732 = vadd.f32 %v2399, %v2691
        %v2733 = vadd.f32 %v2400, %v2692
        %v2734 = vadd.f32 %v2401, %v2693
        %v2735 = vadd.f32 %v2402, %v2694
        %v2736 = vadd.f32 %v2403, %v2695
        %v2737 = vadd.f32 %v2404, %v2696
        %v2738 = vadd.f32 %v2405, %v2697
        %v2739 = vadd.f32 %v2406, %v2698
        %v2740 = vadd.f32 %v2407, %v2699
        %v2741 = vadd.f32 %v2408, %v2700
        %v2742 = vadd.f32 %v2409, %v2701
        %v2743 = vadd.f32 %v2410, %v2702
        %v2744 = vadd.f32 %v2411, %v2703
        %v2745 = vadd.f32 %v2412, %v2704
        %v2746 = vadd.f32 %v2413, %v2705
        %v2747 = vadd.f32 %v2414, %v2706
        %v2748 = vadd.f32 %v2415, %v2707
        %v2749 = vadd.f32 %v2416, %v2708
        %v2750 = vadd.f32 %v2417, %v2709
        %v2751 = vadd.f32 %v2418, %v2710
        %v2752 = vadd.f32 %v2419, %v2711
        %v2753 = vadd.f32 %v2420, %v2712
        %v2754 = vadd.f32 %v2421, %v2713
        %v2755 = vadd.f32 %v2422, %v2714
        %v2756 = vadd.f32 %v2423, %v2715
        %v2757 = vadd.f32 %v2424, %v2716
        %v2758 = vadd.f32 %v2425, %v2717
        %v2759 = vadd.f32 %v2426, %v2718
        %v2760 = vld [vmem:[%s437 + $0x25] sm:$0xff]
        %v2761 = vld [vmem:[%s437 + $0x2d] sm:$0xff]
        %v2762 = vld [vmem:[%s437 + $0x35] sm:$0xff]
        %v2763 = vld [vmem:[%s437 + $0x3d] sm:$0xff]
        %v2764 = vld [vmem:[%s437 + $0x45] sm:$0xff]
        %v2765 = vld [vmem:[%s437 + $0x4d] sm:$0xff]
        %v2766 = vld [vmem:[%s437 + $0x55] sm:$0xff]
        %v2767 = vld [vmem:[%s437 + $0x5d] sm:$0xff]
        %v2768 = vld [vmem:[%s437 + $0x65] sm:$0xff]
        %v2769 = vld [vmem:[%s437 + $0x6d] sm:$0xff]
        %v2770 = vld [vmem:[%s437 + $0x75] sm:$0xff]
        %v2771 = vld [vmem:[%s437 + $0x7d] sm:$0xff]
        %v2772 = vld [vmem:[%s437 + $0x85] sm:$0xff]
        %v2773 = vld [vmem:[%s437 + $0x8d] sm:$0xff]
        %v2774 = vld [vmem:[%s437 + $0x95] sm:$0xff]
        %v2775 = vld [vmem:[%s437 + $0x9d] sm:$0xff]
        %v2776 = vld [vmem:[%s437 + $0xa5] sm:$0xff]
        %v2777 = vld [vmem:[%s437 + $0xad] sm:$0xff]
        %v2778 = vld [vmem:[%s437 + $0xb5] sm:$0xff]
        %v2779 = vld [vmem:[%s437 + $0xbd] sm:$0xff]
        %v2780 = vld [vmem:[%s437 + $0xc5] sm:$0xff]
        %v2781 = vld [vmem:[%s437 + $0xcd] sm:$0xff]
        %v2782 = vld [vmem:[%s437 + $0xd5] sm:$0xff]
        %v2783 = vld [vmem:[%s437 + $0xdd] sm:$0xff]
        %v2784 = vld [vmem:[%s437 + $0xe5] sm:$0xff]
        %v2785 = vld [vmem:[%s437 + $0xed] sm:$0xff]
        %v2786 = vld [vmem:[%s437 + $0xf5] sm:$0xff]
        %v2787 = vld [vmem:[%s437 + $0xfd] sm:$0xff]
        %v2788 = vld [vmem:[%s437 + $0x105] sm:$0xff]
        %v2789 = vld [vmem:[%s437 + $0x10d] sm:$0xff]
        %v2790 = vld [vmem:[%s437 + $0x115] sm:$0xff]
        %v2791 = vld [vmem:[%s437 + $0x11d] sm:$0xff]
        %v2792 = vld [vmem:[%s437 + $0x125] sm:$0xff]
        %v2793 = vld [vmem:[%s437 + $0x12d] sm:$0xff]
        %v2794 = vld [vmem:[%s437 + $0x135] sm:$0xff]
        %v2795 = vld [vmem:[%s437 + $0x13d] sm:$0xff]
        %v2796 = vld [vmem:[%s437 + $0x145] sm:$0xff]
        %v2797 = vld [vmem:[%s437 + $0x14d] sm:$0xff]
        %v2798 = vld [vmem:[%s437 + $0x155] sm:$0xff]
        %v2799 = vld [vmem:[%s437 + $0x15d] sm:$0xff]
        %v2800 = vld [vmem:[%s437 + $0x165] sm:$0xf]
        %s2801 = scalar_lea.vmem %s1, 7
        %v2802 = vld [vmem:[%s2801] sm:$0x1]
        %2804 = vset.pattern.permute.xlu0 0
        %2805 = vperm.xlu0 %2804, %v2760
        %v2806 = vpop.permute.xlu0 %2805
        %2809 = vset.pattern.permute.xlu0 0
        %2810 = vperm.xlu0 %2809, %v2761
        %v2811 = vpop.permute.xlu0 %2810
        %2814 = vset.pattern.permute.xlu0 0
        %2815 = vperm.xlu0 %2814, %v2762
        %v2816 = vpop.permute.xlu0 %2815
        %2819 = vset.pattern.permute.xlu0 0
        %2820 = vperm.xlu0 %2819, %v2763
        %v2821 = vpop.permute.xlu0 %2820
        %2824 = vset.pattern.permute.xlu0 0
        %2825 = vperm.xlu0 %2824, %v2764
        %v2826 = vpop.permute.xlu0 %2825
        %2829 = vset.pattern.permute.xlu0 0
        %2830 = vperm.xlu0 %2829, %v2765
        %v2831 = vpop.permute.xlu0 %2830
        %2834 = vset.pattern.permute.xlu0 0
        %2835 = vperm.xlu0 %2834, %v2766
        %v2836 = vpop.permute.xlu0 %2835
        %2839 = vset.pattern.permute.xlu0 0
        %2840 = vperm.xlu0 %2839, %v2767
        %v2841 = vpop.permute.xlu0 %2840
        %2844 = vset.pattern.permute.xlu0 0
        %2845 = vperm.xlu0 %2844, %v2768
        %v2846 = vpop.permute.xlu0 %2845
        %2849 = vset.pattern.permute.xlu0 0
        %2850 = vperm.xlu0 %2849, %v2769
        %v2851 = vpop.permute.xlu0 %2850
        %2854 = vset.pattern.permute.xlu0 0
        %2855 = vperm.xlu0 %2854, %v2770
        %v2856 = vpop.permute.xlu0 %2855
        %2859 = vset.pattern.permute.xlu0 0
        %2860 = vperm.xlu0 %2859, %v2771
        %v2861 = vpop.permute.xlu0 %2860
        %2864 = vset.pattern.permute.xlu0 0
        %2865 = vperm.xlu0 %2864, %v2772
        %v2866 = vpop.permute.xlu0 %2865
        %2869 = vset.pattern.permute.xlu0 0
        %2870 = vperm.xlu0 %2869, %v2773
        %v2871 = vpop.permute.xlu0 %2870
        %2874 = vset.pattern.permute.xlu0 0
        %2875 = vperm.xlu0 %2874, %v2774
        %v2876 = vpop.permute.xlu0 %2875
        %2879 = vset.pattern.permute.xlu0 0
        %2880 = vperm.xlu0 %2879, %v2775
        %v2881 = vpop.permute.xlu0 %2880
        %2884 = vset.pattern.permute.xlu0 0
        %2885 = vperm.xlu0 %2884, %v2776
        %v2886 = vpop.permute.xlu0 %2885
        %2889 = vset.pattern.permute.xlu0 0
        %2890 = vperm.xlu0 %2889, %v2777
        %v2891 = vpop.permute.xlu0 %2890
        %2894 = vset.pattern.permute.xlu0 0
        %2895 = vperm.xlu0 %2894, %v2778
        %v2896 = vpop.permute.xlu0 %2895
        %2899 = vset.pattern.permute.xlu0 0
        %2900 = vperm.xlu0 %2899, %v2779
        %v2901 = vpop.permute.xlu0 %2900
        %2904 = vset.pattern.permute.xlu0 0
        %2905 = vperm.xlu0 %2904, %v2780
        %v2906 = vpop.permute.xlu0 %2905
        %2909 = vset.pattern.permute.xlu0 0
        %2910 = vperm.xlu0 %2909, %v2781
        %v2911 = vpop.permute.xlu0 %2910
        %2914 = vset.pattern.permute.xlu0 0
        %2915 = vperm.xlu0 %2914, %v2782
        %v2916 = vpop.permute.xlu0 %2915
        %2919 = vset.pattern.permute.xlu0 0
        %2920 = vperm.xlu0 %2919, %v2783
        %v2921 = vpop.permute.xlu0 %2920
        %2924 = vset.pattern.permute.xlu0 0
        %2925 = vperm.xlu0 %2924, %v2784
        %v2926 = vpop.permute.xlu0 %2925
        %2929 = vset.pattern.permute.xlu0 0
        %2930 = vperm.xlu0 %2929, %v2785
        %v2931 = vpop.permute.xlu0 %2930
        %2934 = vset.pattern.permute.xlu0 0
        %2935 = vperm.xlu0 %2934, %v2786
        %v2936 = vpop.permute.xlu0 %2935
        %2939 = vset.pattern.permute.xlu0 0
        %2940 = vperm.xlu0 %2939, %v2787
        %v2941 = vpop.permute.xlu0 %2940
        %2944 = vset.pattern.permute.xlu0 0
        %2945 = vperm.xlu0 %2944, %v2788
        %v2946 = vpop.permute.xlu0 %2945
        %2949 = vset.pattern.permute.xlu0 0
        %2950 = vperm.xlu0 %2949, %v2789
        %v2951 = vpop.permute.xlu0 %2950
        %2954 = vset.pattern.permute.xlu0 0
        %2955 = vperm.xlu0 %2954, %v2790
        %v2956 = vpop.permute.xlu0 %2955
        %2959 = vset.pattern.permute.xlu0 0
        %2960 = vperm.xlu0 %2959, %v2791
        %v2961 = vpop.permute.xlu0 %2960
        %2964 = vset.pattern.permute.xlu0 0
        %2965 = vperm.xlu0 %2964, %v2792
        %v2966 = vpop.permute.xlu0 %2965
        %2969 = vset.pattern.permute.xlu0 0
        %2970 = vperm.xlu0 %2969, %v2793
        %v2971 = vpop.permute.xlu0 %2970
        %2974 = vset.pattern.permute.xlu0 0
        %2975 = vperm.xlu0 %2974, %v2794
        %v2976 = vpop.permute.xlu0 %2975
        %2979 = vset.pattern.permute.xlu0 0
        %2980 = vperm.xlu0 %2979, %v2795
        %v2981 = vpop.permute.xlu0 %2980
        %2984 = vset.pattern.permute.xlu0 0
        %2985 = vperm.xlu0 %2984, %v2796
        %v2986 = vpop.permute.xlu0 %2985
        %2989 = vset.pattern.permute.xlu0 0
        %2990 = vperm.xlu0 %2989, %v2797
        %v2991 = vpop.permute.xlu0 %2990
        %2994 = vset.pattern.permute.xlu0 0
        %2995 = vperm.xlu0 %2994, %v2798
        %v2996 = vpop.permute.xlu0 %2995
        %2999 = vset.pattern.permute.xlu0 0
        %3000 = vperm.xlu0 %2999, %v2799
        %v3001 = vpop.permute.xlu0 %3000
        %3004 = vset.pattern.permute.xlu0 0
        %3005 = vperm.xlu0 %3004, %v2800
        %v3006 = vpop.permute.xlu0 %3005
        %v3009 = vperm.slane %v2802, 0
        %v3011 = vmul.f32 %v2806, %v3009
        %v3012 = vmul.f32 %v2811, %v3009
        %v3013 = vmul.f32 %v2816, %v3009
        %v3014 = vmul.f32 %v2821, %v3009
        %v3015 = vmul.f32 %v2826, %v3009
        %v3016 = vmul.f32 %v2831, %v3009
        %v3017 = vmul.f32 %v2836, %v3009
        %v3018 = vmul.f32 %v2841, %v3009
        %v3019 = vmul.f32 %v2846, %v3009
        %v3020 = vmul.f32 %v2851, %v3009
        %v3021 = vmul.f32 %v2856, %v3009
        %v3022 = vmul.f32 %v2861, %v3009
        %v3023 = vmul.f32 %v2866, %v3009
        %v3024 = vmul.f32 %v2871, %v3009
        %v3025 = vmul.f32 %v2876, %v3009
        %v3026 = vmul.f32 %v2881, %v3009
        %v3027 = vmul.f32 %v2886, %v3009
        %v3028 = vmul.f32 %v2891, %v3009
        %v3029 = vmul.f32 %v2896, %v3009
        %v3030 = vmul.f32 %v2901, %v3009
        %v3031 = vmul.f32 %v2906, %v3009
        %v3032 = vmul.f32 %v2911, %v3009
        %v3033 = vmul.f32 %v2916, %v3009
        %v3034 = vmul.f32 %v2921, %v3009
        %v3035 = vmul.f32 %v2926, %v3009
        %v3036 = vmul.f32 %v2931, %v3009
        %v3037 = vmul.f32 %v2936, %v3009
        %v3038 = vmul.f32 %v2941, %v3009
        %v3039 = vmul.f32 %v2946, %v3009
        %v3040 = vmul.f32 %v2951, %v3009
        %v3041 = vmul.f32 %v2956, %v3009
        %v3042 = vmul.f32 %v2961, %v3009
        %v3043 = vmul.f32 %v2966, %v3009
        %v3044 = vmul.f32 %v2971, %v3009
        %v3045 = vmul.f32 %v2976, %v3009
        %v3046 = vmul.f32 %v2981, %v3009
        %v3047 = vmul.f32 %v2986, %v3009
        %v3048 = vmul.f32 %v2991, %v3009
        %v3049 = vmul.f32 %v2996, %v3009
        %v3050 = vmul.f32 %v3001, %v3009
        %v3051 = vmul.f32 %v3006, %v3009
        %v3052 = vadd.f32 %v2719, %v3011
        %v3053 = vadd.f32 %v2720, %v3012
        %v3054 = vadd.f32 %v2721, %v3013
        %v3055 = vadd.f32 %v2722, %v3014
        %v3056 = vadd.f32 %v2723, %v3015
        %v3057 = vadd.f32 %v2724, %v3016
        %v3058 = vadd.f32 %v2725, %v3017
        %v3059 = vadd.f32 %v2726, %v3018
        %v3060 = vadd.f32 %v2727, %v3019
        %v3061 = vadd.f32 %v2728, %v3020
        %v3062 = vadd.f32 %v2729, %v3021
        %v3063 = vadd.f32 %v2730, %v3022
        %v3064 = vadd.f32 %v2731, %v3023
        %v3065 = vadd.f32 %v2732, %v3024
        %v3066 = vadd.f32 %v2733, %v3025
        %v3067 = vadd.f32 %v2734, %v3026
        %v3068 = vadd.f32 %v2735, %v3027
        %v3069 = vadd.f32 %v2736, %v3028
        %v3070 = vadd.f32 %v2737, %v3029
        %v3071 = vadd.f32 %v2738, %v3030
        %v3072 = vadd.f32 %v2739, %v3031
        %v3073 = vadd.f32 %v2740, %v3032
        %v3074 = vadd.f32 %v2741, %v3033
        %v3075 = vadd.f32 %v2742, %v3034
        %v3076 = vadd.f32 %v2743, %v3035
        %v3077 = vadd.f32 %v2744, %v3036
        %v3078 = vadd.f32 %v2745, %v3037
        %v3079 = vadd.f32 %v2746, %v3038
        %v3080 = vadd.f32 %v2747, %v3039
        %v3081 = vadd.f32 %v2748, %v3040
        %v3082 = vadd.f32 %v2749, %v3041
        %v3083 = vadd.f32 %v2750, %v3042
        %v3084 = vadd.f32 %v2751, %v3043
        %v3085 = vadd.f32 %v2752, %v3044
        %v3086 = vadd.f32 %v2753, %v3045
        %v3087 = vadd.f32 %v2754, %v3046
        %v3088 = vadd.f32 %v2755, %v3047
        %v3089 = vadd.f32 %v2756, %v3048
        %v3090 = vadd.f32 %v2757, %v3049
        %v3091 = vadd.f32 %v2758, %v3050
        %v3092 = vadd.f32 %v2759, %v3051
        %v3093 = vld [vmem:[%s437 + $0x26] sm:$0xff]
        %v3094 = vld [vmem:[%s437 + $0x2e] sm:$0xff]
        %v3095 = vld [vmem:[%s437 + $0x36] sm:$0xff]
        %v3096 = vld [vmem:[%s437 + $0x3e] sm:$0xff]
        %v3097 = vld [vmem:[%s437 + $0x46] sm:$0xff]
        %v3098 = vld [vmem:[%s437 + $0x4e] sm:$0xff]
        %v3099 = vld [vmem:[%s437 + $0x56] sm:$0xff]
        %v3100 = vld [vmem:[%s437 + $0x5e] sm:$0xff]
        %v3101 = vld [vmem:[%s437 + $0x66] sm:$0xff]
        %v3102 = vld [vmem:[%s437 + $0x6e] sm:$0xff]
        %v3103 = vld [vmem:[%s437 + $0x76] sm:$0xff]
        %v3104 = vld [vmem:[%s437 + $0x7e] sm:$0xff]
        %v3105 = vld [vmem:[%s437 + $0x86] sm:$0xff]
        %v3106 = vld [vmem:[%s437 + $0x8e] sm:$0xff]
        %v3107 = vld [vmem:[%s437 + $0x96] sm:$0xff]
        %v3108 = vld [vmem:[%s437 + $0x9e] sm:$0xff]
        %v3109 = vld [vmem:[%s437 + $0xa6] sm:$0xff]
        %v3110 = vld [vmem:[%s437 + $0xae] sm:$0xff]
        %v3111 = vld [vmem:[%s437 + $0xb6] sm:$0xff]
        %v3112 = vld [vmem:[%s437 + $0xbe] sm:$0xff]
        %v3113 = vld [vmem:[%s437 + $0xc6] sm:$0xff]
        %v3114 = vld [vmem:[%s437 + $0xce] sm:$0xff]
        %v3115 = vld [vmem:[%s437 + $0xd6] sm:$0xff]
        %v3116 = vld [vmem:[%s437 + $0xde] sm:$0xff]
        %v3117 = vld [vmem:[%s437 + $0xe6] sm:$0xff]
        %v3118 = vld [vmem:[%s437 + $0xee] sm:$0xff]
        %v3119 = vld [vmem:[%s437 + $0xf6] sm:$0xff]
        %v3120 = vld [vmem:[%s437 + $0xfe] sm:$0xff]
        %v3121 = vld [vmem:[%s437 + $0x106] sm:$0xff]
        %v3122 = vld [vmem:[%s437 + $0x10e] sm:$0xff]
        %v3123 = vld [vmem:[%s437 + $0x116] sm:$0xff]
        %v3124 = vld [vmem:[%s437 + $0x11e] sm:$0xff]
        %v3125 = vld [vmem:[%s437 + $0x126] sm:$0xff]
        %v3126 = vld [vmem:[%s437 + $0x12e] sm:$0xff]
        %v3127 = vld [vmem:[%s437 + $0x136] sm:$0xff]
        %v3128 = vld [vmem:[%s437 + $0x13e] sm:$0xff]
        %v3129 = vld [vmem:[%s437 + $0x146] sm:$0xff]
        %v3130 = vld [vmem:[%s437 + $0x14e] sm:$0xff]
        %v3131 = vld [vmem:[%s437 + $0x156] sm:$0xff]
        %v3132 = vld [vmem:[%s437 + $0x15e] sm:$0xff]
        %v3133 = vld [vmem:[%s437 + $0x166] sm:$0xf]
        %s3134 = scalar_lea.vmem %s1, 8
        %v3135 = vld [vmem:[%s3134] sm:$0x1]
        %3137 = vset.pattern.permute.xlu0 0
        %3138 = vperm.xlu0 %3137, %v3093
        %v3139 = vpop.permute.xlu0 %3138
        %3142 = vset.pattern.permute.xlu0 0
        %3143 = vperm.xlu0 %3142, %v3094
        %v3144 = vpop.permute.xlu0 %3143
        %3147 = vset.pattern.permute.xlu0 0
        %3148 = vperm.xlu0 %3147, %v3095
        %v3149 = vpop.permute.xlu0 %3148
        %3152 = vset.pattern.permute.xlu0 0
        %3153 = vperm.xlu0 %3152, %v3096
        %v3154 = vpop.permute.xlu0 %3153
        %3157 = vset.pattern.permute.xlu0 0
        %3158 = vperm.xlu0 %3157, %v3097
        %v3159 = vpop.permute.xlu0 %3158
        %3162 = vset.pattern.permute.xlu0 0
        %3163 = vperm.xlu0 %3162, %v3098
        %v3164 = vpop.permute.xlu0 %3163
        %3167 = vset.pattern.permute.xlu0 0
        %3168 = vperm.xlu0 %3167, %v3099
        %v3169 = vpop.permute.xlu0 %3168
        %3172 = vset.pattern.permute.xlu0 0
        %3173 = vperm.xlu0 %3172, %v3100
        %v3174 = vpop.permute.xlu0 %3173
        %3177 = vset.pattern.permute.xlu0 0
        %3178 = vperm.xlu0 %3177, %v3101
        %v3179 = vpop.permute.xlu0 %3178
        %3182 = vset.pattern.permute.xlu0 0
        %3183 = vperm.xlu0 %3182, %v3102
        %v3184 = vpop.permute.xlu0 %3183
        %3187 = vset.pattern.permute.xlu0 0
        %3188 = vperm.xlu0 %3187, %v3103
        %v3189 = vpop.permute.xlu0 %3188
        %3192 = vset.pattern.permute.xlu0 0
        %3193 = vperm.xlu0 %3192, %v3104
        %v3194 = vpop.permute.xlu0 %3193
        %3197 = vset.pattern.permute.xlu0 0
        %3198 = vperm.xlu0 %3197, %v3105
        %v3199 = vpop.permute.xlu0 %3198
        %3202 = vset.pattern.permute.xlu0 0
        %3203 = vperm.xlu0 %3202, %v3106
        %v3204 = vpop.permute.xlu0 %3203
        %3207 = vset.pattern.permute.xlu0 0
        %3208 = vperm.xlu0 %3207, %v3107
        %v3209 = vpop.permute.xlu0 %3208
        %3212 = vset.pattern.permute.xlu0 0
        %3213 = vperm.xlu0 %3212, %v3108
        %v3214 = vpop.permute.xlu0 %3213
        %3217 = vset.pattern.permute.xlu0 0
        %3218 = vperm.xlu0 %3217, %v3109
        %v3219 = vpop.permute.xlu0 %3218
        %3222 = vset.pattern.permute.xlu0 0
        %3223 = vperm.xlu0 %3222, %v3110
        %v3224 = vpop.permute.xlu0 %3223
        %3227 = vset.pattern.permute.xlu0 0
        %3228 = vperm.xlu0 %3227, %v3111
        %v3229 = vpop.permute.xlu0 %3228
        %3232 = vset.pattern.permute.xlu0 0
        %3233 = vperm.xlu0 %3232, %v3112
        %v3234 = vpop.permute.xlu0 %3233
        %3237 = vset.pattern.permute.xlu0 0
        %3238 = vperm.xlu0 %3237, %v3113
        %v3239 = vpop.permute.xlu0 %3238
        %3242 = vset.pattern.permute.xlu0 0
        %3243 = vperm.xlu0 %3242, %v3114
        %v3244 = vpop.permute.xlu0 %3243
        %3247 = vset.pattern.permute.xlu0 0
        %3248 = vperm.xlu0 %3247, %v3115
        %v3249 = vpop.permute.xlu0 %3248
        %3252 = vset.pattern.permute.xlu0 0
        %3253 = vperm.xlu0 %3252, %v3116
        %v3254 = vpop.permute.xlu0 %3253
        %3257 = vset.pattern.permute.xlu0 0
        %3258 = vperm.xlu0 %3257, %v3117
        %v3259 = vpop.permute.xlu0 %3258
        %3262 = vset.pattern.permute.xlu0 0
        %3263 = vperm.xlu0 %3262, %v3118
        %v3264 = vpop.permute.xlu0 %3263
        %3267 = vset.pattern.permute.xlu0 0
        %3268 = vperm.xlu0 %3267, %v3119
        %v3269 = vpop.permute.xlu0 %3268
        %3272 = vset.pattern.permute.xlu0 0
        %3273 = vperm.xlu0 %3272, %v3120
        %v3274 = vpop.permute.xlu0 %3273
        %3277 = vset.pattern.permute.xlu0 0
        %3278 = vperm.xlu0 %3277, %v3121
        %v3279 = vpop.permute.xlu0 %3278
        %3282 = vset.pattern.permute.xlu0 0
        %3283 = vperm.xlu0 %3282, %v3122
        %v3284 = vpop.permute.xlu0 %3283
        %3287 = vset.pattern.permute.xlu0 0
        %3288 = vperm.xlu0 %3287, %v3123
        %v3289 = vpop.permute.xlu0 %3288
        %3292 = vset.pattern.permute.xlu0 0
        %3293 = vperm.xlu0 %3292, %v3124
        %v3294 = vpop.permute.xlu0 %3293
        %3297 = vset.pattern.permute.xlu0 0
        %3298 = vperm.xlu0 %3297, %v3125
        %v3299 = vpop.permute.xlu0 %3298
        %3302 = vset.pattern.permute.xlu0 0
        %3303 = vperm.xlu0 %3302, %v3126
        %v3304 = vpop.permute.xlu0 %3303
        %3307 = vset.pattern.permute.xlu0 0
        %3308 = vperm.xlu0 %3307, %v3127
        %v3309 = vpop.permute.xlu0 %3308
        %3312 = vset.pattern.permute.xlu0 0
        %3313 = vperm.xlu0 %3312, %v3128
        %v3314 = vpop.permute.xlu0 %3313
        %3317 = vset.pattern.permute.xlu0 0
        %3318 = vperm.xlu0 %3317, %v3129
        %v3319 = vpop.permute.xlu0 %3318
        %3322 = vset.pattern.permute.xlu0 0
        %3323 = vperm.xlu0 %3322, %v3130
        %v3324 = vpop.permute.xlu0 %3323
        %3327 = vset.pattern.permute.xlu0 0
        %3328 = vperm.xlu0 %3327, %v3131
        %v3329 = vpop.permute.xlu0 %3328
        %3332 = vset.pattern.permute.xlu0 0
        %3333 = vperm.xlu0 %3332, %v3132
        %v3334 = vpop.permute.xlu0 %3333
        %3337 = vset.pattern.permute.xlu0 0
        %3338 = vperm.xlu0 %3337, %v3133
        %v3339 = vpop.permute.xlu0 %3338
        %v3342 = vperm.slane %v3135, 0
        %v3344 = vmul.f32 %v3139, %v3342
        %v3345 = vmul.f32 %v3144, %v3342
        %v3346 = vmul.f32 %v3149, %v3342
        %v3347 = vmul.f32 %v3154, %v3342
        %v3348 = vmul.f32 %v3159, %v3342
        %v3349 = vmul.f32 %v3164, %v3342
        %v3350 = vmul.f32 %v3169, %v3342
        %v3351 = vmul.f32 %v3174, %v3342
        %v3352 = vmul.f32 %v3179, %v3342
        %v3353 = vmul.f32 %v3184, %v3342
        %v3354 = vmul.f32 %v3189, %v3342
        %v3355 = vmul.f32 %v3194, %v3342
        %v3356 = vmul.f32 %v3199, %v3342
        %v3357 = vmul.f32 %v3204, %v3342
        %v3358 = vmul.f32 %v3209, %v3342
        %v3359 = vmul.f32 %v3214, %v3342
        %v3360 = vmul.f32 %v3219, %v3342
        %v3361 = vmul.f32 %v3224, %v3342
        %v3362 = vmul.f32 %v3229, %v3342
        %v3363 = vmul.f32 %v3234, %v3342
        %v3364 = vmul.f32 %v3239, %v3342
        %v3365 = vmul.f32 %v3244, %v3342
        %v3366 = vmul.f32 %v3249, %v3342
        %v3367 = vmul.f32 %v3254, %v3342
        %v3368 = vmul.f32 %v3259, %v3342
        %v3369 = vmul.f32 %v3264, %v3342
        %v3370 = vmul.f32 %v3269, %v3342
        %v3371 = vmul.f32 %v3274, %v3342
        %v3372 = vmul.f32 %v3279, %v3342
        %v3373 = vmul.f32 %v3284, %v3342
        %v3374 = vmul.f32 %v3289, %v3342
        %v3375 = vmul.f32 %v3294, %v3342
        %v3376 = vmul.f32 %v3299, %v3342
        %v3377 = vmul.f32 %v3304, %v3342
        %v3378 = vmul.f32 %v3309, %v3342
        %v3379 = vmul.f32 %v3314, %v3342
        %v3380 = vmul.f32 %v3319, %v3342
        %v3381 = vmul.f32 %v3324, %v3342
        %v3382 = vmul.f32 %v3329, %v3342
        %v3383 = vmul.f32 %v3334, %v3342
        %v3384 = vmul.f32 %v3339, %v3342
        %v3385 = vadd.f32 %v3052, %v3344
        %v3386 = vadd.f32 %v3053, %v3345
        %v3387 = vadd.f32 %v3054, %v3346
        %v3388 = vadd.f32 %v3055, %v3347
        %v3389 = vadd.f32 %v3056, %v3348
        %v3390 = vadd.f32 %v3057, %v3349
        %v3391 = vadd.f32 %v3058, %v3350
        %v3392 = vadd.f32 %v3059, %v3351
        %v3393 = vadd.f32 %v3060, %v3352
        %v3394 = vadd.f32 %v3061, %v3353
        %v3395 = vadd.f32 %v3062, %v3354
        %v3396 = vadd.f32 %v3063, %v3355
        %v3397 = vadd.f32 %v3064, %v3356
        %v3398 = vadd.f32 %v3065, %v3357
        %v3399 = vadd.f32 %v3066, %v3358
        %v3400 = vadd.f32 %v3067, %v3359
        %v3401 = vadd.f32 %v3068, %v3360
        %v3402 = vadd.f32 %v3069, %v3361
        %v3403 = vadd.f32 %v3070, %v3362
        %v3404 = vadd.f32 %v3071, %v3363
        %v3405 = vadd.f32 %v3072, %v3364
        %v3406 = vadd.f32 %v3073, %v3365
        %v3407 = vadd.f32 %v3074, %v3366
        %v3408 = vadd.f32 %v3075, %v3367
        %v3409 = vadd.f32 %v3076, %v3368
        %v3410 = vadd.f32 %v3077, %v3369
        %v3411 = vadd.f32 %v3078, %v3370
        %v3412 = vadd.f32 %v3079, %v3371
        %v3413 = vadd.f32 %v3080, %v3372
        %v3414 = vadd.f32 %v3081, %v3373
        %v3415 = vadd.f32 %v3082, %v3374
        %v3416 = vadd.f32 %v3083, %v3375
        %v3417 = vadd.f32 %v3084, %v3376
        %v3418 = vadd.f32 %v3085, %v3377
        %v3419 = vadd.f32 %v3086, %v3378
        %v3420 = vadd.f32 %v3087, %v3379
        %v3421 = vadd.f32 %v3088, %v3380
        %v3422 = vadd.f32 %v3089, %v3381
        %v3423 = vadd.f32 %v3090, %v3382
        %v3424 = vadd.f32 %v3091, %v3383
        %v3425 = vadd.f32 %v3092, %v3384
        %v3426 = vld [vmem:[%s2] sm:$0x1]
        %v3428 = vperm.slane %v3426, 0
        %v3430 = vadd.f32 %v3385, %v3428
        %v3431 = vadd.f32 %v3386, %v3428
        %v3432 = vadd.f32 %v3387, %v3428
        %v3433 = vadd.f32 %v3388, %v3428
        %v3434 = vadd.f32 %v3389, %v3428
        %v3435 = vadd.f32 %v3390, %v3428
        %v3436 = vadd.f32 %v3391, %v3428
        %v3437 = vadd.f32 %v3392, %v3428
        %v3438 = vadd.f32 %v3393, %v3428
        %v3439 = vadd.f32 %v3394, %v3428
        %v3440 = vadd.f32 %v3395, %v3428
        %v3441 = vadd.f32 %v3396, %v3428
        %v3442 = vadd.f32 %v3397, %v3428
        %v3443 = vadd.f32 %v3398, %v3428
        %v3444 = vadd.f32 %v3399, %v3428
        %v3445 = vadd.f32 %v3400, %v3428
        %v3446 = vadd.f32 %v3401, %v3428
        %v3447 = vadd.f32 %v3402, %v3428
        %v3448 = vadd.f32 %v3403, %v3428
        %v3449 = vadd.f32 %v3404, %v3428
        %v3450 = vadd.f32 %v3405, %v3428
        %v3451 = vadd.f32 %v3406, %v3428
        %v3452 = vadd.f32 %v3407, %v3428
        %v3453 = vadd.f32 %v3408, %v3428
        %v3454 = vadd.f32 %v3409, %v3428
        %v3455 = vadd.f32 %v3410, %v3428
        %v3456 = vadd.f32 %v3411, %v3428
        %v3457 = vadd.f32 %v3412, %v3428
        %v3458 = vadd.f32 %v3413, %v3428
        %v3459 = vadd.f32 %v3414, %v3428
        %v3460 = vadd.f32 %v3415, %v3428
        %v3461 = vadd.f32 %v3416, %v3428
        %v3462 = vadd.f32 %v3417, %v3428
        %v3463 = vadd.f32 %v3418, %v3428
        %v3464 = vadd.f32 %v3419, %v3428
        %v3465 = vadd.f32 %v3420, %v3428
        %v3466 = vadd.f32 %v3421, %v3428
        %v3467 = vadd.f32 %v3422, %v3428
        %v3468 = vadd.f32 %v3423, %v3428
        %v3469 = vadd.f32 %v3424, %v3428
        %v3470 = vadd.f32 %v3425, %v3428
        %v3471 = vmax.f32 %v3430, 0.0
        %v3472 = vmax.f32 %v3431, 0.0
        %v3473 = vmax.f32 %v3432, 0.0
        %v3474 = vmax.f32 %v3433, 0.0
        %v3475 = vmax.f32 %v3434, 0.0
        %v3476 = vmax.f32 %v3435, 0.0
        %v3477 = vmax.f32 %v3436, 0.0
        %v3478 = vmax.f32 %v3437, 0.0
        %v3479 = vmax.f32 %v3438, 0.0
        %v3480 = vmax.f32 %v3439, 0.0
        %v3481 = vmax.f32 %v3440, 0.0
        %v3482 = vmax.f32 %v3441, 0.0
        %v3483 = vmax.f32 %v3442, 0.0
        %v3484 = vmax.f32 %v3443, 0.0
        %v3485 = vmax.f32 %v3444, 0.0
        %v3486 = vmax.f32 %v3445, 0.0
        %v3487 = vmax.f32 %v3446, 0.0
        %v3488 = vmax.f32 %v3447, 0.0
        %v3489 = vmax.f32 %v3448, 0.0
        %v3490 = vmax.f32 %v3449, 0.0
        %v3491 = vmax.f32 %v3450, 0.0
        %v3492 = vmax.f32 %v3451, 0.0
        %v3493 = vmax.f32 %v3452, 0.0
        %v3494 = vmax.f32 %v3453, 0.0
        %v3495 = vmax.f32 %v3454, 0.0
        %v3496 = vmax.f32 %v3455, 0.0
        %v3497 = vmax.f32 %v3456, 0.0
        %v3498 = vmax.f32 %v3457, 0.0
        %v3499 = vmax.f32 %v3458, 0.0
        %v3500 = vmax.f32 %v3459, 0.0
        %v3501 = vmax.f32 %v3460, 0.0
        %v3502 = vmax.f32 %v3461, 0.0
        %v3503 = vmax.f32 %v3462, 0.0
        %v3504 = vmax.f32 %v3463, 0.0
        %v3505 = vmax.f32 %v3464, 0.0
        %v3506 = vmax.f32 %v3465, 0.0
        %v3507 = vmax.f32 %v3466, 0.0
        %v3508 = vmax.f32 %v3467, 0.0
        %v3509 = vmax.f32 %v3468, 0.0
        %v3510 = vmax.f32 %v3469, 0.0
        %v3511 = vmax.f32 %v3470, 0.0
        %3512 = vst.msk [vmem:[#allocation5] sm:$0xff] %vm438, %v3471
        %3513 = vst.msk [vmem:[#allocation5 + $0x8] sm:$0xff] %vm438, %v3472
        %3514 = vst.msk [vmem:[#allocation5 + $0x10] sm:$0xff] %vm438, %v3473
        %3515 = vst.msk [vmem:[#allocation5 + $0x18] sm:$0xff] %vm438, %v3474
        %3516 = vst.msk [vmem:[#allocation5 + $0x20] sm:$0xff] %vm438, %v3475
        %3517 = vst.msk [vmem:[#allocation5 + $0x28] sm:$0xff] %vm438, %v3476
        %3518 = vst.msk [vmem:[#allocation5 + $0x30] sm:$0xff] %vm438, %v3477
        %3519 = vst.msk [vmem:[#allocation5 + $0x38] sm:$0xff] %vm438, %v3478
        %3520 = vst.msk [vmem:[#allocation5 + $0x40] sm:$0xff] %vm438, %v3479
        %3521 = vst.msk [vmem:[#allocation5 + $0x48] sm:$0xff] %vm438, %v3480
        %3522 = vst.msk [vmem:[#allocation5 + $0x50] sm:$0xff] %vm438, %v3481
        %3523 = vst.msk [vmem:[#allocation5 + $0x58] sm:$0xff] %vm438, %v3482
        %3524 = vst.msk [vmem:[#allocation5 + $0x60] sm:$0xff] %vm438, %v3483
        %3525 = vst.msk [vmem:[#allocation5 + $0x68] sm:$0xff] %vm438, %v3484
        %3526 = vst.msk [vmem:[#allocation5 + $0x70] sm:$0xff] %vm438, %v3485
        %3527 = vst.msk [vmem:[#allocation5 + $0x78] sm:$0xff] %vm438, %v3486
        %3528 = vst.msk [vmem:[#allocation5 + $0x80] sm:$0xff] %vm438, %v3487
        %3529 = vst.msk [vmem:[#allocation5 + $0x88] sm:$0xff] %vm438, %v3488
        %3530 = vst.msk [vmem:[#allocation5 + $0x90] sm:$0xff] %vm438, %v3489
        %3531 = vst.msk [vmem:[#allocation5 + $0x98] sm:$0xff] %vm438, %v3490
        %3532 = vst.msk [vmem:[#allocation5 + $0xa0] sm:$0xff] %vm438, %v3491
        %3533 = vst.msk [vmem:[#allocation5 + $0xa8] sm:$0xff] %vm438, %v3492
        %3534 = vst.msk [vmem:[#allocation5 + $0xb0] sm:$0xff] %vm438, %v3493
        %3535 = vst.msk [vmem:[#allocation5 + $0xb8] sm:$0xff] %vm438, %v3494
        %3536 = vst.msk [vmem:[#allocation5 + $0xc0] sm:$0xff] %vm438, %v3495
        %3537 = vst.msk [vmem:[#allocation5 + $0xc8] sm:$0xff] %vm438, %v3496
        %3538 = vst.msk [vmem:[#allocation5 + $0xd0] sm:$0xff] %vm438, %v3497
        %3539 = vst.msk [vmem:[#allocation5 + $0xd8] sm:$0xff] %vm438, %v3498
        %3540 = vst.msk [vmem:[#allocation5 + $0xe0] sm:$0xff] %vm438, %v3499
        %3541 = vst.msk [vmem:[#allocation5 + $0xe8] sm:$0xff] %vm438, %v3500
        %3542 = vst.msk [vmem:[#allocation5 + $0xf0] sm:$0xff] %vm438, %v3501
        %3543 = vst.msk [vmem:[#allocation5 + $0xf8] sm:$0xff] %vm438, %v3502
        %3544 = vst.msk [vmem:[#allocation5 + $0x100] sm:$0xff] %vm438, %v3503
        %3545 = vst.msk [vmem:[#allocation5 + $0x108] sm:$0xff] %vm438, %v3504
        %3546 = vst.msk [vmem:[#allocation5 + $0x110] sm:$0xff] %vm438, %v3505
        %3547 = vst.msk [vmem:[#allocation5 + $0x118] sm:$0xff] %vm438, %v3506
        %3548 = vst.msk [vmem:[#allocation5 + $0x120] sm:$0xff] %vm438, %v3507
        %3549 = vst.msk [vmem:[#allocation5 + $0x128] sm:$0xff] %vm438, %v3508
        %3550 = vst.msk [vmem:[#allocation5 + $0x130] sm:$0xff] %vm438, %v3509
        %3551 = vst.msk [vmem:[#allocation5 + $0x138] sm:$0xff] %vm438, %v3510
        %vm3552 = vcmask 27648
        %3553 = vst.msk [vmem:[#allocation5 + $0x140] sm:$0xf] %vm3552, %v3511
        %s3554 = scalar_lea.vmem [#allocation5], 17
        %v3555 = vld [vmem:[%s3554] ss:$2 sm:$0xff]
        %s3556 = scalar_lea.vmem [#allocation5], 33
        %v3557 = vld [vmem:[%s3556] ss:$2 sm:$0xff]
        %s3558 = scalar_lea.vmem [#allocation5], 49
        %v3559 = vld [vmem:[%s3558] ss:$2 sm:$0xff]
        %s3560 = scalar_lea.vmem [#allocation5], 65
        %v3561 = vld [vmem:[%s3560] ss:$2 sm:$0xff]
        %s3562 = scalar_lea.vmem [#allocation5], 81
        %v3563 = vld [vmem:[%s3562] ss:$2 sm:$0xff]
        %s3564 = scalar_lea.vmem [#allocation5], 97
        %v3565 = vld [vmem:[%s3564] ss:$2 sm:$0xff]
        %s3566 = scalar_lea.vmem [#allocation5], 113
        %v3567 = vld [vmem:[%s3566] ss:$2 sm:$0xff]
        %s3568 = scalar_lea.vmem [#allocation5], 129
        %v3569 = vld [vmem:[%s3568] ss:$2 sm:$0xff]
        %s3570 = scalar_lea.vmem [#allocation5], 145
        %v3571 = vld [vmem:[%s3570] ss:$2 sm:$0xff]
        %s3572 = scalar_lea.vmem [#allocation5], 161
        %v3573 = vld [vmem:[%s3572] ss:$2 sm:$0xff]
        %s3574 = scalar_lea.vmem [#allocation5], 177
        %v3575 = vld [vmem:[%s3574] ss:$2 sm:$0xff]
        %s3576 = scalar_lea.vmem [#allocation5], 193
        %v3577 = vld [vmem:[%s3576] ss:$2 sm:$0xff]
        %s3578 = scalar_lea.vmem [#allocation5], 209
        %v3579 = vld [vmem:[%s3578] ss:$2 sm:$0xff]
        %s3580 = scalar_lea.vmem [#allocation5], 225
        %v3581 = vld [vmem:[%s3580] ss:$2 sm:$0xff]
        %s3582 = scalar_lea.vmem [#allocation5], 241
        %v3583 = vld [vmem:[%s3582] ss:$2 sm:$0xff]
        %s3584 = scalar_lea.vmem [#allocation5], 257
        %v3585 = vld [vmem:[%s3584] ss:$2 sm:$0xff]
        %s3586 = scalar_lea.vmem [#allocation5], 273
        %v3587 = vld [vmem:[%s3586] ss:$2 sm:$0xff]
        %s3588 = scalar_lea.vmem [#allocation5], 289
        %v3589 = vld [vmem:[%s3588] ss:$2 sm:$0xff]
        %s3590 = scalar_lea.vmem [#allocation5], 18
        %v3591 = vld [vmem:[%s3590] ss:$2 sm:$0xff]
        %s3592 = scalar_lea.vmem [#allocation5], 34
        %v3593 = vld [vmem:[%s3592] ss:$2 sm:$0xff]
        %s3594 = scalar_lea.vmem [#allocation5], 50
        %v3595 = vld [vmem:[%s3594] ss:$2 sm:$0xff]
        %s3596 = scalar_lea.vmem [#allocation5], 66
        %v3597 = vld [vmem:[%s3596] ss:$2 sm:$0xff]
        %s3598 = scalar_lea.vmem [#allocation5], 82
        %v3599 = vld [vmem:[%s3598] ss:$2 sm:$0xff]
        %s3600 = scalar_lea.vmem [#allocation5], 98
        %v3601 = vld [vmem:[%s3600] ss:$2 sm:$0xff]
        %s3602 = scalar_lea.vmem [#allocation5], 114
        %v3603 = vld [vmem:[%s3602] ss:$2 sm:$0xff]
        %s3604 = scalar_lea.vmem [#allocation5], 130
        %v3605 = vld [vmem:[%s3604] ss:$2 sm:$0xff]
        %s3606 = scalar_lea.vmem [#allocation5], 146
        %v3607 = vld [vmem:[%s3606] ss:$2 sm:$0xff]
        %s3608 = scalar_lea.vmem [#allocation5], 162
        %v3609 = vld [vmem:[%s3608] ss:$2 sm:$0xff]
        %s3610 = scalar_lea.vmem [#allocation5], 178
        %v3611 = vld [vmem:[%s3610] ss:$2 sm:$0xff]
        %s3612 = scalar_lea.vmem [#allocation5], 194
        %v3613 = vld [vmem:[%s3612] ss:$2 sm:$0xff]
        %s3614 = scalar_lea.vmem [#allocation5], 210
        %v3615 = vld [vmem:[%s3614] ss:$2 sm:$0xff]
        %s3616 = scalar_lea.vmem [#allocation5], 226
        %v3617 = vld [vmem:[%s3616] ss:$2 sm:$0xff]
        %s3618 = scalar_lea.vmem [#allocation5], 242
        %v3619 = vld [vmem:[%s3618] ss:$2 sm:$0xff]
        %s3620 = scalar_lea.vmem [#allocation5], 258
        %v3621 = vld [vmem:[%s3620] ss:$2 sm:$0xff]
        %s3622 = scalar_lea.vmem [#allocation5], 274
        %v3623 = vld [vmem:[%s3622] ss:$2 sm:$0xff]
        %s3624 = scalar_lea.vmem [#allocation5], 290
        %v3625 = vld [vmem:[%s3624] ss:$2 sm:$0xff]
        %v3626 = vmax.f32 %v3555, %v3591
        %v3627 = vmax.f32 %v3557, %v3593
        %v3628 = vmax.f32 %v3559, %v3595
        %v3629 = vmax.f32 %v3561, %v3597
        %v3630 = vmax.f32 %v3563, %v3599
        %v3631 = vmax.f32 %v3565, %v3601
        %v3632 = vmax.f32 %v3567, %v3603
        %v3633 = vmax.f32 %v3569, %v3605
        %v3634 = vmax.f32 %v3571, %v3607
        %v3635 = vmax.f32 %v3573, %v3609
        %v3636 = vmax.f32 %v3575, %v3611
        %v3637 = vmax.f32 %v3577, %v3613
        %v3638 = vmax.f32 %v3579, %v3615
        %v3639 = vmax.f32 %v3581, %v3617
        %v3640 = vmax.f32 %v3583, %v3619
        %v3641 = vmax.f32 %v3585, %v3621
        %v3642 = vmax.f32 %v3587, %v3623
        %v3643 = vmax.f32 %v3589, %v3625
        %vm3646 = vcmask 1046528
        %v3647 = vrot.slane %v3627, 1
        %v3648 = vrot.slane %v3628, 1
        %v3649 = vsel %vm3646, %v3647, %v3648
        %v3652 = vmax.f32 %v3626, %v3649
        %v3653 = vmax.f32 %v3627, %v3648
        %v3656 = vrot.slane %v3629, 1
        %v3657 = vrot.slane %v3630, 1
        %v3658 = vsel %vm3646, %v3656, %v3657
        %v3661 = vmax.f32 %v3628, %v3658
        %v3662 = vmax.f32 %v3629, %v3657
        %v3665 = vrot.slane %v3631, 1
        %v3666 = vrot.slane %v3632, 1
        %v3667 = vsel %vm3646, %v3665, %v3666
        %v3670 = vmax.f32 %v3630, %v3667
        %v3671 = vmax.f32 %v3631, %v3666
        %v3673 = vrot.slane %v3634, 1
        %v3675 = vmax.f32 %v3632, %v3673
        %v3676 = vmax.f32 %v3633, %v3673
        %v3679 = vrot.slane %v3636, 1
        %v3680 = vrot.slane %v3637, 1
        %v3681 = vsel %vm3646, %v3679, %v3680
        %v3684 = vmax.f32 %v3635, %v3681
        %v3685 = vmax.f32 %v3636, %v3680
        %v3688 = vrot.slane %v3638, 1
        %v3689 = vrot.slane %v3639, 1
        %v3690 = vsel %vm3646, %v3688, %v3689
        %v3693 = vmax.f32 %v3637, %v3690
        %v3694 = vmax.f32 %v3638, %v3689
        %v3697 = vrot.slane %v3640, 1
        %v3698 = vrot.slane %v3641, 1
        %v3699 = vsel %vm3646, %v3697, %v3698
        %v3702 = vmax.f32 %v3639, %v3699
        %v3703 = vmax.f32 %v3640, %v3698
        %v3705 = vrot.slane %v3643, 1
        %v3707 = vmax.f32 %v3641, %v3705
        %v3708 = vmax.f32 %v3642, %v3705
        %vm3709 = vcmask 31745
        %3710 = vst.msk [vmem:[#allocation2 + $0x15] sm:$0xfe] %vm3709, %v3652
        %vm3711 = vcmask 24576
        %3712 = vst.msk [vmem:[#allocation2 + $0x1d] sm:$0x1] %vm3711, %v3653
        %vm3713 = vcmask 31747
        %3714 = vst.msk [vmem:[#allocation2 + $0x1d] sm:$0xf8] %vm3713, %v3661
        %vm3715 = vcmask 26624
        %3716 = vst.msk [vmem:[#allocation2 + $0x25] sm:$0x7] %vm3715, %v3662
        %vm3717 = vcmask 31749
        %3718 = vst.msk [vmem:[#allocation2 + $0x25] sm:$0xe0] %vm3717, %v3670
        %vm3719 = vcmask 28672
        %3720 = vst.msk [vmem:[#allocation2 + $0x2d] sm:$0x1f] %vm3719, %v3671
        %vm3721 = vcmask 31751
        %3722 = vst.msk [vmem:[#allocation2 + $0x2d] sm:$0x80] %vm3721, %v3675
        %vm3723 = vcmask 30720
        %3724 = vst.msk [vmem:[#allocation2 + $0x35] sm:$0x7f] %vm3723, %v3676
        %3725 = vst.msk [vmem:[#allocation2 + $0x3d] sm:$0xfe] %vm3709, %v3684
        %3726 = vst.msk [vmem:[#allocation2 + $0x45] sm:$0x1] %vm3711, %v3685
        %3727 = vst.msk [vmem:[#allocation2 + $0x45] sm:$0xf8] %vm3713, %v3693
        %3728 = vst.msk [vmem:[#allocation2 + $0x4d] sm:$0x7] %vm3715, %v3694
        %3729 = vst.msk [vmem:[#allocation2 + $0x4d] sm:$0xe0] %vm3717, %v3702
        %3730 = vst.msk [vmem:[#allocation2 + $0x55] sm:$0x1f] %vm3719, %v3703
        %3731 = vst.msk [vmem:[#allocation2 + $0x55] sm:$0x80] %vm3721, %v3707
        %3732 = vst.msk [vmem:[#allocation2 + $0x5d] sm:$0x7f] %vm3723, %v3708
        %v3733 = vld [vmem:[#allocation2] sm:$0xff]
        %v3734 = vld [vmem:[#allocation2 + $0x8] sm:$0xff]
        %v3735 = vld [vmem:[#allocation2 + $0x10] sm:$0xff]
        %v3736 = vld [vmem:[#allocation2 + $0x18] sm:$0xff]
        %v3737 = vld [vmem:[#allocation2 + $0x20] sm:$0xff]
        %v3738 = vld [vmem:[#allocation2 + $0x28] sm:$0xff]
        %v3739 = vld [vmem:[#allocation2 + $0x30] sm:$0xff]
        %v3740 = vld [vmem:[#allocation2 + $0x38] sm:$0xff]
        %v3741 = vld [vmem:[#allocation2 + $0x40] sm:$0xff]
        %v3742 = vld [vmem:[#allocation2 + $0x48] sm:$0xff]
        %v3743 = vld [vmem:[#allocation2 + $0x50] sm:$0xff]
        %v3744 = vld [vmem:[#allocation2 + $0x58] sm:$0xff]
        %v3745 = vld [vmem:[#allocation2 + $0x60] sm:$0xf]
        %v3746 = vld [vmem:[%s3] sm:$0xf]
        %v3747 = vld [vmem:[#allocation2 + $0x1] sm:$0xff]
        %v3748 = vld [vmem:[#allocation2 + $0x9] sm:$0xff]
        %v3749 = vld [vmem:[#allocation2 + $0x11] sm:$0xff]
        %v3750 = vld [vmem:[#allocation2 + $0x19] sm:$0xff]
        %v3751 = vld [vmem:[#allocation2 + $0x21] sm:$0xff]
        %v3752 = vld [vmem:[#allocation2 + $0x29] sm:$0xff]
        %v3753 = vld [vmem:[#allocation2 + $0x31] sm:$0xff]
        %v3754 = vld [vmem:[#allocation2 + $0x39] sm:$0xff]
        %v3755 = vld [vmem:[#allocation2 + $0x41] sm:$0xff]
        %v3756 = vld [vmem:[#allocation2 + $0x49] sm:$0xff]
        %v3757 = vld [vmem:[#allocation2 + $0x51] sm:$0xff]
        %v3758 = vld [vmem:[#allocation2 + $0x59] sm:$0xff]
        %v3759 = vld [vmem:[#allocation2 + $0x61] sm:$0xf]
        %s3760 = scalar_lea.vmem %s3, 4
        %v3761 = vld [vmem:[%s3760] sm:$0xf]
        %v3763 = vsel %vm438, %v3747, 0
        %v3766 = vsel %vm438, %v3748, 0
        %v3769 = vsel %vm438, %v3749, 0
        %v3772 = vsel %vm438, %v3750, 0
        %v3775 = vsel %vm438, %v3751, 0
        %v3778 = vsel %vm438, %v3752, 0
        %v3781 = vsel %vm438, %v3753, 0
        %v3784 = vsel %vm438, %v3754, 0
        %v3787 = vsel %vm438, %v3755, 0
        %v3790 = vsel %vm438, %v3756, 0
        %v3793 = vsel %vm438, %v3757, 0
        %v3796 = vsel %vm438, %v3758, 0
        %v3799 = vsel %vm438, %v3759, 0
        %vm3801 = vcmask 1043456
        %v3803 = vsel %vm3801, %v3761, 0
        %3805 = vmatpush.msra.mxu0 0.0
        %3806 = vmatpush.msra.mxu0 0.0
        %3807 = vmatpush.msra.mxu0 0.0
        %3808 = vmatpush.msra.mxu0 0.0
        %3809 = vmatpush.msra.mxu0 0.0
        %3810 = vmatpush.msra.mxu0 0.0
        %3811 = vmatpush.msra.mxu0 0.0
        %3812 = vmatpush.msra.mxu0 0.0
        %3813 = vmatpush.msra.mxu0 0.0
        %3814 = vmatpush.msra.mxu0 0.0
        %3815 = vmatpush.msra.mxu0 0.0
        %3816 = vmatpush.msra.mxu0 0.0
        %3817 = vmatpush.msra.mxu0 0.0
        %3818 = vmatpush.msra.mxu0 0.0
        %3819 = vmatpush.msra.mxu0 0.0
        %3820 = vmatpush.msra.mxu0 %v3803
        %3821 = vmatmul.f32.gmra.mxu0 %v3763
        %v3822 = vpop.f32.mrf.mxu0
        %v3823 = vadd.f32 0.0, %v3822
        %3824 = vmatmul.f32.gmra.mxu0 %v3766
        %v3825 = vpop.f32.mrf.mxu0
        %v3826 = vadd.f32 0.0, %v3825
        %3827 = vmatmul.f32.gmra.mxu0 %v3769
        %v3828 = vpop.f32.mrf.mxu0
        %v3829 = vadd.f32 0.0, %v3828
        %3830 = vmatmul.f32.gmra.mxu0 %v3772
        %v3831 = vpop.f32.mrf.mxu0
        %v3832 = vadd.f32 0.0, %v3831
        %3833 = vmatmul.f32.gmra.mxu0 %v3775
        %v3834 = vpop.f32.mrf.mxu0
        %v3835 = vadd.f32 0.0, %v3834
        %3836 = vmatmul.f32.gmra.mxu0 %v3778
        %v3837 = vpop.f32.mrf.mxu0
        %v3838 = vadd.f32 0.0, %v3837
        %3839 = vmatmul.f32.gmra.mxu0 %v3781
        %v3840 = vpop.f32.mrf.mxu0
        %v3841 = vadd.f32 0.0, %v3840
        %3842 = vmatmul.f32.gmra.mxu0 %v3784
        %v3843 = vpop.f32.mrf.mxu0
        %v3844 = vadd.f32 0.0, %v3843
        %3845 = vmatmul.f32.gmra.mxu0 %v3787
        %v3846 = vpop.f32.mrf.mxu0
        %v3847 = vadd.f32 0.0, %v3846
        %3848 = vmatmul.f32.gmra.mxu0 %v3790
        %v3849 = vpop.f32.mrf.mxu0
        %v3850 = vadd.f32 0.0, %v3849
        %3851 = vmatmul.f32.gmra.mxu0 %v3793
        %v3852 = vpop.f32.mrf.mxu0
        %v3853 = vadd.f32 0.0, %v3852
        %3854 = vmatmul.f32.gmra.mxu0 %v3796
        %v3855 = vpop.f32.mrf.mxu0
        %v3856 = vadd.f32 0.0, %v3855
        %3857 = vmatmul.f32.gmra.mxu0 %v3799
        %v3858 = vpop.f32.mrf.mxu0
        %v3859 = vadd.f32 0.0, %v3858
        %3860 = vdwg.mxu0
        %v3862 = vsel %vm438, %v3733, 0
        %v3865 = vsel %vm438, %v3734, 0
        %v3868 = vsel %vm438, %v3735, 0
        %v3871 = vsel %vm438, %v3736, 0
        %v3874 = vsel %vm438, %v3737, 0
        %v3877 = vsel %vm438, %v3738, 0
        %v3880 = vsel %vm438, %v3739, 0
        %v3883 = vsel %vm438, %v3740, 0
        %v3886 = vsel %vm438, %v3741, 0
        %v3889 = vsel %vm438, %v3742, 0
        %v3892 = vsel %vm438, %v3743, 0
        %v3895 = vsel %vm438, %v3744, 0
        %v3898 = vsel %vm438, %v3745, 0
        %v3901 = vsel %vm3801, %v3746, 0
        %3903 = vmatpush.msra.mxu0 0.0
        %3904 = vmatpush.msra.mxu0 0.0
        %3905 = vmatpush.msra.mxu0 0.0
        %3906 = vmatpush.msra.mxu0 0.0
        %3907 = vmatpush.msra.mxu0 0.0
        %3908 = vmatpush.msra.mxu0 0.0
        %3909 = vmatpush.msra.mxu0 0.0
        %3910 = vmatpush.msra.mxu0 0.0
        %3911 = vmatpush.msra.mxu0 0.0
        %3912 = vmatpush.msra.mxu0 0.0
        %3913 = vmatpush.msra.mxu0 0.0
        %3914 = vmatpush.msra.mxu0 0.0
        %3915 = vmatpush.msra.mxu0 0.0
        %3916 = vmatpush.msra.mxu0 0.0
        %3917 = vmatpush.msra.mxu0 0.0
        %3918 = vmatpush.msra.mxu0 %v3901
        %3919 = vmatmul.f32.gmra.mxu0 %v3862
        %v3920 = vpop.f32.mrf.mxu0
        %v3921 = vadd.f32 %v3823, %v3920
        %3922 = vmatmul.f32.gmra.mxu0 %v3865
        %v3923 = vpop.f32.mrf.mxu0
        %v3924 = vadd.f32 %v3826, %v3923
        %3925 = vmatmul.f32.gmra.mxu0 %v3868
        %v3926 = vpop.f32.mrf.mxu0
        %v3927 = vadd.f32 %v3829, %v3926
        %3928 = vmatmul.f32.gmra.mxu0 %v3871
        %v3929 = vpop.f32.mrf.mxu0
        %v3930 = vadd.f32 %v3832, %v3929
        %3931 = vmatmul.f32.gmra.mxu0 %v3874
        %v3932 = vpop.f32.mrf.mxu0
        %v3933 = vadd.f32 %v3835, %v3932
        %3934 = vmatmul.f32.gmra.mxu0 %v3877
        %v3935 = vpop.f32.mrf.mxu0
        %v3936 = vadd.f32 %v3838, %v3935
        %3937 = vmatmul.f32.gmra.mxu0 %v3880
        %v3938 = vpop.f32.mrf.mxu0
        %v3939 = vadd.f32 %v3841, %v3938
        %3940 = vmatmul.f32.gmra.mxu0 %v3883
        %v3941 = vpop.f32.mrf.mxu0
        %v3942 = vadd.f32 %v3844, %v3941
        %3943 = vmatmul.f32.gmra.mxu0 %v3886
        %v3944 = vpop.f32.mrf.mxu0
        %v3945 = vadd.f32 %v3847, %v3944
        %3946 = vmatmul.f32.gmra.mxu0 %v3889
        %v3947 = vpop.f32.mrf.mxu0
        %v3948 = vadd.f32 %v3850, %v3947
        %3949 = vmatmul.f32.gmra.mxu0 %v3892
        %v3950 = vpop.f32.mrf.mxu0
        %v3951 = vadd.f32 %v3853, %v3950
        %3952 = vmatmul.f32.gmra.mxu0 %v3895
        %v3953 = vpop.f32.mrf.mxu0
        %v3954 = vadd.f32 %v3856, %v3953
        %3955 = vmatmul.f32.gmra.mxu0 %v3898
        %v3956 = vpop.f32.mrf.mxu0
        %v3957 = vadd.f32 %v3859, %v3956
        %3958 = vdwg.mxu0
        %v3959 = vld [vmem:[#allocation2 + $0x2] sm:$0xff]
        %v3960 = vld [vmem:[#allocation2 + $0xa] sm:$0xff]
        %v3961 = vld [vmem:[#allocation2 + $0x12] sm:$0xff]
        %v3962 = vld [vmem:[#allocation2 + $0x1a] sm:$0xff]
        %v3963 = vld [vmem:[#allocation2 + $0x22] sm:$0xff]
        %v3964 = vld [vmem:[#allocation2 + $0x2a] sm:$0xff]
        %v3965 = vld [vmem:[#allocation2 + $0x32] sm:$0xff]
        %v3966 = vld [vmem:[#allocation2 + $0x3a] sm:$0xff]
        %v3967 = vld [vmem:[#allocation2 + $0x42] sm:$0xff]
        %v3968 = vld [vmem:[#allocation2 + $0x4a] sm:$0xff]
        %v3969 = vld [vmem:[#allocation2 + $0x52] sm:$0xff]
        %v3970 = vld [vmem:[#allocation2 + $0x5a] sm:$0xff]
        %v3971 = vld [vmem:[#allocation2 + $0x62] sm:$0xf]
        %s3972 = scalar_lea.vmem %s3, 8
        %v3973 = vld [vmem:[%s3972] sm:$0xf]
        %v3975 = vsel %vm438, %v3959, 0
        %v3978 = vsel %vm438, %v3960, 0
        %v3981 = vsel %vm438, %v3961, 0
        %v3984 = vsel %vm438, %v3962, 0
        %v3987 = vsel %vm438, %v3963, 0
        %v3990 = vsel %vm438, %v3964, 0
        %v3993 = vsel %vm438, %v3965, 0
        %v3996 = vsel %vm438, %v3966, 0
        %v3999 = vsel %vm438, %v3967, 0
        %v4002 = vsel %vm438, %v3968, 0
        %v4005 = vsel %vm438, %v3969, 0
        %v4008 = vsel %vm438, %v3970, 0
        %v4011 = vsel %vm438, %v3971, 0
        %v4014 = vsel %vm3801, %v3973, 0
        %4016 = vmatpush.msra.mxu0 0.0
        %4017 = vmatpush.msra.mxu0 0.0
        %4018 = vmatpush.msra.mxu0 0.0
        %4019 = vmatpush.msra.mxu0 0.0
        %4020 = vmatpush.msra.mxu0 0.0
        %4021 = vmatpush.msra.mxu0 0.0
        %4022 = vmatpush.msra.mxu0 0.0
        %4023 = vmatpush.msra.mxu0 0.0
        %4024 = vmatpush.msra.mxu0 0.0
        %4025 = vmatpush.msra.mxu0 0.0
        %4026 = vmatpush.msra.mxu0 0.0
        %4027 = vmatpush.msra.mxu0 0.0
        %4028 = vmatpush.msra.mxu0 0.0
        %4029 = vmatpush.msra.mxu0 0.0
        %4030 = vmatpush.msra.mxu0 0.0
        %4031 = vmatpush.msra.mxu0 %v4014
        %4032 = vmatmul.f32.gmra.mxu0 %v3975
        %v4033 = vpop.f32.mrf.mxu0
        %v4034 = vadd.f32 0.0, %v4033
        %4035 = vmatmul.f32.gmra.mxu0 %v3978
        %v4036 = vpop.f32.mrf.mxu0
        %v4037 = vadd.f32 0.0, %v4036
        %4038 = vmatmul.f32.gmra.mxu0 %v3981
        %v4039 = vpop.f32.mrf.mxu0
        %v4040 = vadd.f32 0.0, %v4039
        %4041 = vmatmul.f32.gmra.mxu0 %v3984
        %v4042 = vpop.f32.mrf.mxu0
        %v4043 = vadd.f32 0.0, %v4042
        %4044 = vmatmul.f32.gmra.mxu0 %v3987
        %v4045 = vpop.f32.mrf.mxu0
        %v4046 = vadd.f32 0.0, %v4045
        %4047 = vmatmul.f32.gmra.mxu0 %v3990
        %v4048 = vpop.f32.mrf.mxu0
        %v4049 = vadd.f32 0.0, %v4048
        %4050 = vmatmul.f32.gmra.mxu0 %v3993
        %v4051 = vpop.f32.mrf.mxu0
        %v4052 = vadd.f32 0.0, %v4051
        %4053 = vmatmul.f32.gmra.mxu0 %v3996
        %v4054 = vpop.f32.mrf.mxu0
        %v4055 = vadd.f32 0.0, %v4054
        %4056 = vmatmul.f32.gmra.mxu0 %v3999
        %v4057 = vpop.f32.mrf.mxu0
        %v4058 = vadd.f32 0.0, %v4057
        %4059 = vmatmul.f32.gmra.mxu0 %v4002
        %v4060 = vpop.f32.mrf.mxu0
        %v4061 = vadd.f32 0.0, %v4060
        %4062 = vmatmul.f32.gmra.mxu0 %v4005
        %v4063 = vpop.f32.mrf.mxu0
        %v4064 = vadd.f32 0.0, %v4063
        %4065 = vmatmul.f32.gmra.mxu0 %v4008
        %v4066 = vpop.f32.mrf.mxu0
        %v4067 = vadd.f32 0.0, %v4066
        %4068 = vmatmul.f32.gmra.mxu0 %v4011
        %v4069 = vpop.f32.mrf.mxu0
        %v4070 = vadd.f32 0.0, %v4069
        %4071 = vdwg.mxu0
        %v4072 = vadd.f32 %v3921, %v4034
        %v4073 = vadd.f32 %v3924, %v4037
        %v4074 = vadd.f32 %v3927, %v4040
        %v4075 = vadd.f32 %v3930, %v4043
        %v4076 = vadd.f32 %v3933, %v4046
        %v4077 = vadd.f32 %v3936, %v4049
        %v4078 = vadd.f32 %v3939, %v4052
        %v4079 = vadd.f32 %v3942, %v4055
        %v4080 = vadd.f32 %v3945, %v4058
        %v4081 = vadd.f32 %v3948, %v4061
        %v4082 = vadd.f32 %v3951, %v4064
        %v4083 = vadd.f32 %v3954, %v4067
        %v4084 = vadd.f32 %v3957, %v4070
        %v4085 = vld [vmem:[#allocation2 + $0xa] sm:$0xff]
        %v4086 = vld [vmem:[#allocation2 + $0x12] sm:$0xff]
        %v4087 = vld [vmem:[#allocation2 + $0x1a] sm:$0xff]
        %v4088 = vld [vmem:[#allocation2 + $0x22] sm:$0xff]
        %v4089 = vld [vmem:[#allocation2 + $0x2a] sm:$0xff]
        %v4090 = vld [vmem:[#allocation2 + $0x32] sm:$0xff]
        %v4091 = vld [vmem:[#allocation2 + $0x3a] sm:$0xff]
        %v4092 = vld [vmem:[#allocation2 + $0x42] sm:$0xff]
        %v4093 = vld [vmem:[#allocation2 + $0x4a] sm:$0xff]
        %v4094 = vld [vmem:[#allocation2 + $0x52] sm:$0xff]
        %v4095 = vld [vmem:[#allocation2 + $0x5a] sm:$0xff]
        %v4096 = vld [vmem:[#allocation2 + $0x62] sm:$0xff]
        %v4097 = vld [vmem:[#allocation2 + $0x6a] sm:$0xf]
        %s4098 = scalar_lea.vmem %s3, 12
        %v4099 = vld [vmem:[%s4098] sm:$0xf]
        %v4101 = vsel %vm438, %v4085, 0
        %v4104 = vsel %vm438, %v4086, 0
        %v4107 = vsel %vm438, %v4087, 0
        %v4110 = vsel %vm438, %v4088, 0
        %v4113 = vsel %vm438, %v4089, 0
        %v4116 = vsel %vm438, %v4090, 0
        %v4119 = vsel %vm438, %v4091, 0
        %v4122 = vsel %vm438, %v4092, 0
        %v4125 = vsel %vm438, %v4093, 0
        %v4128 = vsel %vm438, %v4094, 0
        %v4131 = vsel %vm438, %v4095, 0
        %v4134 = vsel %vm438, %v4096, 0
        %v4137 = vsel %vm438, %v4097, 0
        %v4140 = vsel %vm3801, %v4099, 0
        %4142 = vmatpush.msra.mxu0 0.0
        %4143 = vmatpush.msra.mxu0 0.0
        %4144 = vmatpush.msra.mxu0 0.0
        %4145 = vmatpush.msra.mxu0 0.0
        %4146 = vmatpush.msra.mxu0 0.0
        %4147 = vmatpush.msra.mxu0 0.0
        %4148 = vmatpush.msra.mxu0 0.0
        %4149 = vmatpush.msra.mxu0 0.0
        %4150 = vmatpush.msra.mxu0 0.0
        %4151 = vmatpush.msra.mxu0 0.0
        %4152 = vmatpush.msra.mxu0 0.0
        %4153 = vmatpush.msra.mxu0 0.0
        %4154 = vmatpush.msra.mxu0 0.0
        %4155 = vmatpush.msra.mxu0 0.0
        %4156 = vmatpush.msra.mxu0 0.0
        %4157 = vmatpush.msra.mxu0 %v4140
        %4158 = vmatmul.f32.gmra.mxu0 %v4101
        %v4159 = vpop.f32.mrf.mxu0
        %v4160 = vadd.f32 0.0, %v4159
        %4161 = vmatmul.f32.gmra.mxu0 %v4104
        %v4162 = vpop.f32.mrf.mxu0
        %v4163 = vadd.f32 0.0, %v4162
        %4164 = vmatmul.f32.gmra.mxu0 %v4107
        %v4165 = vpop.f32.mrf.mxu0
        %v4166 = vadd.f32 0.0, %v4165
        %4167 = vmatmul.f32.gmra.mxu0 %v4110
        %v4168 = vpop.f32.mrf.mxu0
        %v4169 = vadd.f32 0.0, %v4168
        %4170 = vmatmul.f32.gmra.mxu0 %v4113
        %v4171 = vpop.f32.mrf.mxu0
        %v4172 = vadd.f32 0.0, %v4171
        %4173 = vmatmul.f32.gmra.mxu0 %v4116
        %v4174 = vpop.f32.mrf.mxu0
        %v4175 = vadd.f32 0.0, %v4174
        %4176 = vmatmul.f32.gmra.mxu0 %v4119
        %v4177 = vpop.f32.mrf.mxu0
        %v4178 = vadd.f32 0.0, %v4177
        %4179 = vmatmul.f32.gmra.mxu0 %v4122
        %v4180 = vpop.f32.mrf.mxu0
        %v4181 = vadd.f32 0.0, %v4180
        %4182 = vmatmul.f32.gmra.mxu0 %v4125
        %v4183 = vpop.f32.mrf.mxu0
        %v4184 = vadd.f32 0.0, %v4183
        %4185 = vmatmul.f32.gmra.mxu0 %v4128
        %v4186 = vpop.f32.mrf.mxu0
        %v4187 = vadd.f32 0.0, %v4186
        %4188 = vmatmul.f32.gmra.mxu0 %v4131
        %v4189 = vpop.f32.mrf.mxu0
        %v4190 = vadd.f32 0.0, %v4189
        %4191 = vmatmul.f32.gmra.mxu0 %v4134
        %v4192 = vpop.f32.mrf.mxu0
        %v4193 = vadd.f32 0.0, %v4192
        %4194 = vmatmul.f32.gmra.mxu0 %v4137
        %v4195 = vpop.f32.mrf.mxu0
        %v4196 = vadd.f32 0.0, %v4195
        %4197 = vdwg.mxu0
        %v4198 = vadd.f32 %v4072, %v4160
        %v4199 = vadd.f32 %v4073, %v4163
        %v4200 = vadd.f32 %v4074, %v4166
        %v4201 = vadd.f32 %v4075, %v4169
        %v4202 = vadd.f32 %v4076, %v4172
        %v4203 = vadd.f32 %v4077, %v4175
        %v4204 = vadd.f32 %v4078, %v4178
        %v4205 = vadd.f32 %v4079, %v4181
        %v4206 = vadd.f32 %v4080, %v4184
        %v4207 = vadd.f32 %v4081, %v4187
        %v4208 = vadd.f32 %v4082, %v4190
        %v4209 = vadd.f32 %v4083, %v4193
        %v4210 = vadd.f32 %v4084, %v4196
        %v4211 = vld [vmem:[#allocation2 + $0xb] sm:$0xff]
        %v4212 = vld [vmem:[#allocation2 + $0x13] sm:$0xff]
        %v4213 = vld [vmem:[#allocation2 + $0x1b] sm:$0xff]
        %v4214 = vld [vmem:[#allocation2 + $0x23] sm:$0xff]
        %v4215 = vld [vmem:[#allocation2 + $0x2b] sm:$0xff]
        %v4216 = vld [vmem:[#allocation2 + $0x33] sm:$0xff]
        %v4217 = vld [vmem:[#allocation2 + $0x3b] sm:$0xff]
        %v4218 = vld [vmem:[#allocation2 + $0x43] sm:$0xff]
        %v4219 = vld [vmem:[#allocation2 + $0x4b] sm:$0xff]
        %v4220 = vld [vmem:[#allocation2 + $0x53] sm:$0xff]
        %v4221 = vld [vmem:[#allocation2 + $0x5b] sm:$0xff]
        %v4222 = vld [vmem:[#allocation2 + $0x63] sm:$0xff]
        %v4223 = vld [vmem:[#allocation2 + $0x6b] sm:$0xf]
        %s4224 = scalar_lea.vmem %s3, 16
        %v4225 = vld [vmem:[%s4224] sm:$0xf]
        %v4227 = vsel %vm438, %v4211, 0
        %v4230 = vsel %vm438, %v4212, 0
        %v4233 = vsel %vm438, %v4213, 0
        %v4236 = vsel %vm438, %v4214, 0
        %v4239 = vsel %vm438, %v4215, 0
        %v4242 = vsel %vm438, %v4216, 0
        %v4245 = vsel %vm438, %v4217, 0
        %v4248 = vsel %vm438, %v4218, 0
        %v4251 = vsel %vm438, %v4219, 0
        %v4254 = vsel %vm438, %v4220, 0
        %v4257 = vsel %vm438, %v4221, 0
        %v4260 = vsel %vm438, %v4222, 0
        %v4263 = vsel %vm438, %v4223, 0
        %v4266 = vsel %vm3801, %v4225, 0
        %4268 = vmatpush.msra.mxu0 0.0
        %4269 = vmatpush.msra.mxu0 0.0
        %4270 = vmatpush.msra.mxu0 0.0
        %4271 = vmatpush.msra.mxu0 0.0
        %4272 = vmatpush.msra.mxu0 0.0
        %4273 = vmatpush.msra.mxu0 0.0
        %4274 = vmatpush.msra.mxu0 0.0
        %4275 = vmatpush.msra.mxu0 0.0
        %4276 = vmatpush.msra.mxu0 0.0
        %4277 = vmatpush.msra.mxu0 0.0
        %4278 = vmatpush.msra.mxu0 0.0
        %4279 = vmatpush.msra.mxu0 0.0
        %4280 = vmatpush.msra.mxu0 0.0
        %4281 = vmatpush.msra.mxu0 0.0
        %4282 = vmatpush.msra.mxu0 0.0
        %4283 = vmatpush.msra.mxu0 %v4266
        %4284 = vmatmul.f32.gmra.mxu0 %v4227
        %v4285 = vpop.f32.mrf.mxu0
        %v4286 = vadd.f32 0.0, %v4285
        %4287 = vmatmul.f32.gmra.mxu0 %v4230
        %v4288 = vpop.f32.mrf.mxu0
        %v4289 = vadd.f32 0.0, %v4288
        %4290 = vmatmul.f32.gmra.mxu0 %v4233
        %v4291 = vpop.f32.mrf.mxu0
        %v4292 = vadd.f32 0.0, %v4291
        %4293 = vmatmul.f32.gmra.mxu0 %v4236
        %v4294 = vpop.f32.mrf.mxu0
        %v4295 = vadd.f32 0.0, %v4294
        %4296 = vmatmul.f32.gmra.mxu0 %v4239
        %v4297 = vpop.f32.mrf.mxu0
        %v4298 = vadd.f32 0.0, %v4297
        %4299 = vmatmul.f32.gmra.mxu0 %v4242
        %v4300 = vpop.f32.mrf.mxu0
        %v4301 = vadd.f32 0.0, %v4300
        %4302 = vmatmul.f32.gmra.mxu0 %v4245
        %v4303 = vpop.f32.mrf.mxu0
        %v4304 = vadd.f32 0.0, %v4303
        %4305 = vmatmul.f32.gmra.mxu0 %v4248
        %v4306 = vpop.f32.mrf.mxu0
        %v4307 = vadd.f32 0.0, %v4306
        %4308 = vmatmul.f32.gmra.mxu0 %v4251
        %v4309 = vpop.f32.mrf.mxu0
        %v4310 = vadd.f32 0.0, %v4309
        %4311 = vmatmul.f32.gmra.mxu0 %v4254
        %v4312 = vpop.f32.mrf.mxu0
        %v4313 = vadd.f32 0.0, %v4312
        %4314 = vmatmul.f32.gmra.mxu0 %v4257
        %v4315 = vpop.f32.mrf.mxu0
        %v4316 = vadd.f32 0.0, %v4315
        %4317 = vmatmul.f32.gmra.mxu0 %v4260
        %v4318 = vpop.f32.mrf.mxu0
        %v4319 = vadd.f32 0.0, %v4318
        %4320 = vmatmul.f32.gmra.mxu0 %v4263
        %v4321 = vpop.f32.mrf.mxu0
        %v4322 = vadd.f32 0.0, %v4321
        %4323 = vdwg.mxu0
        %v4324 = vadd.f32 %v4198, %v4286
        %v4325 = vadd.f32 %v4199, %v4289
        %v4326 = vadd.f32 %v4200, %v4292
        %v4327 = vadd.f32 %v4201, %v4295
        %v4328 = vadd.f32 %v4202, %v4298
        %v4329 = vadd.f32 %v4203, %v4301
        %v4330 = vadd.f32 %v4204, %v4304
        %v4331 = vadd.f32 %v4205, %v4307
        %v4332 = vadd.f32 %v4206, %v4310
        %v4333 = vadd.f32 %v4207, %v4313
        %v4334 = vadd.f32 %v4208, %v4316
        %v4335 = vadd.f32 %v4209, %v4319
        %v4336 = vadd.f32 %v4210, %v4322
        %v4337 = vld [vmem:[#allocation2 + $0xc] sm:$0xff]
        %v4338 = vld [vmem:[#allocation2 + $0x14] sm:$0xff]
        %v4339 = vld [vmem:[#allocation2 + $0x1c] sm:$0xff]
        %v4340 = vld [vmem:[#allocation2 + $0x24] sm:$0xff]
        %v4341 = vld [vmem:[#allocation2 + $0x2c] sm:$0xff]
        %v4342 = vld [vmem:[#allocation2 + $0x34] sm:$0xff]
        %v4343 = vld [vmem:[#allocation2 + $0x3c] sm:$0xff]
        %v4344 = vld [vmem:[#allocation2 + $0x44] sm:$0xff]
        %v4345 = vld [vmem:[#allocation2 + $0x4c] sm:$0xff]
        %v4346 = vld [vmem:[#allocation2 + $0x54] sm:$0xff]
        %v4347 = vld [vmem:[#allocation2 + $0x5c] sm:$0xff]
        %v4348 = vld [vmem:[#allocation2 + $0x64] sm:$0xff]
        %v4349 = vld [vmem:[#allocation2 + $0x6c] sm:$0xf]
        %s4350 = scalar_lea.vmem %s3, 20
        %v4351 = vld [vmem:[%s4350] sm:$0xf]
        %v4353 = vsel %vm438, %v4337, 0
        %v4356 = vsel %vm438, %v4338, 0
        %v4359 = vsel %vm438, %v4339, 0
        %v4362 = vsel %vm438, %v4340, 0
        %v4365 = vsel %vm438, %v4341, 0
        %v4368 = vsel %vm438, %v4342, 0
        %v4371 = vsel %vm438, %v4343, 0
        %v4374 = vsel %vm438, %v4344, 0
        %v4377 = vsel %vm438, %v4345, 0
        %v4380 = vsel %vm438, %v4346, 0
        %v4383 = vsel %vm438, %v4347, 0
        %v4386 = vsel %vm438, %v4348, 0
        %v4389 = vsel %vm438, %v4349, 0
        %v4392 = vsel %vm3801, %v4351, 0
        %4394 = vmatpush.msra.mxu0 0.0
        %4395 = vmatpush.msra.mxu0 0.0
        %4396 = vmatpush.msra.mxu0 0.0
        %4397 = vmatpush.msra.mxu0 0.0
        %4398 = vmatpush.msra.mxu0 0.0
        %4399 = vmatpush.msra.mxu0 0.0
        %4400 = vmatpush.msra.mxu0 0.0
        %4401 = vmatpush.msra.mxu0 0.0
        %4402 = vmatpush.msra.mxu0 0.0
        %4403 = vmatpush.msra.mxu0 0.0
        %4404 = vmatpush.msra.mxu0 0.0
        %4405 = vmatpush.msra.mxu0 0.0
        %4406 = vmatpush.msra.mxu0 0.0
        %4407 = vmatpush.msra.mxu0 0.0
        %4408 = vmatpush.msra.mxu0 0.0
        %4409 = vmatpush.msra.mxu0 %v4392
        %4410 = vmatmul.f32.gmra.mxu0 %v4353
        %v4411 = vpop.f32.mrf.mxu0
        %v4412 = vadd.f32 0.0, %v4411
        %4413 = vmatmul.f32.gmra.mxu0 %v4356
        %v4414 = vpop.f32.mrf.mxu0
        %v4415 = vadd.f32 0.0, %v4414
        %4416 = vmatmul.f32.gmra.mxu0 %v4359
        %v4417 = vpop.f32.mrf.mxu0
        %v4418 = vadd.f32 0.0, %v4417
        %4419 = vmatmul.f32.gmra.mxu0 %v4362
        %v4420 = vpop.f32.mrf.mxu0
        %v4421 = vadd.f32 0.0, %v4420
        %4422 = vmatmul.f32.gmra.mxu0 %v4365
        %v4423 = vpop.f32.mrf.mxu0
        %v4424 = vadd.f32 0.0, %v4423
        %4425 = vmatmul.f32.gmra.mxu0 %v4368
        %v4426 = vpop.f32.mrf.mxu0
        %v4427 = vadd.f32 0.0, %v4426
        %4428 = vmatmul.f32.gmra.mxu0 %v4371
        %v4429 = vpop.f32.mrf.mxu0
        %v4430 = vadd.f32 0.0, %v4429
        %4431 = vmatmul.f32.gmra.mxu0 %v4374
        %v4432 = vpop.f32.mrf.mxu0
        %v4433 = vadd.f32 0.0, %v4432
        %4434 = vmatmul.f32.gmra.mxu0 %v4377
        %v4435 = vpop.f32.mrf.mxu0
        %v4436 = vadd.f32 0.0, %v4435
        %4437 = vmatmul.f32.gmra.mxu0 %v4380
        %v4438 = vpop.f32.mrf.mxu0
        %v4439 = vadd.f32 0.0, %v4438
        %4440 = vmatmul.f32.gmra.mxu0 %v4383
        %v4441 = vpop.f32.mrf.mxu0
        %v4442 = vadd.f32 0.0, %v4441
        %4443 = vmatmul.f32.gmra.mxu0 %v4386
        %v4444 = vpop.f32.mrf.mxu0
        %v4445 = vadd.f32 0.0, %v4444
        %4446 = vmatmul.f32.gmra.mxu0 %v4389
        %v4447 = vpop.f32.mrf.mxu0
        %v4448 = vadd.f32 0.0, %v4447
        %4449 = vdwg.mxu0
        %v4450 = vadd.f32 %v4324, %v4412
        %v4451 = vadd.f32 %v4325, %v4415
        %v4452 = vadd.f32 %v4326, %v4418
        %v4453 = vadd.f32 %v4327, %v4421
        %v4454 = vadd.f32 %v4328, %v4424
        %v4455 = vadd.f32 %v4329, %v4427
        %v4456 = vadd.f32 %v4330, %v4430
        %v4457 = vadd.f32 %v4331, %v4433
        %v4458 = vadd.f32 %v4332, %v4436
        %v4459 = vadd.f32 %v4333, %v4439
        %v4460 = vadd.f32 %v4334, %v4442
        %v4461 = vadd.f32 %v4335, %v4445
        %v4462 = vadd.f32 %v4336, %v4448
        %v4463 = vld [vmem:[#allocation2 + $0x14] sm:$0xff]
        %v4464 = vld [vmem:[#allocation2 + $0x1c] sm:$0xff]
        %v4465 = vld [vmem:[#allocation2 + $0x24] sm:$0xff]
        %v4466 = vld [vmem:[#allocation2 + $0x2c] sm:$0xff]
        %v4467 = vld [vmem:[#allocation2 + $0x34] sm:$0xff]
        %v4468 = vld [vmem:[#allocation2 + $0x3c] sm:$0xff]
        %v4469 = vld [vmem:[#allocation2 + $0x44] sm:$0xff]
        %v4470 = vld [vmem:[#allocation2 + $0x4c] sm:$0xff]
        %v4471 = vld [vmem:[#allocation2 + $0x54] sm:$0xff]
        %v4472 = vld [vmem:[#allocation2 + $0x5c] sm:$0xff]
        %v4473 = vld [vmem:[#allocation2 + $0x64] sm:$0xff]
        %v4474 = vld [vmem:[#allocation2 + $0x6c] sm:$0xff]
        %v4475 = vld [vmem:[#allocation2 + $0x74] sm:$0xf]
        %s4476 = scalar_lea.vmem %s3, 24
        %v4477 = vld [vmem:[%s4476] sm:$0xf]
        %v4479 = vsel %vm438, %v4463, 0
        %v4482 = vsel %vm438, %v4464, 0
        %v4485 = vsel %vm438, %v4465, 0
        %v4488 = vsel %vm438, %v4466, 0
        %v4491 = vsel %vm438, %v4467, 0
        %v4494 = vsel %vm438, %v4468, 0
        %v4497 = vsel %vm438, %v4469, 0
        %v4500 = vsel %vm438, %v4470, 0
        %v4503 = vsel %vm438, %v4471, 0
        %v4506 = vsel %vm438, %v4472, 0
        %v4509 = vsel %vm438, %v4473, 0
        %v4512 = vsel %vm438, %v4474, 0
        %v4515 = vsel %vm438, %v4475, 0
        %v4518 = vsel %vm3801, %v4477, 0
        %4520 = vmatpush.msra.mxu0 0.0
        %4521 = vmatpush.msra.mxu0 0.0
        %4522 = vmatpush.msra.mxu0 0.0
        %4523 = vmatpush.msra.mxu0 0.0
        %4524 = vmatpush.msra.mxu0 0.0
        %4525 = vmatpush.msra.mxu0 0.0
        %4526 = vmatpush.msra.mxu0 0.0
        %4527 = vmatpush.msra.mxu0 0.0
        %4528 = vmatpush.msra.mxu0 0.0
        %4529 = vmatpush.msra.mxu0 0.0
        %4530 = vmatpush.msra.mxu0 0.0
        %4531 = vmatpush.msra.mxu0 0.0
        %4532 = vmatpush.msra.mxu0 0.0
        %4533 = vmatpush.msra.mxu0 0.0
        %4534 = vmatpush.msra.mxu0 0.0
        %4535 = vmatpush.msra.mxu0 %v4518
        %4536 = vmatmul.f32.gmra.mxu0 %v4479
        %v4537 = vpop.f32.mrf.mxu0
        %v4538 = vadd.f32 0.0, %v4537
        %4539 = vmatmul.f32.gmra.mxu0 %v4482
        %v4540 = vpop.f32.mrf.mxu0
        %v4541 = vadd.f32 0.0, %v4540
        %4542 = vmatmul.f32.gmra.mxu0 %v4485
        %v4543 = vpop.f32.mrf.mxu0
        %v4544 = vadd.f32 0.0, %v4543
        %4545 = vmatmul.f32.gmra.mxu0 %v4488
        %v4546 = vpop.f32.mrf.mxu0
        %v4547 = vadd.f32 0.0, %v4546
        %4548 = vmatmul.f32.gmra.mxu0 %v4491
        %v4549 = vpop.f32.mrf.mxu0
        %v4550 = vadd.f32 0.0, %v4549
        %4551 = vmatmul.f32.gmra.mxu0 %v4494
        %v4552 = vpop.f32.mrf.mxu0
        %v4553 = vadd.f32 0.0, %v4552
        %4554 = vmatmul.f32.gmra.mxu0 %v4497
        %v4555 = vpop.f32.mrf.mxu0
        %v4556 = vadd.f32 0.0, %v4555
        %4557 = vmatmul.f32.gmra.mxu0 %v4500
        %v4558 = vpop.f32.mrf.mxu0
        %v4559 = vadd.f32 0.0, %v4558
        %4560 = vmatmul.f32.gmra.mxu0 %v4503
        %v4561 = vpop.f32.mrf.mxu0
        %v4562 = vadd.f32 0.0, %v4561
        %4563 = vmatmul.f32.gmra.mxu0 %v4506
        %v4564 = vpop.f32.mrf.mxu0
        %v4565 = vadd.f32 0.0, %v4564
        %4566 = vmatmul.f32.gmra.mxu0 %v4509
        %v4567 = vpop.f32.mrf.mxu0
        %v4568 = vadd.f32 0.0, %v4567
        %4569 = vmatmul.f32.gmra.mxu0 %v4512
        %v4570 = vpop.f32.mrf.mxu0
        %v4571 = vadd.f32 0.0, %v4570
        %4572 = vmatmul.f32.gmra.mxu0 %v4515
        %v4573 = vpop.f32.mrf.mxu0
        %v4574 = vadd.f32 0.0, %v4573
        %4575 = vdwg.mxu0
        %v4576 = vadd.f32 %v4450, %v4538
        %v4577 = vadd.f32 %v4451, %v4541
        %v4578 = vadd.f32 %v4452, %v4544
        %v4579 = vadd.f32 %v4453, %v4547
        %v4580 = vadd.f32 %v4454, %v4550
        %v4581 = vadd.f32 %v4455, %v4553
        %v4582 = vadd.f32 %v4456, %v4556
        %v4583 = vadd.f32 %v4457, %v4559
        %v4584 = vadd.f32 %v4458, %v4562
        %v4585 = vadd.f32 %v4459, %v4565
        %v4586 = vadd.f32 %v4460, %v4568
        %v4587 = vadd.f32 %v4461, %v4571
        %v4588 = vadd.f32 %v4462, %v4574
        %v4589 = vld [vmem:[#allocation2 + $0x15] sm:$0xff]
        %v4590 = vld [vmem:[#allocation2 + $0x1d] sm:$0xff]
        %v4591 = vld [vmem:[#allocation2 + $0x25] sm:$0xff]
        %v4592 = vld [vmem:[#allocation2 + $0x2d] sm:$0xff]
        %v4593 = vld [vmem:[#allocation2 + $0x35] sm:$0xff]
        %v4594 = vld [vmem:[#allocation2 + $0x3d] sm:$0xff]
        %v4595 = vld [vmem:[#allocation2 + $0x45] sm:$0xff]
        %v4596 = vld [vmem:[#allocation2 + $0x4d] sm:$0xff]
        %v4597 = vld [vmem:[#allocation2 + $0x55] sm:$0xff]
        %v4598 = vld [vmem:[#allocation2 + $0x5d] sm:$0xff]
        %v4599 = vld [vmem:[#allocation2 + $0x65] sm:$0xff]
        %v4600 = vld [vmem:[#allocation2 + $0x6d] sm:$0xff]
        %v4601 = vld [vmem:[#allocation2 + $0x75] sm:$0xf]
        %s4602 = scalar_lea.vmem %s3, 28
        %v4603 = vld [vmem:[%s4602] sm:$0xf]
        %v4605 = vsel %vm438, %v4589, 0
        %v4608 = vsel %vm438, %v4590, 0
        %v4611 = vsel %vm438, %v4591, 0
        %v4614 = vsel %vm438, %v4592, 0
        %v4617 = vsel %vm438, %v4593, 0
        %v4620 = vsel %vm438, %v4594, 0
        %v4623 = vsel %vm438, %v4595, 0
        %v4626 = vsel %vm438, %v4596, 0
        %v4629 = vsel %vm438, %v4597, 0
        %v4632 = vsel %vm438, %v4598, 0
        %v4635 = vsel %vm438, %v4599, 0
        %v4638 = vsel %vm438, %v4600, 0
        %v4641 = vsel %vm438, %v4601, 0
        %v4644 = vsel %vm3801, %v4603, 0
        %4646 = vmatpush.msra.mxu0 0.0
        %4647 = vmatpush.msra.mxu0 0.0
        %4648 = vmatpush.msra.mxu0 0.0
        %4649 = vmatpush.msra.mxu0 0.0
        %4650 = vmatpush.msra.mxu0 0.0
        %4651 = vmatpush.msra.mxu0 0.0
        %4652 = vmatpush.msra.mxu0 0.0
        %4653 = vmatpush.msra.mxu0 0.0
        %4654 = vmatpush.msra.mxu0 0.0
        %4655 = vmatpush.msra.mxu0 0.0
        %4656 = vmatpush.msra.mxu0 0.0
        %4657 = vmatpush.msra.mxu0 0.0
        %4658 = vmatpush.msra.mxu0 0.0
        %4659 = vmatpush.msra.mxu0 0.0
        %4660 = vmatpush.msra.mxu0 0.0
        %4661 = vmatpush.msra.mxu0 %v4644
        %4662 = vmatmul.f32.gmra.mxu0 %v4605
        %v4663 = vpop.f32.mrf.mxu0
        %v4664 = vadd.f32 0.0, %v4663
        %4665 = vmatmul.f32.gmra.mxu0 %v4608
        %v4666 = vpop.f32.mrf.mxu0
        %v4667 = vadd.f32 0.0, %v4666
        %4668 = vmatmul.f32.gmra.mxu0 %v4611
        %v4669 = vpop.f32.mrf.mxu0
        %v4670 = vadd.f32 0.0, %v4669
        %4671 = vmatmul.f32.gmra.mxu0 %v4614
        %v4672 = vpop.f32.mrf.mxu0
        %v4673 = vadd.f32 0.0, %v4672
        %4674 = vmatmul.f32.gmra.mxu0 %v4617
        %v4675 = vpop.f32.mrf.mxu0
        %v4676 = vadd.f32 0.0, %v4675
        %4677 = vmatmul.f32.gmra.mxu0 %v4620
        %v4678 = vpop.f32.mrf.mxu0
        %v4679 = vadd.f32 0.0, %v4678
        %4680 = vmatmul.f32.gmra.mxu0 %v4623
        %v4681 = vpop.f32.mrf.mxu0
        %v4682 = vadd.f32 0.0, %v4681
        %4683 = vmatmul.f32.gmra.mxu0 %v4626
        %v4684 = vpop.f32.mrf.mxu0
        %v4685 = vadd.f32 0.0, %v4684
        %4686 = vmatmul.f32.gmra.mxu0 %v4629
        %v4687 = vpop.f32.mrf.mxu0
        %v4688 = vadd.f32 0.0, %v4687
        %4689 = vmatmul.f32.gmra.mxu0 %v4632
        %v4690 = vpop.f32.mrf.mxu0
        %v4691 = vadd.f32 0.0, %v4690
        %4692 = vmatmul.f32.gmra.mxu0 %v4635
        %v4693 = vpop.f32.mrf.mxu0
        %v4694 = vadd.f32 0.0, %v4693
        %4695 = vmatmul.f32.gmra.mxu0 %v4638
        %v4696 = vpop.f32.mrf.mxu0
        %v4697 = vadd.f32 0.0, %v4696
        %4698 = vmatmul.f32.gmra.mxu0 %v4641
        %v4699 = vpop.f32.mrf.mxu0
        %v4700 = vadd.f32 0.0, %v4699
        %4701 = vdwg.mxu0
        %v4702 = vadd.f32 %v4576, %v4664
        %v4703 = vadd.f32 %v4577, %v4667
        %v4704 = vadd.f32 %v4578, %v4670
        %v4705 = vadd.f32 %v4579, %v4673
        %v4706 = vadd.f32 %v4580, %v4676
        %v4707 = vadd.f32 %v4581, %v4679
        %v4708 = vadd.f32 %v4582, %v4682
        %v4709 = vadd.f32 %v4583, %v4685
        %v4710 = vadd.f32 %v4584, %v4688
        %v4711 = vadd.f32 %v4585, %v4691
        %v4712 = vadd.f32 %v4586, %v4694
        %v4713 = vadd.f32 %v4587, %v4697
        %v4714 = vadd.f32 %v4588, %v4700
        %v4715 = vld [vmem:[#allocation2 + $0x16] sm:$0xff]
        %v4716 = vld [vmem:[#allocation2 + $0x1e] sm:$0xff]
        %v4717 = vld [vmem:[#allocation2 + $0x26] sm:$0xff]
        %v4718 = vld [vmem:[#allocation2 + $0x2e] sm:$0xff]
        %v4719 = vld [vmem:[#allocation2 + $0x36] sm:$0xff]
        %v4720 = vld [vmem:[#allocation2 + $0x3e] sm:$0xff]
        %v4721 = vld [vmem:[#allocation2 + $0x46] sm:$0xff]
        %v4722 = vld [vmem:[#allocation2 + $0x4e] sm:$0xff]
        %v4723 = vld [vmem:[#allocation2 + $0x56] sm:$0xff]
        %v4724 = vld [vmem:[#allocation2 + $0x5e] sm:$0xff]
        %v4725 = vld [vmem:[#allocation2 + $0x66] sm:$0xff]
        %v4726 = vld [vmem:[#allocation2 + $0x6e] sm:$0xff]
        %v4727 = vld [vmem:[#allocation2 + $0x76] sm:$0xf]
        %s4728 = scalar_lea.vmem %s3, 32
        %v4729 = vld [vmem:[%s4728] sm:$0xf]
        %v4731 = vsel %vm438, %v4715, 0
        %v4734 = vsel %vm438, %v4716, 0
        %v4737 = vsel %vm438, %v4717, 0
        %v4740 = vsel %vm438, %v4718, 0
        %v4743 = vsel %vm438, %v4719, 0
        %v4746 = vsel %vm438, %v4720, 0
        %v4749 = vsel %vm438, %v4721, 0
        %v4752 = vsel %vm438, %v4722, 0
        %v4755 = vsel %vm438, %v4723, 0
        %v4758 = vsel %vm438, %v4724, 0
        %v4761 = vsel %vm438, %v4725, 0
        %v4764 = vsel %vm438, %v4726, 0
        %v4767 = vsel %vm438, %v4727, 0
        %v4770 = vsel %vm3801, %v4729, 0
        %4772 = vmatpush.msra.mxu0 0.0
        %4773 = vmatpush.msra.mxu0 0.0
        %4774 = vmatpush.msra.mxu0 0.0
        %4775 = vmatpush.msra.mxu0 0.0
        %4776 = vmatpush.msra.mxu0 0.0
        %4777 = vmatpush.msra.mxu0 0.0
        %4778 = vmatpush.msra.mxu0 0.0
        %4779 = vmatpush.msra.mxu0 0.0
        %4780 = vmatpush.msra.mxu0 0.0
        %4781 = vmatpush.msra.mxu0 0.0
        %4782 = vmatpush.msra.mxu0 0.0
        %4783 = vmatpush.msra.mxu0 0.0
        %4784 = vmatpush.msra.mxu0 0.0
        %4785 = vmatpush.msra.mxu0 0.0
        %4786 = vmatpush.msra.mxu0 0.0
        %4787 = vmatpush.msra.mxu0 %v4770
        %4788 = vmatmul.f32.gmra.mxu0 %v4731
        %v4789 = vpop.f32.mrf.mxu0
        %v4790 = vadd.f32 0.0, %v4789
        %4791 = vmatmul.f32.gmra.mxu0 %v4734
        %v4792 = vpop.f32.mrf.mxu0
        %v4793 = vadd.f32 0.0, %v4792
        %4794 = vmatmul.f32.gmra.mxu0 %v4737
        %v4795 = vpop.f32.mrf.mxu0
        %v4796 = vadd.f32 0.0, %v4795
        %4797 = vmatmul.f32.gmra.mxu0 %v4740
        %v4798 = vpop.f32.mrf.mxu0
        %v4799 = vadd.f32 0.0, %v4798
        %4800 = vmatmul.f32.gmra.mxu0 %v4743
        %v4801 = vpop.f32.mrf.mxu0
        %v4802 = vadd.f32 0.0, %v4801
        %4803 = vmatmul.f32.gmra.mxu0 %v4746
        %v4804 = vpop.f32.mrf.mxu0
        %v4805 = vadd.f32 0.0, %v4804
        %4806 = vmatmul.f32.gmra.mxu0 %v4749
        %v4807 = vpop.f32.mrf.mxu0
        %v4808 = vadd.f32 0.0, %v4807
        %4809 = vmatmul.f32.gmra.mxu0 %v4752
        %v4810 = vpop.f32.mrf.mxu0
        %v4811 = vadd.f32 0.0, %v4810
        %4812 = vmatmul.f32.gmra.mxu0 %v4755
        %v4813 = vpop.f32.mrf.mxu0
        %v4814 = vadd.f32 0.0, %v4813
        %4815 = vmatmul.f32.gmra.mxu0 %v4758
        %v4816 = vpop.f32.mrf.mxu0
        %v4817 = vadd.f32 0.0, %v4816
        %4818 = vmatmul.f32.gmra.mxu0 %v4761
        %v4819 = vpop.f32.mrf.mxu0
        %v4820 = vadd.f32 0.0, %v4819
        %4821 = vmatmul.f32.gmra.mxu0 %v4764
        %v4822 = vpop.f32.mrf.mxu0
        %v4823 = vadd.f32 0.0, %v4822
        %4824 = vmatmul.f32.gmra.mxu0 %v4767
        %v4825 = vpop.f32.mrf.mxu0
        %v4826 = vadd.f32 0.0, %v4825
        %4827 = vdwg.mxu0
        %v4828 = vadd.f32 %v4702, %v4790
        %v4829 = vadd.f32 %v4703, %v4793
        %v4830 = vadd.f32 %v4704, %v4796
        %v4831 = vadd.f32 %v4705, %v4799
        %v4832 = vadd.f32 %v4706, %v4802
        %v4833 = vadd.f32 %v4707, %v4805
        %v4834 = vadd.f32 %v4708, %v4808
        %v4835 = vadd.f32 %v4709, %v4811
        %v4836 = vadd.f32 %v4710, %v4814
        %v4837 = vadd.f32 %v4711, %v4817
        %v4838 = vadd.f32 %v4712, %v4820
        %v4839 = vadd.f32 %v4713, %v4823
        %v4840 = vadd.f32 %v4714, %v4826
        %v4841 = vld [vmem:[%s4] sm:$0x1]
        %v4843 = vperm.slane %v4841, 0
        %v4845 = vadd.f32 %v4828, %v4843
        %v4846 = vadd.f32 %v4829, %v4843
        %v4847 = vadd.f32 %v4830, %v4843
        %v4848 = vadd.f32 %v4831, %v4843
        %v4849 = vadd.f32 %v4832, %v4843
        %v4850 = vadd.f32 %v4833, %v4843
        %v4851 = vadd.f32 %v4834, %v4843
        %v4852 = vadd.f32 %v4835, %v4843
        %v4853 = vadd.f32 %v4836, %v4843
        %v4854 = vadd.f32 %v4837, %v4843
        %v4855 = vadd.f32 %v4838, %v4843
        %v4856 = vadd.f32 %v4839, %v4843
        %v4857 = vadd.f32 %v4840, %v4843
        %v4858 = vmax.f32 %v4845, 0.0
        %v4859 = vmax.f32 %v4846, 0.0
        %v4860 = vmax.f32 %v4847, 0.0
        %v4861 = vmax.f32 %v4848, 0.0
        %v4862 = vmax.f32 %v4849, 0.0
        %v4863 = vmax.f32 %v4850, 0.0
        %v4864 = vmax.f32 %v4851, 0.0
        %v4865 = vmax.f32 %v4852, 0.0
        %v4866 = vmax.f32 %v4853, 0.0
        %v4867 = vmax.f32 %v4854, 0.0
        %v4868 = vmax.f32 %v4855, 0.0
        %v4869 = vmax.f32 %v4856, 0.0
        %v4870 = vmax.f32 %v4857, 0.0
        %4871 = vst.msk [vmem:[#allocation6] sm:$0xff] %vm456, %v4858
        %4872 = vst.msk [vmem:[#allocation6 + $0x8] sm:$0xff] %vm456, %v4859
        %4873 = vst.msk [vmem:[#allocation6 + $0x10] sm:$0xff] %vm456, %v4860
        %4874 = vst.msk [vmem:[#allocation6 + $0x18] sm:$0xff] %vm456, %v4861
        %4875 = vst.msk [vmem:[#allocation6 + $0x20] sm:$0xff] %vm456, %v4862
        %4876 = vst.msk [vmem:[#allocation6 + $0x28] sm:$0xff] %vm456, %v4863
        %4877 = vst.msk [vmem:[#allocation6 + $0x30] sm:$0xff] %vm456, %v4864
        %4878 = vst.msk [vmem:[#allocation6 + $0x38] sm:$0xff] %vm456, %v4865
        %4879 = vst.msk [vmem:[#allocation6 + $0x40] sm:$0xff] %vm456, %v4866
        %4880 = vst.msk [vmem:[#allocation6 + $0x48] sm:$0xff] %vm456, %v4867
        %4881 = vst.msk [vmem:[#allocation6 + $0x50] sm:$0xff] %vm456, %v4868
        %4882 = vst.msk [vmem:[#allocation6 + $0x58] sm:$0xff] %vm456, %v4869
        %vm4883 = vcmask 60416
        %4884 = vst.msk [vmem:[#allocation6 + $0x60] sm:$0xf] %vm4883, %v4870
        %s4885 = scalar_lea.vmem [#allocation6], 1
        %v4886 = vld [vmem:[%s4885] ss:$2 sm:$0xff]
        %s4887 = scalar_lea.vmem [#allocation6], 17
        %v4888 = vld [vmem:[%s4887] ss:$2 sm:$0xff]
        %s4889 = scalar_lea.vmem [#allocation6], 33
        %v4890 = vld [vmem:[%s4889] ss:$2 sm:$0xff]
        %s4891 = scalar_lea.vmem [#allocation6], 49
        %v4892 = vld [vmem:[%s4891] ss:$2 sm:$0xff]
        %s4893 = scalar_lea.vmem [#allocation6], 65
        %v4894 = vld [vmem:[%s4893] ss:$2 sm:$0xff]
        %s4895 = scalar_lea.vmem [#allocation6], 81
        %v4896 = vld [vmem:[%s4895] ss:$2 sm:$0xff]
        %s4897 = scalar_lea.vmem [#allocation6], 2
        %v4898 = vld [vmem:[%s4897] ss:$2 sm:$0xff]
        %s4899 = scalar_lea.vmem [#allocation6], 18
        %v4900 = vld [vmem:[%s4899] ss:$2 sm:$0xff]
        %s4901 = scalar_lea.vmem [#allocation6], 34
        %v4902 = vld [vmem:[%s4901] ss:$2 sm:$0xff]
        %s4903 = scalar_lea.vmem [#allocation6], 50
        %v4904 = vld [vmem:[%s4903] ss:$2 sm:$0xff]
        %s4905 = scalar_lea.vmem [#allocation6], 66
        %v4906 = vld [vmem:[%s4905] ss:$2 sm:$0xff]
        %s4907 = scalar_lea.vmem [#allocation6], 82
        %v4908 = vld [vmem:[%s4907] ss:$2 sm:$0xff]
        %v4909 = vmax.f32 %v4886, %v4898
        %v4910 = vmax.f32 %v4888, %v4900
        %v4911 = vmax.f32 %v4890, %v4902
        %v4912 = vmax.f32 %v4892, %v4904
        %v4913 = vmax.f32 %v4894, %v4906
        %v4914 = vmax.f32 %v4896, %v4908
        %v4916 = vrot.slane %v4910, 5
        %v4918 = vmax.f32 %v4909, %v4916
        %v4919 = vmax.f32 %v4910, %v4916
        %v4921 = vrot.slane %v4911, 5
        %v4923 = vmax.f32 %v4910, %v4921
        %v4924 = vmax.f32 %v4911, %v4921
        %vm4927 = vcmask 1042432
        %v4928 = vrot.slane %v4912, 5
        %v4929 = vrot.slane %v4913, 5
        %v4930 = vsel %vm4927, %v4928, %v4929
        %v4932 = vmax.f32 %v4912, %v4930
        %v4934 = vrot.slane %v4914, 5
        %v4936 = vmax.f32 %v4913, %v4934
        %vm4937 = vcmask 64517
        %4938 = vst.msk [vmem:[#allocation3 + $0x9] sm:$0xe0] %vm4937, %v4918
        %vm4939 = vcmask 57344
        %4940 = vst.msk [vmem:[#allocation3 + $0x11] sm:$0x1] %vm4939, %v4919
        %vm4941 = vcmask 64519
        %4942 = vst.msk [vmem:[#allocation3 + $0xd] sm:$0x80] %vm4941, %v4923
        %vm4943 = vcmask 59392
        %4944 = vst.msk [vmem:[#allocation3 + $0x15] sm:$0x7] %vm4943, %v4924
        %vm4945 = vcmask 61441
        %4946 = vst.msk [vmem:[#allocation3 + $0x19] sm:$0x1e] %vm4945, %v4932
        %vm4947 = vcmask 63491
        %4948 = vst.msk [vmem:[#allocation3 + $0x1d] sm:$0x78] %vm4947, %v4936
        %v4949 = vld [vmem:[#allocation3] sm:$0xff]
        %v4950 = vld [vmem:[#allocation3 + $0x8] sm:$0xff]
        %v4951 = vld [vmem:[#allocation3 + $0x10] sm:$0xff]
        %v4952 = vld [vmem:[#allocation3 + $0x18] sm:$0xff]
        %v4953 = vld [vmem:[#allocation3 + $0x20] sm:$0xf]
        %v4954 = vld [vmem:[%s5] sm:$0xff]
        %v4955 = vld [vmem:[#allocation3 + $0x1] sm:$0xff]
        %v4956 = vld [vmem:[#allocation3 + $0x9] sm:$0xff]
        %v4957 = vld [vmem:[#allocation3 + $0x11] sm:$0xff]
        %v4958 = vld [vmem:[#allocation3 + $0x19] sm:$0xff]
        %v4959 = vld [vmem:[#allocation3 + $0x21] sm:$0xf]
        %s4960 = scalar_lea.vmem %s5, 8
        %v4961 = vld [vmem:[%s4960] sm:$0xff]
        %v4963 = vsel %vm456, %v4955, 0
        %v4966 = vsel %vm456, %v4956, 0
        %v4969 = vsel %vm456, %v4957, 0
        %v4972 = vsel %vm456, %v4958, 0
        %v4975 = vsel %vm456, %v4959, 0
        %4977 = vmatpush.msra.mxu0 0.0
        %4978 = vmatpush.msra.mxu0 0.0
        %4979 = vmatpush.msra.mxu0 0.0
        %4980 = vmatpush.msra.mxu0 0.0
        %4981 = vmatpush.msra.mxu0 0.0
        %4982 = vmatpush.msra.mxu0 0.0
        %4983 = vmatpush.msra.mxu0 0.0
        %4984 = vmatpush.msra.mxu0 0.0
        %4985 = vmatpush.msra.mxu0 0.0
        %4986 = vmatpush.msra.mxu0 0.0
        %4987 = vmatpush.msra.mxu0 0.0
        %4988 = vmatpush.msra.mxu0 0.0
        %4989 = vmatpush.msra.mxu0 0.0
        %4990 = vmatpush.msra.mxu0 0.0
        %4991 = vmatpush.msra.mxu0 0.0
        %4992 = vmatpush.msra.mxu0 %v4961
        %4993 = vmatmul.f32.gmra.mxu0 %v4963
        %v4994 = vpop.f32.mrf.mxu0
        %v4995 = vadd.f32 0.0, %v4994
        %4996 = vmatmul.f32.gmra.mxu0 %v4966
        %v4997 = vpop.f32.mrf.mxu0
        %v4998 = vadd.f32 0.0, %v4997
        %4999 = vmatmul.f32.gmra.mxu0 %v4969
        %v5000 = vpop.f32.mrf.mxu0
        %v5001 = vadd.f32 0.0, %v5000
        %5002 = vmatmul.f32.gmra.mxu0 %v4972
        %v5003 = vpop.f32.mrf.mxu0
        %v5004 = vadd.f32 0.0, %v5003
        %5005 = vmatmul.f32.gmra.mxu0 %v4975
        %v5006 = vpop.f32.mrf.mxu0
        %v5007 = vadd.f32 0.0, %v5006
        %5008 = vdwg.mxu0
        %v5010 = vsel %vm456, %v4949, 0
        %v5013 = vsel %vm456, %v4950, 0
        %v5016 = vsel %vm456, %v4951, 0
        %v5019 = vsel %vm456, %v4952, 0
        %v5022 = vsel %vm456, %v4953, 0
        %5024 = vmatpush.msra.mxu0 0.0
        %5025 = vmatpush.msra.mxu0 0.0
        %5026 = vmatpush.msra.mxu0 0.0
        %5027 = vmatpush.msra.mxu0 0.0
        %5028 = vmatpush.msra.mxu0 0.0
        %5029 = vmatpush.msra.mxu0 0.0
        %5030 = vmatpush.msra.mxu0 0.0
        %5031 = vmatpush.msra.mxu0 0.0
        %5032 = vmatpush.msra.mxu0 0.0
        %5033 = vmatpush.msra.mxu0 0.0
        %5034 = vmatpush.msra.mxu0 0.0
        %5035 = vmatpush.msra.mxu0 0.0
        %5036 = vmatpush.msra.mxu0 0.0
        %5037 = vmatpush.msra.mxu0 0.0
        %5038 = vmatpush.msra.mxu0 0.0
        %5039 = vmatpush.msra.mxu0 %v4954
        %5040 = vmatmul.f32.gmra.mxu0 %v5010
        %v5041 = vpop.f32.mrf.mxu0
        %v5042 = vadd.f32 %v4995, %v5041
        %5043 = vmatmul.f32.gmra.mxu0 %v5013
        %v5044 = vpop.f32.mrf.mxu0
        %v5045 = vadd.f32 %v4998, %v5044
        %5046 = vmatmul.f32.gmra.mxu0 %v5016
        %v5047 = vpop.f32.mrf.mxu0
        %v5048 = vadd.f32 %v5001, %v5047
        %5049 = vmatmul.f32.gmra.mxu0 %v5019
        %v5050 = vpop.f32.mrf.mxu0
        %v5051 = vadd.f32 %v5004, %v5050
        %5052 = vmatmul.f32.gmra.mxu0 %v5022
        %v5053 = vpop.f32.mrf.mxu0
        %v5054 = vadd.f32 %v5007, %v5053
        %5055 = vdwg.mxu0
        %v5056 = vld [vmem:[#allocation3 + $0x2] sm:$0xff]
        %v5057 = vld [vmem:[#allocation3 + $0xa] sm:$0xff]
        %v5058 = vld [vmem:[#allocation3 + $0x12] sm:$0xff]
        %v5059 = vld [vmem:[#allocation3 + $0x1a] sm:$0xff]
        %v5060 = vld [vmem:[#allocation3 + $0x22] sm:$0xf]
        %s5061 = scalar_lea.vmem %s5, 16
        %v5062 = vld [vmem:[%s5061] sm:$0xff]
        %v5064 = vsel %vm456, %v5056, 0
        %v5067 = vsel %vm456, %v5057, 0
        %v5070 = vsel %vm456, %v5058, 0
        %v5073 = vsel %vm456, %v5059, 0
        %v5076 = vsel %vm456, %v5060, 0
        %5078 = vmatpush.msra.mxu0 0.0
        %5079 = vmatpush.msra.mxu0 0.0
        %5080 = vmatpush.msra.mxu0 0.0
        %5081 = vmatpush.msra.mxu0 0.0
        %5082 = vmatpush.msra.mxu0 0.0
        %5083 = vmatpush.msra.mxu0 0.0
        %5084 = vmatpush.msra.mxu0 0.0
        %5085 = vmatpush.msra.mxu0 0.0
        %5086 = vmatpush.msra.mxu0 0.0
        %5087 = vmatpush.msra.mxu0 0.0
        %5088 = vmatpush.msra.mxu0 0.0
        %5089 = vmatpush.msra.mxu0 0.0
        %5090 = vmatpush.msra.mxu0 0.0
        %5091 = vmatpush.msra.mxu0 0.0
        %5092 = vmatpush.msra.mxu0 0.0
        %5093 = vmatpush.msra.mxu0 %v5062
        %5094 = vmatmul.f32.gmra.mxu0 %v5064
        %v5095 = vpop.f32.mrf.mxu0
        %v5096 = vadd.f32 0.0, %v5095
        %5097 = vmatmul.f32.gmra.mxu0 %v5067
        %v5098 = vpop.f32.mrf.mxu0
        %v5099 = vadd.f32 0.0, %v5098
        %5100 = vmatmul.f32.gmra.mxu0 %v5070
        %v5101 = vpop.f32.mrf.mxu0
        %v5102 = vadd.f32 0.0, %v5101
        %5103 = vmatmul.f32.gmra.mxu0 %v5073
        %v5104 = vpop.f32.mrf.mxu0
        %v5105 = vadd.f32 0.0, %v5104
        %5106 = vmatmul.f32.gmra.mxu0 %v5076
        %v5107 = vpop.f32.mrf.mxu0
        %v5108 = vadd.f32 0.0, %v5107
        %5109 = vdwg.mxu0
        %v5110 = vadd.f32 %v5042, %v5096
        %v5111 = vadd.f32 %v5045, %v5099
        %v5112 = vadd.f32 %v5048, %v5102
        %v5113 = vadd.f32 %v5051, %v5105
        %v5114 = vadd.f32 %v5054, %v5108
        %v5115 = vld [vmem:[#allocation3 + $0x6] sm:$0xff]
        %v5116 = vld [vmem:[#allocation3 + $0xe] sm:$0xff]
        %v5117 = vld [vmem:[#allocation3 + $0x16] sm:$0xff]
        %v5118 = vld [vmem:[#allocation3 + $0x1e] sm:$0xff]
        %v5119 = vld [vmem:[#allocation3 + $0x26] sm:$0xf]
        %s5120 = scalar_lea.vmem %s5, 24
        %v5121 = vld [vmem:[%s5120] sm:$0xff]
        %v5123 = vsel %vm456, %v5115, 0
        %v5126 = vsel %vm456, %v5116, 0
        %v5129 = vsel %vm456, %v5117, 0
        %v5132 = vsel %vm456, %v5118, 0
        %v5135 = vsel %vm456, %v5119, 0
        %5137 = vmatpush.msra.mxu0 0.0
        %5138 = vmatpush.msra.mxu0 0.0
        %5139 = vmatpush.msra.mxu0 0.0
        %5140 = vmatpush.msra.mxu0 0.0
        %5141 = vmatpush.msra.mxu0 0.0
        %5142 = vmatpush.msra.mxu0 0.0
        %5143 = vmatpush.msra.mxu0 0.0
        %5144 = vmatpush.msra.mxu0 0.0
        %5145 = vmatpush.msra.mxu0 0.0
        %5146 = vmatpush.msra.mxu0 0.0
        %5147 = vmatpush.msra.mxu0 0.0
        %5148 = vmatpush.msra.mxu0 0.0
        %5149 = vmatpush.msra.mxu0 0.0
        %5150 = vmatpush.msra.mxu0 0.0
        %5151 = vmatpush.msra.mxu0 0.0
        %5152 = vmatpush.msra.mxu0 %v5121
        %5153 = vmatmul.f32.gmra.mxu0 %v5123
        %v5154 = vpop.f32.mrf.mxu0
        %v5155 = vadd.f32 0.0, %v5154
        %5156 = vmatmul.f32.gmra.mxu0 %v5126
        %v5157 = vpop.f32.mrf.mxu0
        %v5158 = vadd.f32 0.0, %v5157
        %5159 = vmatmul.f32.gmra.mxu0 %v5129
        %v5160 = vpop.f32.mrf.mxu0
        %v5161 = vadd.f32 0.0, %v5160
        %5162 = vmatmul.f32.gmra.mxu0 %v5132
        %v5163 = vpop.f32.mrf.mxu0
        %v5164 = vadd.f32 0.0, %v5163
        %5165 = vmatmul.f32.gmra.mxu0 %v5135
        %v5166 = vpop.f32.mrf.mxu0
        %v5167 = vadd.f32 0.0, %v5166
        %5168 = vdwg.mxu0
        %v5169 = vadd.f32 %v5110, %v5155
        %v5170 = vadd.f32 %v5111, %v5158
        %v5171 = vadd.f32 %v5112, %v5161
        %v5172 = vadd.f32 %v5113, %v5164
        %v5173 = vadd.f32 %v5114, %v5167
        %v5174 = vld [vmem:[#allocation3 + $0x7] sm:$0xff]
        %v5175 = vld [vmem:[#allocation3 + $0xf] sm:$0xff]
        %v5176 = vld [vmem:[#allocation3 + $0x17] sm:$0xff]
        %v5177 = vld [vmem:[#allocation3 + $0x1f] sm:$0xff]
        %v5178 = vld [vmem:[#allocation3 + $0x27] sm:$0xf]
        %s5179 = scalar_lea.vmem %s5, 32
        %v5180 = vld [vmem:[%s5179] sm:$0xff]
        %v5182 = vsel %vm456, %v5174, 0
        %v5185 = vsel %vm456, %v5175, 0
        %v5188 = vsel %vm456, %v5176, 0
        %v5191 = vsel %vm456, %v5177, 0
        %v5194 = vsel %vm456, %v5178, 0
        %5196 = vmatpush.msra.mxu0 0.0
        %5197 = vmatpush.msra.mxu0 0.0
        %5198 = vmatpush.msra.mxu0 0.0
        %5199 = vmatpush.msra.mxu0 0.0
        %5200 = vmatpush.msra.mxu0 0.0
        %5201 = vmatpush.msra.mxu0 0.0
        %5202 = vmatpush.msra.mxu0 0.0
        %5203 = vmatpush.msra.mxu0 0.0
        %5204 = vmatpush.msra.mxu0 0.0
        %5205 = vmatpush.msra.mxu0 0.0
        %5206 = vmatpush.msra.mxu0 0.0
        %5207 = vmatpush.msra.mxu0 0.0
        %5208 = vmatpush.msra.mxu0 0.0
        %5209 = vmatpush.msra.mxu0 0.0
        %5210 = vmatpush.msra.mxu0 0.0
        %5211 = vmatpush.msra.mxu0 %v5180
        %5212 = vmatmul.f32.gmra.mxu0 %v5182
        %v5213 = vpop.f32.mrf.mxu0
        %v5214 = vadd.f32 0.0, %v5213
        %5215 = vmatmul.f32.gmra.mxu0 %v5185
        %v5216 = vpop.f32.mrf.mxu0
        %v5217 = vadd.f32 0.0, %v5216
        %5218 = vmatmul.f32.gmra.mxu0 %v5188
        %v5219 = vpop.f32.mrf.mxu0
        %v5220 = vadd.f32 0.0, %v5219
        %5221 = vmatmul.f32.gmra.mxu0 %v5191
        %v5222 = vpop.f32.mrf.mxu0
        %v5223 = vadd.f32 0.0, %v5222
        %5224 = vmatmul.f32.gmra.mxu0 %v5194
        %v5225 = vpop.f32.mrf.mxu0
        %v5226 = vadd.f32 0.0, %v5225
        %5227 = vdwg.mxu0
        %v5228 = vadd.f32 %v5169, %v5214
        %v5229 = vadd.f32 %v5170, %v5217
        %v5230 = vadd.f32 %v5171, %v5220
        %v5231 = vadd.f32 %v5172, %v5223
        %v5232 = vadd.f32 %v5173, %v5226
        %v5233 = vld [vmem:[#allocation3 + $0x8] sm:$0xff]
        %v5234 = vld [vmem:[#allocation3 + $0x10] sm:$0xff]
        %v5235 = vld [vmem:[#allocation3 + $0x18] sm:$0xff]
        %v5236 = vld [vmem:[#allocation3 + $0x20] sm:$0xff]
        %v5237 = vld [vmem:[#allocation3 + $0x28] sm:$0xf]
        %s5238 = scalar_lea.vmem %s5, 40
        %v5239 = vld [vmem:[%s5238] sm:$0xff]
        %v5241 = vsel %vm456, %v5233, 0
        %v5244 = vsel %vm456, %v5234, 0
        %v5247 = vsel %vm456, %v5235, 0
        %v5250 = vsel %vm456, %v5236, 0
        %v5253 = vsel %vm456, %v5237, 0
        %5255 = vmatpush.msra.mxu0 0.0
        %5256 = vmatpush.msra.mxu0 0.0
        %5257 = vmatpush.msra.mxu0 0.0
        %5258 = vmatpush.msra.mxu0 0.0
        %5259 = vmatpush.msra.mxu0 0.0
        %5260 = vmatpush.msra.mxu0 0.0
        %5261 = vmatpush.msra.mxu0 0.0
        %5262 = vmatpush.msra.mxu0 0.0
        %5263 = vmatpush.msra.mxu0 0.0
        %5264 = vmatpush.msra.mxu0 0.0
        %5265 = vmatpush.msra.mxu0 0.0
        %5266 = vmatpush.msra.mxu0 0.0
        %5267 = vmatpush.msra.mxu0 0.0
        %5268 = vmatpush.msra.mxu0 0.0
        %5269 = vmatpush.msra.mxu0 0.0
        %5270 = vmatpush.msra.mxu0 %v5239
        %5271 = vmatmul.f32.gmra.mxu0 %v5241
        %v5272 = vpop.f32.mrf.mxu0
        %v5273 = vadd.f32 0.0, %v5272
        %5274 = vmatmul.f32.gmra.mxu0 %v5244
        %v5275 = vpop.f32.mrf.mxu0
        %v5276 = vadd.f32 0.0, %v5275
        %5277 = vmatmul.f32.gmra.mxu0 %v5247
        %v5278 = vpop.f32.mrf.mxu0
        %v5279 = vadd.f32 0.0, %v5278
        %5280 = vmatmul.f32.gmra.mxu0 %v5250
        %v5281 = vpop.f32.mrf.mxu0
        %v5282 = vadd.f32 0.0, %v5281
        %5283 = vmatmul.f32.gmra.mxu0 %v5253
        %v5284 = vpop.f32.mrf.mxu0
        %v5285 = vadd.f32 0.0, %v5284
        %5286 = vdwg.mxu0
        %v5287 = vadd.f32 %v5228, %v5273
        %v5288 = vadd.f32 %v5229, %v5276
        %v5289 = vadd.f32 %v5230, %v5279
        %v5290 = vadd.f32 %v5231, %v5282
        %v5291 = vadd.f32 %v5232, %v5285
        %v5292 = vld [vmem:[#allocation3 + $0xc] sm:$0xff]
        %v5293 = vld [vmem:[#allocation3 + $0x14] sm:$0xff]
        %v5294 = vld [vmem:[#allocation3 + $0x1c] sm:$0xff]
        %v5295 = vld [vmem:[#allocation3 + $0x24] sm:$0xff]
        %v5296 = vld [vmem:[#allocation3 + $0x2c] sm:$0xf]
        %s5297 = scalar_lea.vmem %s5, 48
        %v5298 = vld [vmem:[%s5297] sm:$0xff]
        %v5300 = vsel %vm456, %v5292, 0
        %v5303 = vsel %vm456, %v5293, 0
        %v5306 = vsel %vm456, %v5294, 0
        %v5309 = vsel %vm456, %v5295, 0
        %v5312 = vsel %vm456, %v5296, 0
        %5314 = vmatpush.msra.mxu0 0.0
        %5315 = vmatpush.msra.mxu0 0.0
        %5316 = vmatpush.msra.mxu0 0.0
        %5317 = vmatpush.msra.mxu0 0.0
        %5318 = vmatpush.msra.mxu0 0.0
        %5319 = vmatpush.msra.mxu0 0.0
        %5320 = vmatpush.msra.mxu0 0.0
        %5321 = vmatpush.msra.mxu0 0.0
        %5322 = vmatpush.msra.mxu0 0.0
        %5323 = vmatpush.msra.mxu0 0.0
        %5324 = vmatpush.msra.mxu0 0.0
        %5325 = vmatpush.msra.mxu0 0.0
        %5326 = vmatpush.msra.mxu0 0.0
        %5327 = vmatpush.msra.mxu0 0.0
        %5328 = vmatpush.msra.mxu0 0.0
        %5329 = vmatpush.msra.mxu0 %v5298
        %5330 = vmatmul.f32.gmra.mxu0 %v5300
        %v5331 = vpop.f32.mrf.mxu0
        %v5332 = vadd.f32 0.0, %v5331
        %5333 = vmatmul.f32.gmra.mxu0 %v5303
        %v5334 = vpop.f32.mrf.mxu0
        %v5335 = vadd.f32 0.0, %v5334
        %5336 = vmatmul.f32.gmra.mxu0 %v5306
        %v5337 = vpop.f32.mrf.mxu0
        %v5338 = vadd.f32 0.0, %v5337
        %5339 = vmatmul.f32.gmra.mxu0 %v5309
        %v5340 = vpop.f32.mrf.mxu0
        %v5341 = vadd.f32 0.0, %v5340
        %5342 = vmatmul.f32.gmra.mxu0 %v5312
        %v5343 = vpop.f32.mrf.mxu0
        %v5344 = vadd.f32 0.0, %v5343
        %5345 = vdwg.mxu0
        %v5346 = vadd.f32 %v5287, %v5332
        %v5347 = vadd.f32 %v5288, %v5335
        %v5348 = vadd.f32 %v5289, %v5338
        %v5349 = vadd.f32 %v5290, %v5341
        %v5350 = vadd.f32 %v5291, %v5344
        %v5351 = vld [vmem:[#allocation3 + $0xd] sm:$0xff]
        %v5352 = vld [vmem:[#allocation3 + $0x15] sm:$0xff]
        %v5353 = vld [vmem:[#allocation3 + $0x1d] sm:$0xff]
        %v5354 = vld [vmem:[#allocation3 + $0x25] sm:$0xff]
        %v5355 = vld [vmem:[#allocation3 + $0x2d] sm:$0xf]
        %s5356 = scalar_lea.vmem %s5, 56
        %v5357 = vld [vmem:[%s5356] sm:$0xff]
        %v5359 = vsel %vm456, %v5351, 0
        %v5362 = vsel %vm456, %v5352, 0
        %v5365 = vsel %vm456, %v5353, 0
        %v5368 = vsel %vm456, %v5354, 0
        %v5371 = vsel %vm456, %v5355, 0
        %5373 = vmatpush.msra.mxu0 0.0
        %5374 = vmatpush.msra.mxu0 0.0
        %5375 = vmatpush.msra.mxu0 0.0
        %5376 = vmatpush.msra.mxu0 0.0
        %5377 = vmatpush.msra.mxu0 0.0
        %5378 = vmatpush.msra.mxu0 0.0
        %5379 = vmatpush.msra.mxu0 0.0
        %5380 = vmatpush.msra.mxu0 0.0
        %5381 = vmatpush.msra.mxu0 0.0
        %5382 = vmatpush.msra.mxu0 0.0
        %5383 = vmatpush.msra.mxu0 0.0
        %5384 = vmatpush.msra.mxu0 0.0
        %5385 = vmatpush.msra.mxu0 0.0
        %5386 = vmatpush.msra.mxu0 0.0
        %5387 = vmatpush.msra.mxu0 0.0
        %5388 = vmatpush.msra.mxu0 %v5357
        %5389 = vmatmul.f32.gmra.mxu0 %v5359
        %v5390 = vpop.f32.mrf.mxu0
        %v5391 = vadd.f32 0.0, %v5390
        %5392 = vmatmul.f32.gmra.mxu0 %v5362
        %v5393 = vpop.f32.mrf.mxu0
        %v5394 = vadd.f32 0.0, %v5393
        %5395 = vmatmul.f32.gmra.mxu0 %v5365
        %v5396 = vpop.f32.mrf.mxu0
        %v5397 = vadd.f32 0.0, %v5396
        %5398 = vmatmul.f32.gmra.mxu0 %v5368
        %v5399 = vpop.f32.mrf.mxu0
        %v5400 = vadd.f32 0.0, %v5399
        %5401 = vmatmul.f32.gmra.mxu0 %v5371
        %v5402 = vpop.f32.mrf.mxu0
        %v5403 = vadd.f32 0.0, %v5402
        %5404 = vdwg.mxu0
        %v5405 = vadd.f32 %v5346, %v5391
        %v5406 = vadd.f32 %v5347, %v5394
        %v5407 = vadd.f32 %v5348, %v5397
        %v5408 = vadd.f32 %v5349, %v5400
        %v5409 = vadd.f32 %v5350, %v5403
        %v5410 = vld [vmem:[#allocation3 + $0xe] sm:$0xff]
        %v5411 = vld [vmem:[#allocation3 + $0x16] sm:$0xff]
        %v5412 = vld [vmem:[#allocation3 + $0x1e] sm:$0xff]
        %v5413 = vld [vmem:[#allocation3 + $0x26] sm:$0xff]
        %v5414 = vld [vmem:[#allocation3 + $0x2e] sm:$0xf]
        %s5415 = scalar_lea.vmem %s5, 64
        %v5416 = vld [vmem:[%s5415] sm:$0xff]
        %v5418 = vsel %vm456, %v5410, 0
        %v5421 = vsel %vm456, %v5411, 0
        %v5424 = vsel %vm456, %v5412, 0
        %v5427 = vsel %vm456, %v5413, 0
        %v5430 = vsel %vm456, %v5414, 0
        %5432 = vmatpush.msra.mxu0 0.0
        %5433 = vmatpush.msra.mxu0 0.0
        %5434 = vmatpush.msra.mxu0 0.0
        %5435 = vmatpush.msra.mxu0 0.0
        %5436 = vmatpush.msra.mxu0 0.0
        %5437 = vmatpush.msra.mxu0 0.0
        %5438 = vmatpush.msra.mxu0 0.0
        %5439 = vmatpush.msra.mxu0 0.0
        %5440 = vmatpush.msra.mxu0 0.0
        %5441 = vmatpush.msra.mxu0 0.0
        %5442 = vmatpush.msra.mxu0 0.0
        %5443 = vmatpush.msra.mxu0 0.0
        %5444 = vmatpush.msra.mxu0 0.0
        %5445 = vmatpush.msra.mxu0 0.0
        %5446 = vmatpush.msra.mxu0 0.0
        %5447 = vmatpush.msra.mxu0 %v5416
        %5448 = vmatmul.f32.gmra.mxu0 %v5418
        %v5449 = vpop.f32.mrf.mxu0
        %v5450 = vadd.f32 0.0, %v5449
        %5451 = vmatmul.f32.gmra.mxu0 %v5421
        %v5452 = vpop.f32.mrf.mxu0
        %v5453 = vadd.f32 0.0, %v5452
        %5454 = vmatmul.f32.gmra.mxu0 %v5424
        %v5455 = vpop.f32.mrf.mxu0
        %v5456 = vadd.f32 0.0, %v5455
        %5457 = vmatmul.f32.gmra.mxu0 %v5427
        %v5458 = vpop.f32.mrf.mxu0
        %v5459 = vadd.f32 0.0, %v5458
        %5460 = vmatmul.f32.gmra.mxu0 %v5430
        %v5461 = vpop.f32.mrf.mxu0
        %v5462 = vadd.f32 0.0, %v5461
        %5463 = vdwg.mxu0
        %v5464 = vadd.f32 %v5405, %v5450
        %v5465 = vadd.f32 %v5406, %v5453
        %v5466 = vadd.f32 %v5407, %v5456
        %v5467 = vadd.f32 %v5408, %v5459
        %v5468 = vadd.f32 %v5409, %v5462
        %v5469 = vld [vmem:[%s6] sm:$0x1]
        %v5471 = vperm.slane %v5469, 0
        %v5473 = vadd.f32 %v5464, %v5471
        %v5474 = vadd.f32 %v5465, %v5471
        %v5475 = vadd.f32 %v5466, %v5471
        %v5476 = vadd.f32 %v5467, %v5471
        %v5477 = vadd.f32 %v5468, %v5471
        %v5478 = vmax.f32 %v5473, 0.0
        %v5479 = vmax.f32 %v5474, 0.0
        %v5480 = vmax.f32 %v5475, 0.0
        %v5481 = vmax.f32 %v5476, 0.0
        %v5482 = vmax.f32 %v5477, 0.0
        %5483 = vst.msk [vmem:[#allocation7] sm:$0xff] %vm465, %v5478
        %5484 = vst.msk [vmem:[#allocation7 + $0x8] sm:$0xff] %vm465, %v5479
        %5485 = vst.msk [vmem:[#allocation7 + $0x10] sm:$0xff] %vm465, %v5480
        %5486 = vst.msk [vmem:[#allocation7 + $0x18] sm:$0xff] %vm465, %v5481
        %vm5487 = vcmask 125952
        %5488 = vst.msk [vmem:[#allocation7 + $0x20] sm:$0xf] %vm5487, %v5482
        %s5489 = scalar_lea.vmem [#allocation7], 1
        %v5490 = vld [vmem:[%s5489] ss:$2 sm:$0xff]
        %s5491 = scalar_lea.vmem [#allocation7], 17
        %v5492 = vld [vmem:[%s5491] ss:$2 sm:$0xff]
        %s5493 = scalar_lea.vmem [#allocation7], 2
        %v5494 = vld [vmem:[%s5493] ss:$2 sm:$0xff]
        %s5495 = scalar_lea.vmem [#allocation7], 18
        %v5496 = vld [vmem:[%s5495] ss:$2 sm:$0xff]
        %v5497 = vmax.f32 %v5490, %v5494
        %v5498 = vmax.f32 %v5492, %v5496
        %v5500 = vrot.slane %v5497, 3
        %v5502 = vmax.f32 %v5497, %v5500
        %v5504 = vrot.slane %v5498, 3
        %v5506 = vmax.f32 %v5498, %v5504
        %vm5507 = vcmask 126979
        %5508 = vst.msk [vmem:[#allocation4 + $0x7] sm:$0x18] %vm5507, %v5502
        %vm5509 = vcmask 124929
        %5510 = vst.msk [vmem:[#allocation4 + $0xd] sm:$0x6] %vm5509, %v5506
        %v5511 = vld [vmem:[#allocation4] sm:$0xff]
        %v5512 = vld [vmem:[#allocation4 + $0x8] sm:$0xff]
        %v5513 = vld [vmem:[%s7] sm:$0xff]
        %v5514 = vld [vmem:[%s7 + $0x8] sm:$0xff]
        %v5515 = vld [vmem:[#allocation4 + $0x1] sm:$0xff]
        %v5516 = vld [vmem:[#allocation4 + $0x9] sm:$0xff]
        %s5517 = scalar_lea.vmem %s7, 16
        %v5518 = vld [vmem:[%s5517] sm:$0xff]
        %v5519 = vld [vmem:[%s5517 + $0x8] sm:$0xff]
        %v5521 = vsel %vm465, %v5515, 0
        %v5524 = vsel %vm465, %v5516, 0
        %5526 = vmatpush.msra.mxu0 0.0
        %5527 = vmatpush.msra.mxu0 0.0
        %5528 = vmatpush.msra.mxu0 0.0
        %5529 = vmatpush.msra.mxu0 0.0
        %5530 = vmatpush.msra.mxu0 0.0
        %5531 = vmatpush.msra.mxu0 0.0
        %5532 = vmatpush.msra.mxu0 0.0
        %5533 = vmatpush.msra.mxu0 0.0
        %5534 = vmatpush.msra.mxu0 0.0
        %5535 = vmatpush.msra.mxu0 0.0
        %5536 = vmatpush.msra.mxu0 0.0
        %5537 = vmatpush.msra.mxu0 0.0
        %5538 = vmatpush.msra.mxu0 0.0
        %5539 = vmatpush.msra.mxu0 0.0
        %5540 = vmatpush.msra.mxu0 %v5519
        %5541 = vmatpush.msra.mxu0 %v5518
        %5542 = vmatmul.f32.gmra.mxu0 %v5521
        %v5543 = vpop.f32.mrf.mxu0
        %v5544 = vadd.f32 0.0, %v5543
        %5545 = vmatmul.f32.gmra.mxu0 %v5524
        %v5546 = vpop.f32.mrf.mxu0
        %v5547 = vadd.f32 0.0, %v5546
        %5548 = vdwg.mxu0
        %v5550 = vsel %vm465, %v5511, 0
        %v5553 = vsel %vm465, %v5512, 0
        %5555 = vmatpush.msra.mxu0 0.0
        %5556 = vmatpush.msra.mxu0 0.0
        %5557 = vmatpush.msra.mxu0 0.0
        %5558 = vmatpush.msra.mxu0 0.0
        %5559 = vmatpush.msra.mxu0 0.0
        %5560 = vmatpush.msra.mxu0 0.0
        %5561 = vmatpush.msra.mxu0 0.0
        %5562 = vmatpush.msra.mxu0 0.0
        %5563 = vmatpush.msra.mxu0 0.0
        %5564 = vmatpush.msra.mxu0 0.0
        %5565 = vmatpush.msra.mxu0 0.0
        %5566 = vmatpush.msra.mxu0 0.0
        %5567 = vmatpush.msra.mxu0 0.0
        %5568 = vmatpush.msra.mxu0 0.0
        %5569 = vmatpush.msra.mxu0 %v5514
        %5570 = vmatpush.msra.mxu0 %v5513
        %5571 = vmatmul.f32.gmra.mxu0 %v5550
        %v5572 = vpop.f32.mrf.mxu0
        %v5573 = vadd.f32 %v5544, %v5572
        %5574 = vmatmul.f32.gmra.mxu0 %v5553
        %v5575 = vpop.f32.mrf.mxu0
        %v5576 = vadd.f32 %v5547, %v5575
        %5577 = vdwg.mxu0
        %v5578 = vld [vmem:[#allocation4 + $0x2] sm:$0xff]
        %v5579 = vld [vmem:[#allocation4 + $0xa] sm:$0xff]
        %s5580 = scalar_lea.vmem %s7, 32
        %v5581 = vld [vmem:[%s5580] sm:$0xff]
        %v5582 = vld [vmem:[%s5580 + $0x8] sm:$0xff]
        %v5584 = vsel %vm465, %v5578, 0
        %v5587 = vsel %vm465, %v5579, 0
        %5589 = vmatpush.msra.mxu0 0.0
        %5590 = vmatpush.msra.mxu0 0.0
        %5591 = vmatpush.msra.mxu0 0.0
        %5592 = vmatpush.msra.mxu0 0.0
        %5593 = vmatpush.msra.mxu0 0.0
        %5594 = vmatpush.msra.mxu0 0.0
        %5595 = vmatpush.msra.mxu0 0.0
        %5596 = vmatpush.msra.mxu0 0.0
        %5597 = vmatpush.msra.mxu0 0.0
        %5598 = vmatpush.msra.mxu0 0.0
        %5599 = vmatpush.msra.mxu0 0.0
        %5600 = vmatpush.msra.mxu0 0.0
        %5601 = vmatpush.msra.mxu0 0.0
        %5602 = vmatpush.msra.mxu0 0.0
        %5603 = vmatpush.msra.mxu0 %v5582
        %5604 = vmatpush.msra.mxu0 %v5581
        %5605 = vmatmul.f32.gmra.mxu0 %v5584
        %v5606 = vpop.f32.mrf.mxu0
        %v5607 = vadd.f32 0.0, %v5606
        %5608 = vmatmul.f32.gmra.mxu0 %v5587
        %v5609 = vpop.f32.mrf.mxu0
        %v5610 = vadd.f32 0.0, %v5609
        %5611 = vdwg.mxu0
        %v5612 = vadd.f32 %v5573, %v5607
        %v5613 = vadd.f32 %v5576, %v5610
        %v5614 = vld [vmem:[#allocation4 + $0x4] sm:$0xff]
        %v5615 = vld [vmem:[#allocation4 + $0xc] sm:$0xff]
        %s5616 = scalar_lea.vmem %s7, 48
        %v5617 = vld [vmem:[%s5616] sm:$0xff]
        %v5618 = vld [vmem:[%s5616 + $0x8] sm:$0xff]
        %v5620 = vsel %vm465, %v5614, 0
        %v5623 = vsel %vm465, %v5615, 0
        %5625 = vmatpush.msra.mxu0 0.0
        %5626 = vmatpush.msra.mxu0 0.0
        %5627 = vmatpush.msra.mxu0 0.0
        %5628 = vmatpush.msra.mxu0 0.0
        %5629 = vmatpush.msra.mxu0 0.0
        %5630 = vmatpush.msra.mxu0 0.0
        %5631 = vmatpush.msra.mxu0 0.0
        %5632 = vmatpush.msra.mxu0 0.0
        %5633 = vmatpush.msra.mxu0 0.0
        %5634 = vmatpush.msra.mxu0 0.0
        %5635 = vmatpush.msra.mxu0 0.0
        %5636 = vmatpush.msra.mxu0 0.0
        %5637 = vmatpush.msra.mxu0 0.0
        %5638 = vmatpush.msra.mxu0 0.0
        %5639 = vmatpush.msra.mxu0 %v5618
        %5640 = vmatpush.msra.mxu0 %v5617
        %5641 = vmatmul.f32.gmra.mxu0 %v5620
        %v5642 = vpop.f32.mrf.mxu0
        %v5643 = vadd.f32 0.0, %v5642
        %5644 = vmatmul.f32.gmra.mxu0 %v5623
        %v5645 = vpop.f32.mrf.mxu0
        %v5646 = vadd.f32 0.0, %v5645
        %5647 = vdwg.mxu0
        %v5648 = vadd.f32 %v5612, %v5643
        %v5649 = vadd.f32 %v5613, %v5646
        %v5650 = vld [vmem:[#allocation4 + $0x5] sm:$0xff]
        %v5651 = vld [vmem:[#allocation4 + $0xd] sm:$0xff]
        %s5652 = scalar_lea.vmem %s7, 64
        %v5653 = vld [vmem:[%s5652] sm:$0xff]
        %v5654 = vld [vmem:[%s5652 + $0x8] sm:$0xff]
        %v5656 = vsel %vm465, %v5650, 0
        %v5659 = vsel %vm465, %v5651, 0
        %5661 = vmatpush.msra.mxu0 0.0
        %5662 = vmatpush.msra.mxu0 0.0
        %5663 = vmatpush.msra.mxu0 0.0
        %5664 = vmatpush.msra.mxu0 0.0
        %5665 = vmatpush.msra.mxu0 0.0
        %5666 = vmatpush.msra.mxu0 0.0
        %5667 = vmatpush.msra.mxu0 0.0
        %5668 = vmatpush.msra.mxu0 0.0
        %5669 = vmatpush.msra.mxu0 0.0
        %5670 = vmatpush.msra.mxu0 0.0
        %5671 = vmatpush.msra.mxu0 0.0
        %5672 = vmatpush.msra.mxu0 0.0
        %5673 = vmatpush.msra.mxu0 0.0
        %5674 = vmatpush.msra.mxu0 0.0
        %5675 = vmatpush.msra.mxu0 %v5654
        %5676 = vmatpush.msra.mxu0 %v5653
        %5677 = vmatmul.f32.gmra.mxu0 %v5656
        %v5678 = vpop.f32.mrf.mxu0
        %v5679 = vadd.f32 0.0, %v5678
        %5680 = vmatmul.f32.gmra.mxu0 %v5659
        %v5681 = vpop.f32.mrf.mxu0
        %v5682 = vadd.f32 0.0, %v5681
        %5683 = vdwg.mxu0
        %v5684 = vadd.f32 %v5648, %v5679
        %v5685 = vadd.f32 %v5649, %v5682
        %v5686 = vld [vmem:[#allocation4 + $0x6] sm:$0xff]
        %v5687 = vld [vmem:[#allocation4 + $0xe] sm:$0xff]
        %s5688 = scalar_lea.vmem %s7, 80
        %v5689 = vld [vmem:[%s5688] sm:$0xff]
        %v5690 = vld [vmem:[%s5688 + $0x8] sm:$0xff]
        %v5692 = vsel %vm465, %v5686, 0
        %v5695 = vsel %vm465, %v5687, 0
        %5697 = vmatpush.msra.mxu0 0.0
        %5698 = vmatpush.msra.mxu0 0.0
        %5699 = vmatpush.msra.mxu0 0.0
        %5700 = vmatpush.msra.mxu0 0.0
        %5701 = vmatpush.msra.mxu0 0.0
        %5702 = vmatpush.msra.mxu0 0.0
        %5703 = vmatpush.msra.mxu0 0.0
        %5704 = vmatpush.msra.mxu0 0.0
        %5705 = vmatpush.msra.mxu0 0.0
        %5706 = vmatpush.msra.mxu0 0.0
        %5707 = vmatpush.msra.mxu0 0.0
        %5708 = vmatpush.msra.mxu0 0.0
        %5709 = vmatpush.msra.mxu0 0.0
        %5710 = vmatpush.msra.mxu0 0.0
        %5711 = vmatpush.msra.mxu0 %v5690
        %5712 = vmatpush.msra.mxu0 %v5689
        %5713 = vmatmul.f32.gmra.mxu0 %v5692
        %v5714 = vpop.f32.mrf.mxu0
        %v5715 = vadd.f32 0.0, %v5714
        %5716 = vmatmul.f32.gmra.mxu0 %v5695
        %v5717 = vpop.f32.mrf.mxu0
        %v5718 = vadd.f32 0.0, %v5717
        %5719 = vdwg.mxu0
        %v5720 = vadd.f32 %v5684, %v5715
        %v5721 = vadd.f32 %v5685, %v5718
        %v5722 = vld [vmem:[#allocation4 + $0x8] sm:$0xff]
        %v5723 = vld [vmem:[#allocation4 + $0x10] sm:$0xff]
        %s5724 = scalar_lea.vmem %s7, 96
        %v5725 = vld [vmem:[%s5724] sm:$0xff]
        %v5726 = vld [vmem:[%s5724 + $0x8] sm:$0xff]
        %v5728 = vsel %vm465, %v5722, 0
        %v5731 = vsel %vm465, %v5723, 0
        %5733 = vmatpush.msra.mxu0 0.0
        %5734 = vmatpush.msra.mxu0 0.0
        %5735 = vmatpush.msra.mxu0 0.0
        %5736 = vmatpush.msra.mxu0 0.0
        %5737 = vmatpush.msra.mxu0 0.0
        %5738 = vmatpush.msra.mxu0 0.0
        %5739 = vmatpush.msra.mxu0 0.0
        %5740 = vmatpush.msra.mxu0 0.0
        %5741 = vmatpush.msra.mxu0 0.0
        %5742 = vmatpush.msra.mxu0 0.0
        %5743 = vmatpush.msra.mxu0 0.0
        %5744 = vmatpush.msra.mxu0 0.0
        %5745 = vmatpush.msra.mxu0 0.0
        %5746 = vmatpush.msra.mxu0 0.0
        %5747 = vmatpush.msra.mxu0 %v5726
        %5748 = vmatpush.msra.mxu0 %v5725
        %5749 = vmatmul.f32.gmra.mxu0 %v5728
        %v5750 = vpop.f32.mrf.mxu0
        %v5751 = vadd.f32 0.0, %v5750
        %5752 = vmatmul.f32.gmra.mxu0 %v5731
        %v5753 = vpop.f32.mrf.mxu0
        %v5754 = vadd.f32 0.0, %v5753
        %5755 = vdwg.mxu0
        %v5756 = vadd.f32 %v5720, %v5751
        %v5757 = vadd.f32 %v5721, %v5754
        %v5758 = vld [vmem:[#allocation4 + $0x9] sm:$0xff]
        %v5759 = vld [vmem:[#allocation4 + $0x11] sm:$0xff]
        %s5760 = scalar_lea.vmem %s7, 112
        %v5761 = vld [vmem:[%s5760] sm:$0xff]
        %v5762 = vld [vmem:[%s5760 + $0x8] sm:$0xff]
        %v5764 = vsel %vm465, %v5758, 0
        %v5767 = vsel %vm465, %v5759, 0
        %5769 = vmatpush.msra.mxu0 0.0
        %5770 = vmatpush.msra.mxu0 0.0
        %5771 = vmatpush.msra.mxu0 0.0
        %5772 = vmatpush.msra.mxu0 0.0
        %5773 = vmatpush.msra.mxu0 0.0
        %5774 = vmatpush.msra.mxu0 0.0
        %5775 = vmatpush.msra.mxu0 0.0
        %5776 = vmatpush.msra.mxu0 0.0
        %5777 = vmatpush.msra.mxu0 0.0
        %5778 = vmatpush.msra.mxu0 0.0
        %5779 = vmatpush.msra.mxu0 0.0
        %5780 = vmatpush.msra.mxu0 0.0
        %5781 = vmatpush.msra.mxu0 0.0
        %5782 = vmatpush.msra.mxu0 0.0
        %5783 = vmatpush.msra.mxu0 %v5762
        %5784 = vmatpush.msra.mxu0 %v5761
        %5785 = vmatmul.f32.gmra.mxu0 %v5764
        %v5786 = vpop.f32.mrf.mxu0
        %v5787 = vadd.f32 0.0, %v5786
        %5788 = vmatmul.f32.gmra.mxu0 %v5767
        %v5789 = vpop.f32.mrf.mxu0
        %v5790 = vadd.f32 0.0, %v5789
        %5791 = vdwg.mxu0
        %v5792 = vadd.f32 %v5756, %v5787
        %v5793 = vadd.f32 %v5757, %v5790
        %v5794 = vld [vmem:[#allocation4 + $0xa] sm:$0xff]
        %v5795 = vld [vmem:[#allocation4 + $0x12] sm:$0xff]
        %s5796 = scalar_lea.vmem %s7, 128
        %v5797 = vld [vmem:[%s5796] sm:$0xff]
        %v5798 = vld [vmem:[%s5796 + $0x8] sm:$0xff]
        %v5800 = vsel %vm465, %v5794, 0
        %v5803 = vsel %vm465, %v5795, 0
        %5805 = vmatpush.msra.mxu0 0.0
        %5806 = vmatpush.msra.mxu0 0.0
        %5807 = vmatpush.msra.mxu0 0.0
        %5808 = vmatpush.msra.mxu0 0.0
        %5809 = vmatpush.msra.mxu0 0.0
        %5810 = vmatpush.msra.mxu0 0.0
        %5811 = vmatpush.msra.mxu0 0.0
        %5812 = vmatpush.msra.mxu0 0.0
        %5813 = vmatpush.msra.mxu0 0.0
        %5814 = vmatpush.msra.mxu0 0.0
        %5815 = vmatpush.msra.mxu0 0.0
        %5816 = vmatpush.msra.mxu0 0.0
        %5817 = vmatpush.msra.mxu0 0.0
        %5818 = vmatpush.msra.mxu0 0.0
        %5819 = vmatpush.msra.mxu0 %v5798
        %5820 = vmatpush.msra.mxu0 %v5797
        %5821 = vmatmul.f32.gmra.mxu0 %v5800
        %v5822 = vpop.f32.mrf.mxu0
        %v5823 = vadd.f32 0.0, %v5822
        %5824 = vmatmul.f32.gmra.mxu0 %v5803
        %v5825 = vpop.f32.mrf.mxu0
        %v5826 = vadd.f32 0.0, %v5825
        %5827 = vdwg.mxu0
        %v5828 = vadd.f32 %v5792, %v5823
        %v5829 = vadd.f32 %v5793, %v5826
        %v5830 = vld [vmem:[%s8] sm:$0x1]
        %v5832 = vperm.slane %v5830, 0
        %v5834 = vadd.f32 %v5828, %v5832
        %v5835 = vadd.f32 %v5829, %v5832
        %v5836 = vmax.f32 %v5834, 0.0
        %v5837 = vmax.f32 %v5835, 0.0
        %vm5838 = vcmask 261120
        %5839 = vst.msk [vmem:[#allocation8] sm:$0xff] %vm5838, %v5836
        %5840 = vst.msk [vmem:[#allocation8 + $0x8] sm:$0xff] %vm5838, %v5837
        %s5841 = scalar_lea.vmem [#allocation8], 1
        %v5842 = vld [vmem:[%s5841] ss:$2 sm:$0x7f]
        %s5843 = scalar_lea.vmem [#allocation8], 2
        %v5844 = vld [vmem:[%s5843] ss:$2 sm:$0x7f]
        %v5845 = vmax.f32 %v5842, %v5844
        %v5847 = vrot.slane %v5845, 2
        %v5849 = vmax.f32 %v5845, %v5847
        %vm5850 = vcmask 256002
        %5851 = vst.msk [vmem:[#allocation9 - $0x2] sm:$0x4] %vm5850, %v5849
        %v5852 = vld [vmem:[#allocation9] sm:$0x1]
        %v5853 = vld [vmem:[%s9] sm:$0xff]
        %v5854 = vld [vmem:[%s9 + $0x8] sm:$0xff]
        %v5855 = vld [vmem:[%s9 + $0x10] sm:$0xff]
        %v5856 = vld [vmem:[%s9 + $0x18] sm:$0xff]
        %v5857 = vld [vmem:[%s10] sm:$0x1]
        %v5859 = vsel %vm5838, %v5852, 0
        %5861 = vmatpush.msra.mxu0 0.0
        %5862 = vmatpush.msra.mxu0 0.0
        %5863 = vmatpush.msra.mxu0 0.0
        %5864 = vmatpush.msra.mxu0 0.0
        %5865 = vmatpush.msra.mxu0 0.0
        %5866 = vmatpush.msra.mxu0 0.0
        %5867 = vmatpush.msra.mxu0 0.0
        %5868 = vmatpush.msra.mxu0 0.0
        %5869 = vmatpush.msra.mxu0 0.0
        %5870 = vmatpush.msra.mxu0 0.0
        %5871 = vmatpush.msra.mxu0 0.0
        %5872 = vmatpush.msra.mxu0 0.0
        %5873 = vmatpush.msra.mxu0 %v5856
        %5874 = vmatpush.msra.mxu0 %v5855
        %5875 = vmatpush.msra.mxu0 %v5854
        %5876 = vmatpush.msra.mxu0 %v5853
        %5877 = vmatmul.f32.gmra.mxu0 %v5859
        %v5878 = vpop.f32.mrf.mxu0
        %v5879 = vadd.f32 %v5857, %v5878
        %5880 = vdwg.mxu0
        %v5881 = vmax.f32 %v5879, 0.0
        %v5882 = vld [vmem:[%s11] sm:$0xff]
        %v5883 = vld [vmem:[%s11 + $0x8] sm:$0xff]
        %v5884 = vld [vmem:[%s11 + $0x10] sm:$0xff]
        %v5885 = vld [vmem:[%s11 + $0x18] sm:$0xff]
        %v5886 = vld [vmem:[%s12] sm:$0x1]
        %v5888 = vsel %vm5838, %v5881, 0
        %5890 = vmatpush.msra.mxu0 0.0
        %5891 = vmatpush.msra.mxu0 0.0
        %5892 = vmatpush.msra.mxu0 0.0
        %5893 = vmatpush.msra.mxu0 0.0
        %5894 = vmatpush.msra.mxu0 0.0
        %5895 = vmatpush.msra.mxu0 0.0
        %5896 = vmatpush.msra.mxu0 0.0
        %5897 = vmatpush.msra.mxu0 0.0
        %5898 = vmatpush.msra.mxu0 0.0
        %5899 = vmatpush.msra.mxu0 0.0
        %5900 = vmatpush.msra.mxu0 0.0
        %5901 = vmatpush.msra.mxu0 0.0
        %5902 = vmatpush.msra.mxu0 %v5885
        %5903 = vmatpush.msra.mxu0 %v5884
        %5904 = vmatpush.msra.mxu0 %v5883
        %5905 = vmatpush.msra.mxu0 %v5882
        %5906 = vmatmul.f32.gmra.mxu0 %v5888
        %v5907 = vpop.f32.mrf.mxu0
        %v5908 = vadd.f32 %v5886, %v5907
        %5909 = vdwg.mxu0
        %vm5910 = vcmask 237568
        %5911 = vst.msk [vmem:[%s432] sm:$0x1] %vm5910, %v5908
        %s5912 = sand.u32 %s313, 1
        %s5913 = scalar_lea.sflag [#allocation11], %s5912
        %s5914 = sand.u32 %s313, 1
        %s5915 = scalar_lea.vmem [#allocation10], %s5914
        // Predicated region
        $region73: #{forward.1} parent=71 // pred_check
          %p5916 = pneg %p323
        $region74: #{forward.1} parent=71 // pred_check_branch
          %5918 = sbr.rel (%p5916) target = $region76
        $region75: #{forward.1} parent=71 // pred_region
          %5920 = vsyncadd %s5913, 0
          %s5921 = scalar_lea.hbm %s13, %s27
          %s5923 = sshll.u32 %s5915, 4
          %s5924 = int_to_ptr.vmem [resolvable:$true] %s5923
          %s5925 = sshll.u32 %s5921, 4
          %s5926 = int_to_ptr.hbm [resolvable:$true] %s5925
          %5928 = dma.vmem_to_hbm [thread:$0]  %s5924, 16, %s5926, %s5913
        $region76: #{forward.1} parent=71 // pred_fallthru
          _
      $region72: #{forward.1} parent=5 // pred_fallthru
        _
      %p5929 = scmp.le.s32.totalorder 2, %s22
      // Predicated region
      $region77: #{forward.1} parent=5 // pred_check
        %p5930 = pneg %p5929
      $region78: #{forward.1} parent=5 // pred_check_branch
        %5932 = sbr.rel (%p5930) target = $region80
      $region79: #{forward.1} parent=5 // pred_region
        %s5933 = ssub.s32 %s22, 2
        // Predicated region
        $region81: #{forward.1} parent=79 // pred_check
          %p5934 = pneg %p329
        $region82: #{forward.1} parent=79 // pred_check_branch
          %5936 = sbr.rel (%p5934) target = $region84
        $region83: #{forward.1} parent=79 // pred_region
          %s5937 = sand.u32 %s314, 1
          %s5938 = scalar_lea.sflag [#allocation11], %s5937
          %s5939 = sand.u32 %s314, 1
          %s5940 = scalar_lea.vmem [#allocation10], %s5939
          %5942 = dma.done %s5938, 16
        $region84: #{forward.1} parent=79 // pred_fallthru
          _
      $region80: #{forward.1} parent=5 // pred_fallthru
        _
    $region6: #{forward.1} parent=1 // loop_footer
      %s26 = sadd.s32 1, %s22
    $region7: #{forward.1} parent=1 // loop_footer_branch
      %21 = sbr.rel target = $region3
    $region8: #{forward.1} parent=1 // loop_exit
      _
    %5943 = vsyncpa [#allocation11], 1
    %s5944 = scalar_lea.sflag [#allocation11], 1
    %5945 = vsyncpa %s5944, 1

</llo_original>
